<compile_context>
chip_gen: v7x
topology: tpu7x:2x2x1
jax: 0.10.0
libtpu: 0.0.40
codegen_flags: <defaults>
</compile_context>

<pallas_src>
import functools

import jax
import jax.numpy as jnp
from jax import lax
from jax.experimental import pallas as pl
from jax.experimental.pallas import tpu as pltpu


# ----------------------------- fused kernel ----------------------------------

def _make_block_kernel(H, W, cin, cout, stride, conv_shortcut):
    """Builds the fused BasicBlock kernel for one image per grid step."""
    Ho, Wo = H // stride, W // stride
    Ms = Ho * Wo

    def kernel(*refs):
        (x_ref, w1_ref, s1_ref, b1_ref, w2_ref, s2_ref, b2_ref) = refs[:7]
        i = 7
        sel_ref = None
        if stride > 1:
            sel_ref = refs[i]
            i += 1
        if conv_shortcut:
            wsc_ref, ssc_ref, bsc_ref = refs[i:i + 3]
            i += 3
        out_ref = refs[i]
        xpad_ref, p1_ref, hpad_ref, p2_ref = refs[i + 1:i + 5]

        # ---- conv1: in-kernel halo pad + im2col -> single K=9*cin matmul ----
        xpad_ref[...] = jnp.zeros_like(xpad_ref)
        xpad_ref[1:H + 1, 1:W + 1, :] = x_ref[0]
        for k in range(9):
            dy, dx = k // 3, k % 3
            p1_ref[:, k * cin:(k + 1) * cin] = (
                xpad_ref[dy:dy + H, dx:dx + W, :].reshape(H * W, cin))

        patches1 = p1_ref[...].astype(jnp.bfloat16)           # (H*W, 9*cin)
        if stride > 1:
            # 0/1 selection matmul keeps only the strided output positions
            # (exact: selects already-bf16 rows, accumulates in f32).
            patches1 = jnp.dot(sel_ref[...], patches1,
                               preferred_element_type=jnp.float32
                               ).astype(jnp.bfloat16)         # (Ms, 9*cin)
        h = jnp.dot(patches1, w1_ref[...],
                    preferred_element_type=jnp.float32)        # (Ms, cout) f32
        h = jnp.maximum(h * s1_ref[...] + b1_ref[...], 0.0)    # BN1 + ReLU

        # ---- conv2: pad h in VMEM + im2col -> single K=9*cout matmul ----
        hpad_ref[...] = jnp.zeros_like(hpad_ref)
        hpad_ref[1:Ho + 1, 1:Wo + 1, :] = h.reshape(Ho, Wo, cout)
        for k in range(9):
            dy, dx = k // 3, k % 3
            p2_ref[:, k * cout:(k + 1) * cout] = (
                hpad_ref[dy:dy + Ho, dx:dx + Wo, :].reshape(Ms, cout))
        left = jnp.dot(p2_ref[...].astype(jnp.bfloat16), w2_ref[...],
                       preferred_element_type=jnp.float32)     # (Ms, cout)
        left = left * s2_ref[...] + b2_ref[...]                # BN2

        # ---- shortcut (identity, or strided 1x1 conv + BN) ----
        x_flat = x_ref[0].reshape(H * W, cin)                  # f32
        if stride > 1:
            xs = jnp.dot(sel_ref[...], x_flat.astype(jnp.bfloat16),
                         preferred_element_type=jnp.float32)   # (Ms, cin)
        else:
            xs = x_flat
        if conv_shortcut:
            sc = jnp.dot(xs.astype(jnp.bfloat16), wsc_ref[...],
                         preferred_element_type=jnp.float32)
            sc = sc * ssc_ref[...] + bsc_ref[...]
        else:
            sc = xs                                            # cin == cout here

        # ---- residual add + final ReLU; lane-dense NCHW-flat store ----
        y = jnp.maximum(left + sc, 0.0)                        # (Ms, cout)
        out_ref[0] = jnp.transpose(y)                          # (cout, Ms)

    return kernel


# --------------------------- pallas_call wrapper ------------------------------

@functools.partial(jax.jit, static_argnums=(2,))
def basic_block_forward(x_nchw, params, stride):
    """forward(x) = relu(left(x) + shortcut(x)); NCHW in / NCHW out."""
    N, cin, H, W = x_nchw.shape
    cout = params['w1'].shape[-1]
    Ho, Wo = H // stride, W // stride
    conv_shortcut = 'wsc' in params

    # Boundary glue: NCHW -> NHWC for the in-kernel patch builder.  Output
    # comes back from the kernel already NCHW-flat (no output transpose).
    # TODO(synk): in a full ResNet, keep activations NHWC end-to-end to drop
    # this per-block input transpose as well.
    x = jnp.transpose(x_nchw, (0, 2, 3, 1)).astype(jnp.float32)

    # Weights reshaped for im2col (rows ordered dy, dx, cin) and pre-cast to
    # bf16 (resident in VMEM across the whole grid).
    w1r = params['w1'].reshape(9 * cin, cout).astype(jnp.bfloat16)
    w2r = params['w2'].reshape(9 * cout, cout).astype(jnp.bfloat16)

    def _resident(shape):
        nd = len(shape)
        return pl.BlockSpec(shape, lambda n, _nd=nd: (0,) * _nd)

    args = [x, w1r, params['s1'], params['b1'], w2r, params['s2'], params['b2']]
    in_specs = [
        pl.BlockSpec((1, H, W, cin), lambda n: (n, 0, 0, 0)),
        _resident((9 * cin, cout)),
        _resident((1, cout)), _resident((1, cout)),
        _resident((9 * cout, cout)),
        _resident((1, cout)), _resident((1, cout)),
    ]
    if stride > 1:
        rows = jnp.arange(Ho * Wo)
        sel_cols = (rows // Wo) * (stride * W) + (rows % Wo) * stride
        sel = (jnp.arange(H * W)[None, :] == sel_cols[:, None]).astype(jnp.bfloat16)
        args.append(sel)
        in_specs.append(_resident((Ho * Wo, H * W)))
    if conv_shortcut:
        args += [params['wsc'].astype(jnp.bfloat16), params['ssc'], params['bsc']]
        in_specs += [_resident((cin, cout)),
                     _resident((1, cout)), _resident((1, cout))]

    kern = _make_block_kernel(H, W, cin, cout, stride, conv_shortcut)
    out = pl.pallas_call(
        kern,
        out_shape=jax.ShapeDtypeStruct((N, cout, Ho * Wo), jnp.float32),
        grid=(N,),
        in_specs=in_specs,
        out_specs=pl.BlockSpec((1, cout, Ho * Wo), lambda n: (n, 0, 0)),
        scratch_shapes=[
            pltpu.VMEM((H + 2, W + 2, cin), jnp.float32),      # padded input
            pltpu.VMEM((H * W, 9 * cin), jnp.float32),         # conv1 im2col
            pltpu.VMEM((Ho + 2, Wo + 2, cout), jnp.float32),   # padded h
            pltpu.VMEM((Ho * Wo, 9 * cout), jnp.float32),      # conv2 im2col
        ],
        compiler_params=pltpu.CompilerParams(
            dimension_semantics=("parallel",)),                # v7x: both TCs busy
    )(*args)
    return out.reshape(N, cout, Ho, Wo)   # free reshape: already NCHW-flat


# ----------------------------- parameters -------------------------------------

def init_basic_block(key, in_ch, out_ch, stride):
    ks = jax.random.split(key, 12)

    def bn_params(k1, k2, k3, k4, c):
        gamma = jax.random.uniform(k1, (c,), minval=0.5, maxval=1.5)
        beta = 0.1 * jax.random.normal(k2, (c,))
        mean = 0.1 * jax.random.normal(k3, (c,))
        var = jax.random.uniform(k4, (c,), minval=0.5, maxval=1.5)
        eps = 1e-5
        scale = gamma / jnp.sqrt(var + eps)
        shift = beta - mean * scale
        return (scale.reshape(1, c).astype(jnp.float32),
                shift.reshape(1, c).astype(jnp.float32))

    params = {
        'w1': 0.1 * jax.random.normal(ks[0], (3, 3, in_ch, out_ch), jnp.float32),
        'w2': 0.1 * jax.random.normal(ks[1], (3, 3, out_ch, out_ch), jnp.float32),
    }
    params['s1'], params['b1'] = bn_params(ks[2], ks[3], ks[4], ks[5], out_ch)
    params['s2'], params['b2'] = bn_params(ks[6], ks[7], ks[8], ks[9], out_ch)
    if stride != 1 or in_ch != out_ch:
        params['wsc'] = 0.1 * jax.random.normal(ks[10], (in_ch, out_ch),
                                                jnp.float32)
        params['ssc'], params['bsc'] = bn_params(*jax.random.split(ks[11], 4),
                                                 out_ch)
    return params


# ----------------------------- reference --------------------------------------

def ref_forward(x_nchw, params, stride):
    x = jnp.transpose(x_nchw, (0, 2, 3, 1)).astype(jnp.float32)
    dn = ('NHWC', 'HWIO', 'NHWC')

    def conv(a, w, s, p):
        return lax.conv_general_dilated(a, w, (s, s), p, dimension_numbers=dn,
                                        precision=lax.Precision.HIGHEST)

    h = conv(x, params['w1'], stride, ((1, 1), (1, 1))) * params['s1'] + params['b1']
    h = jnp.maximum(h, 0.0)
    left = conv(h, params['w2'], 1, ((1, 1), (1, 1))) * params['s2'] + params['b2']
    if 'wsc' in params:
        w11 = params['wsc'].reshape(1, 1, *params['wsc'].shape)
        sc = conv(x, w11, stride, ((0, 0), (0, 0))) * params['ssc'] + params['bsc']
    else:
        sc = x
    return jnp.transpose(jnp.maximum(left + sc, 0.0), (0, 3, 1, 2))


# ------------------------------- main ------------------------------------------

if __name__ == "__main__":
    key = jax.random.PRNGKey(0)
    kx, kp1, kp2 = jax.random.split(key, 3)

    # PyTorch-style NCHW input.
    x = jax.random.normal(kx, (2, 4, 16, 16), jnp.float32)

    # Tolerance reflects bf16 MXU operands (per perf guidance); the reference
    # runs in f32 HIGHEST.  Structural bugs would produce O(1) errors.
    RTOL = ATOL = 5e-2

    # Config 1: downsampling block (in_ch=4 -> out_ch=8, stride=2): conv shortcut.
    p1 = init_basic_block(kp1, 4, 8, 2)
    y1 = jax.block_until_ready(basic_block_forward(x, p1, 2))
    r1 = ref_forward(x, p1, 2)
    assert y1.shape == (2, 8, 8, 8), y1.shape
    assert bool(jnp.allclose(y1, r1, rtol=RTOL, atol=ATOL)), \
        float(jnp.max(jnp.abs(y1 - r1)))

    # Config 2: identity shortcut (in_ch=out_ch=4, stride=1).
    p2 = init_basic_block(kp2, 4, 4, 1)
    y2 = jax.block_until_ready(basic_block_forward(x, p2, 1))
    r2 = ref_forward(x, p2, 1)
    assert y2.shape == (2, 4, 16, 16), y2.shape
    assert bool(jnp.allclose(y2, r2, rtol=RTOL, atol=ATOL)), \
        float(jnp.max(jnp.abs(y2 - r2)))

    print("KERNEL_OK")
</pallas_src>

<mosaic_0001>
module attributes {stable_mosaic.version = 11 : i64} {
  func.func @kernel(%arg0: i32, %arg1: memref<1x16x16x4xf32, #tpu.memory_space<vmem>>, %arg2: memref<36x8xbf16, #tpu.memory_space<vmem>>, %arg3: memref<1x8xf32, #tpu.memory_space<vmem>>, %arg4: memref<1x8xf32, #tpu.memory_space<vmem>>, %arg5: memref<72x8xbf16, #tpu.memory_space<vmem>>, %arg6: memref<1x8xf32, #tpu.memory_space<vmem>>, %arg7: memref<1x8xf32, #tpu.memory_space<vmem>>, %arg8: memref<64x256xbf16, #tpu.memory_space<vmem>>, %arg9: memref<4x8xbf16, #tpu.memory_space<vmem>>, %arg10: memref<1x8xf32, #tpu.memory_space<vmem>>, %arg11: memref<1x8xf32, #tpu.memory_space<vmem>>, %arg12: memref<1x8x64xf32, #tpu.memory_space<vmem>>, %arg13: memref<18x18x4xf32, #tpu.memory_space<vmem>>, %arg14: memref<256x36xf32, #tpu.memory_space<vmem>>, %arg15: memref<10x10x8xf32, #tpu.memory_space<vmem>>, %arg16: memref<64x72xf32, #tpu.memory_space<vmem>>) attributes {dimension_semantics = [#tpu.dimension_semantics<parallel>], iteration_bounds = array<i64: 2>, scalar_prefetch = 0 : i64, scratch_operands = 4 : i64, tpu.core_type = #tpu.core_type<tc>, window_params = [{transform_indices = @transform_0, window_bounds = array<i64: 1, 16, 16, 4>}, {pipeline_mode = #tpu.pipeline_mode<synchronous>, transform_indices = @transform_1, window_bounds = array<i64: 36, 8>}, {pipeline_mode = #tpu.pipeline_mode<synchronous>, transform_indices = @transform_2, window_bounds = array<i64: 1, 8>}, {pipeline_mode = #tpu.pipeline_mode<synchronous>, transform_indices = @transform_3, window_bounds = array<i64: 1, 8>}, {pipeline_mode = #tpu.pipeline_mode<synchronous>, transform_indices = @transform_4, window_bounds = array<i64: 72, 8>}, {pipeline_mode = #tpu.pipeline_mode<synchronous>, transform_indices = @transform_5, window_bounds = array<i64: 1, 8>}, {pipeline_mode = #tpu.pipeline_mode<synchronous>, transform_indices = @transform_6, window_bounds = array<i64: 1, 8>}, {pipeline_mode = #tpu.pipeline_mode<synchronous>, transform_indices = @transform_7, window_bounds = array<i64: 64, 256>}, {pipeline_mode = #tpu.pipeline_mode<synchronous>, transform_indices = @transform_8, window_bounds = array<i64: 4, 8>}, {pipeline_mode = #tpu.pipeline_mode<synchronous>, transform_indices = @transform_9, window_bounds = array<i64: 1, 8>}, {pipeline_mode = #tpu.pipeline_mode<synchronous>, transform_indices = @transform_10, window_bounds = array<i64: 1, 8>}, {transform_indices = @transform_11, window_bounds = array<i64: 1, 8, 64>}]} {
    %cst = arith.constant 0.000000e+00 : f32
    %0 = vector.broadcast %cst : f32 to vector<18x18x4xf32>
    %c0 = arith.constant 0 : index
    %c0_0 = arith.constant 0 : index
    %c0_1 = arith.constant 0 : index
    %1 = vector.load %arg13[%c0, %c0_0, %c0_1] : memref<18x18x4xf32, #tpu.memory_space<vmem>>, vector<18x18x4xf32>
    tpu.vector_store %arg13[%c0, %c0_0, %c0_1], %0 {strides = array<i32>} : memref<18x18x4xf32, #tpu.memory_space<vmem>>, vector<18x18x4xf32>,
    %c0_2 = arith.constant 0 : index
    %c0_3 = arith.constant 0 : index
    %c0_4 = arith.constant 0 : index
    %c0_5 = arith.constant 0 : index
    %2 = vector.load %arg1[%c0_2, %c0_3, %c0_4, %c0_5] : memref<1x16x16x4xf32, #tpu.memory_space<vmem>>, vector<1x16x16x4xf32>
    %3 = vector.shape_cast %2 : vector<1x16x16x4xf32> to vector<16x16x4xf32>
    %c1 = arith.constant 1 : index
    %c1_6 = arith.constant 1 : index
    %c0_7 = arith.constant 0 : index
    %4 = vector.load %arg13[%c1, %c1_6, %c0_7] : memref<18x18x4xf32, #tpu.memory_space<vmem>>, vector<16x16x4xf32>
    tpu.vector_store %arg13[%c1, %c1_6, %c0_7], %3 {strides = array<i32>} : memref<18x18x4xf32, #tpu.memory_space<vmem>>, vector<16x16x4xf32>,
    %c0_8 = arith.constant 0 : index
    %c0_9 = arith.constant 0 : index
    %c0_10 = arith.constant 0 : index
    %5 = vector.load %arg13[%c0_8, %c0_9, %c0_10] : memref<18x18x4xf32, #tpu.memory_space<vmem>>, vector<16x16x4xf32>
    %6 = vector.shape_cast %5 : vector<16x16x4xf32> to vector<256x4xf32>
    %c0_11 = arith.constant 0 : index
    %c0_12 = arith.constant 0 : index
    %7 = vector.load %arg14[%c0_11, %c0_12] : memref<256x36xf32, #tpu.memory_space<vmem>>, vector<256x4xf32>
    tpu.vector_store %arg14[%c0_11, %c0_12], %6 {strides = array<i32>} : memref<256x36xf32, #tpu.memory_space<vmem>>, vector<256x4xf32>,
    %c0_13 = arith.constant 0 : index
    %c1_14 = arith.constant 1 : index
    %c0_15 = arith.constant 0 : index
    %8 = vector.load %arg13[%c0_13, %c1_14, %c0_15] : memref<18x18x4xf32, #tpu.memory_space<vmem>>, vector<16x16x4xf32>
    %9 = vector.shape_cast %8 : vector<16x16x4xf32> to vector<256x4xf32>
    %c0_16 = arith.constant 0 : index
    %c4 = arith.constant 4 : index
    %10 = vector.load %arg14[%c0_16, %c4] : memref<256x36xf32, #tpu.memory_space<vmem>>, vector<256x4xf32>
    tpu.vector_store %arg14[%c0_16, %c4], %9 {strides = array<i32>} : memref<256x36xf32, #tpu.memory_space<vmem>>, vector<256x4xf32>,
    %c0_17 = arith.constant 0 : index
    %c2 = arith.constant 2 : index
    %c0_18 = arith.constant 0 : index
    %11 = vector.load %arg13[%c0_17, %c2, %c0_18] : memref<18x18x4xf32, #tpu.memory_space<vmem>>, vector<16x16x4xf32>
    %12 = vector.shape_cast %11 : vector<16x16x4xf32> to vector<256x4xf32>
    %c0_19 = arith.constant 0 : index
    %c8 = arith.constant 8 : index
    %13 = vector.load %arg14[%c0_19, %c8] : memref<256x36xf32, #tpu.memory_space<vmem>>, vector<256x4xf32>
    tpu.vector_store %arg14[%c0_19, %c8], %12 {strides = array<i32>} : memref<256x36xf32, #tpu.memory_space<vmem>>, vector<256x4xf32>,
    %c1_20 = arith.constant 1 : index
    %c0_21 = arith.constant 0 : index
    %c0_22 = arith.constant 0 : index
    %14 = vector.load %arg13[%c1_20, %c0_21, %c0_22] : memref<18x18x4xf32, #tpu.memory_space<vmem>>, vector<16x16x4xf32>
    %15 = vector.shape_cast %14 : vector<16x16x4xf32> to vector<256x4xf32>
    %c0_23 = arith.constant 0 : index
    %c12 = arith.constant 12 : index
    %16 = vector.load %arg14[%c0_23, %c12] : memref<256x36xf32, #tpu.memory_space<vmem>>, vector<256x4xf32>
    tpu.vector_store %arg14[%c0_23, %c12], %15 {strides = array<i32>} : memref<256x36xf32, #tpu.memory_space<vmem>>, vector<256x4xf32>,
    %c1_24 = arith.constant 1 : index
    %c1_25 = arith.constant 1 : index
    %c0_26 = arith.constant 0 : index
    %17 = vector.load %arg13[%c1_24, %c1_25, %c0_26] : memref<18x18x4xf32, #tpu.memory_space<vmem>>, vector<16x16x4xf32>
    %18 = vector.shape_cast %17 : vector<16x16x4xf32> to vector<256x4xf32>
    %c0_27 = arith.constant 0 : index
    %c16 = arith.constant 16 : index
    %19 = vector.load %arg14[%c0_27, %c16] : memref<256x36xf32, #tpu.memory_space<vmem>>, vector<256x4xf32>
    tpu.vector_store %arg14[%c0_27, %c16], %18 {strides = array<i32>} : memref<256x36xf32, #tpu.memory_space<vmem>>, vector<256x4xf32>,
    %c1_28 = arith.constant 1 : index
    %c2_29 = arith.constant 2 : index
    %c0_30 = arith.constant 0 : index
    %20 = vector.load %arg13[%c1_28, %c2_29, %c0_30] : memref<18x18x4xf32, #tpu.memory_space<vmem>>, vector<16x16x4xf32>
    %21 = vector.shape_cast %20 : vector<16x16x4xf32> to vector<256x4xf32>
    %c0_31 = arith.constant 0 : index
    %c20 = arith.constant 20 : index
    %22 = vector.load %arg14[%c0_31, %c20] : memref<256x36xf32, #tpu.memory_space<vmem>>, vector<256x4xf32>
    tpu.vector_store %arg14[%c0_31, %c20], %21 {strides = array<i32>} : memref<256x36xf32, #tpu.memory_space<vmem>>, vector<256x4xf32>,
    %c2_32 = arith.constant 2 : index
    %c0_33 = arith.constant 0 : index
    %c0_34 = arith.constant 0 : index
    %23 = vector.load %arg13[%c2_32, %c0_33, %c0_34] : memref<18x18x4xf32, #tpu.memory_space<vmem>>, vector<16x16x4xf32>
    %24 = vector.shape_cast %23 : vector<16x16x4xf32> to vector<256x4xf32>
    %c0_35 = arith.constant 0 : index
    %c24 = arith.constant 24 : index
    %25 = vector.load %arg14[%c0_35, %c24] : memref<256x36xf32, #tpu.memory_space<vmem>>, vector<256x4xf32>
    tpu.vector_store %arg14[%c0_35, %c24], %24 {strides = array<i32>} : memref<256x36xf32, #tpu.memory_space<vmem>>, vector<256x4xf32>,
    %c2_36 = arith.constant 2 : index
    %c1_37 = arith.constant 1 : index
    %c0_38 = arith.constant 0 : index
    %26 = vector.load %arg13[%c2_36, %c1_37, %c0_38] : memref<18x18x4xf32, #tpu.memory_space<vmem>>, vector<16x16x4xf32>
    %27 = vector.shape_cast %26 : vector<16x16x4xf32> to vector<256x4xf32>
    %c0_39 = arith.constant 0 : index
    %c28 = arith.constant 28 : index
    %28 = vector.load %arg14[%c0_39, %c28] : memref<256x36xf32, #tpu.memory_space<vmem>>, vector<256x4xf32>
    tpu.vector_store %arg14[%c0_39, %c28], %27 {strides = array<i32>} : memref<256x36xf32, #tpu.memory_space<vmem>>, vector<256x4xf32>,
    %c2_40 = arith.constant 2 : index
    %c2_41 = arith.constant 2 : index
    %c0_42 = arith.constant 0 : index
    %29 = vector.load %arg13[%c2_40, %c2_41, %c0_42] : memref<18x18x4xf32, #tpu.memory_space<vmem>>, vector<16x16x4xf32>
    %30 = vector.shape_cast %29 : vector<16x16x4xf32> to vector<256x4xf32>
    %c0_43 = arith.constant 0 : index
    %c32 = arith.constant 32 : index
    %31 = vector.load %arg14[%c0_43, %c32] : memref<256x36xf32, #tpu.memory_space<vmem>>, vector<256x4xf32>
    tpu.vector_store %arg14[%c0_43, %c32], %30 {strides = array<i32>} : memref<256x36xf32, #tpu.memory_space<vmem>>, vector<256x4xf32>,
    %c0_44 = arith.constant 0 : index
    %c0_45 = arith.constant 0 : index
    %32 = vector.load %arg14[%c0_44, %c0_45] : memref<256x36xf32, #tpu.memory_space<vmem>>, vector<256x36xf32>
    %33 = arith.truncf %32 : vector<256x36xf32> to vector<256x36xbf16>
    %c0_46 = arith.constant 0 : index
    %c0_47 = arith.constant 0 : index
    %34 = vector.load %arg8[%c0_46, %c0_47] : memref<64x256xbf16, #tpu.memory_space<vmem>>, vector<64x256xbf16>
    %cst_48 = arith.constant dense<0.000000e+00> : vector<64x36xf32>
    %35 = tpu.matmul %34, %33, %cst_48 {dimension_numbers = #tpu.dot_dimension_numbers<[1], [0], [0], [1], [0, 0, 1, 1], [], []>} : vector<64x256xbf16>, vector<256x36xbf16>, vector<64x36xf32> -> vector<64x36xf32>
    %36 = arith.truncf %35 : vector<64x36xf32> to vector<64x36xbf16>
    %c0_49 = arith.constant 0 : index
    %c0_50 = arith.constant 0 : index
    %37 = vector.load %arg2[%c0_49, %c0_50] : memref<36x8xbf16, #tpu.memory_space<vmem>>, vector<36x8xbf16>
    %cst_51 = arith.constant dense<0.000000e+00> : vector<64x8xf32>
    %38 = tpu.matmul %36, %37, %cst_51 {dimension_numbers = #tpu.dot_dimension_numbers<[1], [0], [0], [1], [0, 0, 1, 1], [], []>} : vector<64x36xbf16>, vector<36x8xbf16>, vector<64x8xf32> -> vector<64x8xf32>
    %c0_52 = arith.constant 0 : index
    %c0_53 = arith.constant 0 : index
    %39 = vector.load %arg3[%c0_52, %c0_53] : memref<1x8xf32, #tpu.memory_space<vmem>>, vector<1x8xf32>
    %40 = vector.broadcast %39 : vector<1x8xf32> to vector<64x8xf32>
    %41 = arith.mulf %38, %40 : vector<64x8xf32>
    %c0_54 = arith.constant 0 : index
    %c0_55 = arith.constant 0 : index
    %42 = vector.load %arg4[%c0_54, %c0_55] : memref<1x8xf32, #tpu.memory_space<vmem>>, vector<1x8xf32>
    %43 = vector.broadcast %42 : vector<1x8xf32> to vector<64x8xf32>
    %44 = arith.addf %41, %43 : vector<64x8xf32>
    %cst_56 = arith.constant 0.000000e+00 : f32
    %45 = vector.broadcast %cst_56 : f32 to vector<64x8xf32>
    %46 = arith.maximumf %44, %45 : vector<64x8xf32>
    %cst_57 = arith.constant 0.000000e+00 : f32
    %47 = vector.broadcast %cst_57 : f32 to vector<10x10x8xf32>
    %c0_58 = arith.constant 0 : index
    %c0_59 = arith.constant 0 : index
    %c0_60 = arith.constant 0 : index
    %48 = vector.load %arg15[%c0_58, %c0_59, %c0_60] : memref<10x10x8xf32, #tpu.memory_space<vmem>>, vector<10x10x8xf32>
    tpu.vector_store %arg15[%c0_58, %c0_59, %c0_60], %47 {strides = array<i32>} : memref<10x10x8xf32, #tpu.memory_space<vmem>>, vector<10x10x8xf32>,
    %49 = vector.shape_cast %46 : vector<64x8xf32> to vector<8x8x8xf32>
    %c1_61 = arith.constant 1 : index
    %c1_62 = arith.constant 1 : index
    %c0_63 = arith.constant 0 : index
    %50 = vector.load %arg15[%c1_61, %c1_62, %c0_63] : memref<10x10x8xf32, #tpu.memory_space<vmem>>, vector<8x8x8xf32>
    tpu.vector_store %arg15[%c1_61, %c1_62, %c0_63], %49 {strides = array<i32>} : memref<10x10x8xf32, #tpu.memory_space<vmem>>, vector<8x8x8xf32>,
    %c0_64 = arith.constant 0 : index
    %c0_65 = arith.constant 0 : index
    %c0_66 = arith.constant 0 : index
    %51 = vector.load %arg15[%c0_64, %c0_65, %c0_66] : memref<10x10x8xf32, #tpu.memory_space<vmem>>, vector<8x8x8xf32>
    %52 = vector.shape_cast %51 : vector<8x8x8xf32> to vector<64x8xf32>
    %c0_67 = arith.constant 0 : index
    %c0_68 = arith.constant 0 : index
    %53 = vector.load %arg16[%c0_67, %c0_68] : memref<64x72xf32, #tpu.memory_space<vmem>>, vector<64x8xf32>
    tpu.vector_store %arg16[%c0_67, %c0_68], %52 {strides = array<i32>} : memref<64x72xf32, #tpu.memory_space<vmem>>, vector<64x8xf32>,
    %c0_69 = arith.constant 0 : index
    %c1_70 = arith.constant 1 : index
    %c0_71 = arith.constant 0 : index
    %54 = vector.load %arg15[%c0_69, %c1_70, %c0_71] : memref<10x10x8xf32, #tpu.memory_space<vmem>>, vector<8x8x8xf32>
    %55 = vector.shape_cast %54 : vector<8x8x8xf32> to vector<64x8xf32>
    %c0_72 = arith.constant 0 : index
    %c8_73 = arith.constant 8 : index
    %56 = vector.load %arg16[%c0_72, %c8_73] : memref<64x72xf32, #tpu.memory_space<vmem>>, vector<64x8xf32>
    tpu.vector_store %arg16[%c0_72, %c8_73], %55 {strides = array<i32>} : memref<64x72xf32, #tpu.memory_space<vmem>>, vector<64x8xf32>,
    %c0_74 = arith.constant 0 : index
    %c2_75 = arith.constant 2 : index
    %c0_76 = arith.constant 0 : index
    %57 = vector.load %arg15[%c0_74, %c2_75, %c0_76] : memref<10x10x8xf32, #tpu.memory_space<vmem>>, vector<8x8x8xf32>
    %58 = vector.shape_cast %57 : vector<8x8x8xf32> to vector<64x8xf32>
    %c0_77 = arith.constant 0 : index
    %c16_78 = arith.constant 16 : index
    %59 = vector.load %arg16[%c0_77, %c16_78] : memref<64x72xf32, #tpu.memory_space<vmem>>, vector<64x8xf32>
    tpu.vector_store %arg16[%c0_77, %c16_78], %58 {strides = array<i32>} : memref<64x72xf32, #tpu.memory_space<vmem>>, vector<64x8xf32>,
    %c1_79 = arith.constant 1 : index
    %c0_80 = arith.constant 0 : index
    %c0_81 = arith.constant 0 : index
    %60 = vector.load %arg15[%c1_79, %c0_80, %c0_81] : memref<10x10x8xf32, #tpu.memory_space<vmem>>, vector<8x8x8xf32>
    %61 = vector.shape_cast %60 : vector<8x8x8xf32> to vector<64x8xf32>
    %c0_82 = arith.constant 0 : index
    %c24_83 = arith.constant 24 : index
    %62 = vector.load %arg16[%c0_82, %c24_83] : memref<64x72xf32, #tpu.memory_space<vmem>>, vector<64x8xf32>
    tpu.vector_store %arg16[%c0_82, %c24_83], %61 {strides = array<i32>} : memref<64x72xf32, #tpu.memory_space<vmem>>, vector<64x8xf32>,
    %c1_84 = arith.constant 1 : index
    %c1_85 = arith.constant 1 : index
    %c0_86 = arith.constant 0 : index
    %63 = vector.load %arg15[%c1_84, %c1_85, %c0_86] : memref<10x10x8xf32, #tpu.memory_space<vmem>>, vector<8x8x8xf32>
    %64 = vector.shape_cast %63 : vector<8x8x8xf32> to vector<64x8xf32>
    %c0_87 = arith.constant 0 : index
    %c32_88 = arith.constant 32 : index
    %65 = vector.load %arg16[%c0_87, %c32_88] : memref<64x72xf32, #tpu.memory_space<vmem>>, vector<64x8xf32>
    tpu.vector_store %arg16[%c0_87, %c32_88], %64 {strides = array<i32>} : memref<64x72xf32, #tpu.memory_space<vmem>>, vector<64x8xf32>,
    %c1_89 = arith.constant 1 : index
    %c2_90 = arith.constant 2 : index
    %c0_91 = arith.constant 0 : index
    %66 = vector.load %arg15[%c1_89, %c2_90, %c0_91] : memref<10x10x8xf32, #tpu.memory_space<vmem>>, vector<8x8x8xf32>
    %67 = vector.shape_cast %66 : vector<8x8x8xf32> to vector<64x8xf32>
    %c0_92 = arith.constant 0 : index
    %c40 = arith.constant 40 : index
    %68 = vector.load %arg16[%c0_92, %c40] : memref<64x72xf32, #tpu.memory_space<vmem>>, vector<64x8xf32>
    tpu.vector_store %arg16[%c0_92, %c40], %67 {strides = array<i32>} : memref<64x72xf32, #tpu.memory_space<vmem>>, vector<64x8xf32>,
    %c2_93 = arith.constant 2 : index
    %c0_94 = arith.constant 0 : index
    %c0_95 = arith.constant 0 : index
    %69 = vector.load %arg15[%c2_93, %c0_94, %c0_95] : memref<10x10x8xf32, #tpu.memory_space<vmem>>, vector<8x8x8xf32>
    %70 = vector.shape_cast %69 : vector<8x8x8xf32> to vector<64x8xf32>
    %c0_96 = arith.constant 0 : index
    %c48 = arith.constant 48 : index
    %71 = vector.load %arg16[%c0_96, %c48] : memref<64x72xf32, #tpu.memory_space<vmem>>, vector<64x8xf32>
    tpu.vector_store %arg16[%c0_96, %c48], %70 {strides = array<i32>} : memref<64x72xf32, #tpu.memory_space<vmem>>, vector<64x8xf32>,
    %c2_97 = arith.constant 2 : index
    %c1_98 = arith.constant 1 : index
    %c0_99 = arith.constant 0 : index
    %72 = vector.load %arg15[%c2_97, %c1_98, %c0_99] : memref<10x10x8xf32, #tpu.memory_space<vmem>>, vector<8x8x8xf32>
    %73 = vector.shape_cast %72 : vector<8x8x8xf32> to vector<64x8xf32>
    %c0_100 = arith.constant 0 : index
    %c56 = arith.constant 56 : index
    %74 = vector.load %arg16[%c0_100, %c56] : memref<64x72xf32, #tpu.memory_space<vmem>>, vector<64x8xf32>
    tpu.vector_store %arg16[%c0_100, %c56], %73 {strides = array<i32>} : memref<64x72xf32, #tpu.memory_space<vmem>>, vector<64x8xf32>,
    %c2_101 = arith.constant 2 : index
    %c2_102 = arith.constant 2 : index
    %c0_103 = arith.constant 0 : index
    %75 = vector.load %arg15[%c2_101, %c2_102, %c0_103] : memref<10x10x8xf32, #tpu.memory_space<vmem>>, vector<8x8x8xf32>
    %76 = vector.shape_cast %75 : vector<8x8x8xf32> to vector<64x8xf32>
    %c0_104 = arith.constant 0 : index
    %c64 = arith.constant 64 : index
    %77 = vector.load %arg16[%c0_104, %c64] : memref<64x72xf32, #tpu.memory_space<vmem>>, vector<64x8xf32>
    tpu.vector_store %arg16[%c0_104, %c64], %76 {strides = array<i32>} : memref<64x72xf32, #tpu.memory_space<vmem>>, vector<64x8xf32>,
    %c0_105 = arith.constant 0 : index
    %c0_106 = arith.constant 0 : index
    %78 = vector.load %arg16[%c0_105, %c0_106] : memref<64x72xf32, #tpu.memory_space<vmem>>, vector<64x72xf32>
    %79 = arith.truncf %78 : vector<64x72xf32> to vector<64x72xbf16>
    %c0_107 = arith.constant 0 : index
    %c0_108 = arith.constant 0 : index
    %80 = vector.load %arg5[%c0_107, %c0_108] : memref<72x8xbf16, #tpu.memory_space<vmem>>, vector<72x8xbf16>
    %cst_109 = arith.constant dense<0.000000e+00> : vector<64x8xf32>
    %81 = tpu.matmul %79, %80, %cst_109 {dimension_numbers = #tpu.dot_dimension_numbers<[1], [0], [0], [1], [0, 0, 1, 1], [], []>} : vector<64x72xbf16>, vector<72x8xbf16>, vector<64x8xf32> -> vector<64x8xf32>
    %c0_110 = arith.constant 0 : index
    %c0_111 = arith.constant 0 : index
    %82 = vector.load %arg6[%c0_110, %c0_111] : memref<1x8xf32, #tpu.memory_space<vmem>>, vector<1x8xf32>
    %83 = vector.broadcast %82 : vector<1x8xf32> to vector<64x8xf32>
    %84 = arith.mulf %81, %83 : vector<64x8xf32>
    %c0_112 = arith.constant 0 : index
    %c0_113 = arith.constant 0 : index
    %85 = vector.load %arg7[%c0_112, %c0_113] : memref<1x8xf32, #tpu.memory_space<vmem>>, vector<1x8xf32>
    %86 = vector.broadcast %85 : vector<1x8xf32> to vector<64x8xf32>
    %87 = arith.addf %84, %86 : vector<64x8xf32>
    %c0_114 = arith.constant 0 : index
    %c0_115 = arith.constant 0 : index
    %c0_116 = arith.constant 0 : index
    %c0_117 = arith.constant 0 : index
    %88 = vector.load %arg1[%c0_114, %c0_115, %c0_116, %c0_117] : memref<1x16x16x4xf32, #tpu.memory_space<vmem>>, vector<1x16x16x4xf32>
    %89 = vector.shape_cast %88 : vector<1x16x16x4xf32> to vector<16x16x4xf32>
    %90 = vector.shape_cast %89 : vector<16x16x4xf32> to vector<256x4xf32>
    %c0_118 = arith.constant 0 : index
    %c0_119 = arith.constant 0 : index
    %91 = vector.load %arg8[%c0_118, %c0_119] : memref<64x256xbf16, #tpu.memory_space<vmem>>, vector<64x256xbf16>
    %92 = arith.truncf %90 : vector<256x4xf32> to vector<256x4xbf16>
    %cst_120 = arith.constant dense<0.000000e+00> : vector<64x4xf32>
    %93 = tpu.matmul %91, %92, %cst_120 {dimension_numbers = #tpu.dot_dimension_numbers<[1], [0], [0], [1], [0, 0, 1, 1], [], []>} : vector<64x256xbf16>, vector<256x4xbf16>, vector<64x4xf32> -> vector<64x4xf32>
    %94 = arith.truncf %93 : vector<64x4xf32> to vector<64x4xbf16>
    %c0_121 = arith.constant 0 : index
    %c0_122 = arith.constant 0 : index
    %95 = vector.load %arg9[%c0_121, %c0_122] : memref<4x8xbf16, #tpu.memory_space<vmem>>, vector<4x8xbf16>
    %cst_123 = arith.constant dense<0.000000e+00> : vector<64x8xf32>
    %96 = tpu.matmul %94, %95, %cst_123 {dimension_numbers = #tpu.dot_dimension_numbers<[1], [0], [0], [1], [0, 0, 1, 1], [], []>} : vector<64x4xbf16>, vector<4x8xbf16>, vector<64x8xf32> -> vector<64x8xf32>
    %c0_124 = arith.constant 0 : index
    %c0_125 = arith.constant 0 : index
    %97 = vector.load %arg10[%c0_124, %c0_125] : memref<1x8xf32, #tpu.memory_space<vmem>>, vector<1x8xf32>
    %98 = vector.broadcast %97 : vector<1x8xf32> to vector<64x8xf32>
    %99 = arith.mulf %96, %98 : vector<64x8xf32>
    %c0_126 = arith.constant 0 : index
    %c0_127 = arith.constant 0 : index
    %100 = vector.load %arg11[%c0_126, %c0_127] : memref<1x8xf32, #tpu.memory_space<vmem>>, vector<1x8xf32>
    %101 = vector.broadcast %100 : vector<1x8xf32> to vector<64x8xf32>
    %102 = arith.addf %99, %101 : vector<64x8xf32>
    %103 = arith.addf %87, %102 : vector<64x8xf32>
    %cst_128 = arith.constant 0.000000e+00 : f32
    %104 = vector.broadcast %cst_128 : f32 to vector<64x8xf32>
    %105 = arith.maximumf %103, %104 : vector<64x8xf32>
    %106 = tpu.transpose %105, [1, 0] : vector<64x8xf32> -> vector<8x64xf32>
    %c0_129 = arith.constant 0 : index
    %c0_130 = arith.constant 0 : index
    %c0_131 = arith.constant 0 : index
    %107 = vector.load %arg12[%c0_129, %c0_130, %c0_131] : memref<1x8x64xf32, #tpu.memory_space<vmem>>, vector<1x8x64xf32>
    %108 = vector.shape_cast %107 : vector<1x8x64xf32> to vector<8x64xf32>
    %109 = vector.shape_cast %106 : vector<8x64xf32> to vector<1x8x64xf32>
    tpu.vector_store %arg12[%c0_129, %c0_130, %c0_131], %109 {strides = array<i32>} : memref<1x8x64xf32, #tpu.memory_space<vmem>>, vector<1x8x64xf32>,
    return
  }
  func.func @transform_0(%arg0: i32) -> (i32, i32, i32, i32) {
    %c0_i32 = arith.constant 0 : i32
    %c0_i32_0 = arith.constant 0 : i32
    %c0_i32_1 = arith.constant 0 : i32
    %c0_i32_2 = arith.constant 0 : i32
    return %arg0, %c0_i32, %c0_i32_0, %c0_i32_1 : i32, i32, i32, i32
  }
  func.func @transform_1(%arg0: i32) -> (i32, i32) {
    %c0_i32 = arith.constant 0 : i32
    %c0_i32_0 = arith.constant 0 : i32
    %c0_i32_1 = arith.constant 0 : i32
    return %c0_i32, %c0_i32_0 : i32, i32
  }
  func.func @transform_2(%arg0: i32) -> (i32, i32) {
    %c0_i32 = arith.constant 0 : i32
    %c0_i32_0 = arith.constant 0 : i32
    %c0_i32_1 = arith.constant 0 : i32
    return %c0_i32, %c0_i32_0 : i32, i32
  }
  func.func @transform_3(%arg0: i32) -> (i32, i32) {
    %c0_i32 = arith.constant 0 : i32
    %c0_i32_0 = arith.constant 0 : i32
    %c0_i32_1 = arith.constant 0 : i32
    return %c0_i32, %c0_i32_0 : i32, i32
  }
  func.func @transform_4(%arg0: i32) -> (i32, i32) {
    %c0_i32 = arith.constant 0 : i32
    %c0_i32_0 = arith.constant 0 : i32
    %c0_i32_1 = arith.constant 0 : i32
    return %c0_i32, %c0_i32_0 : i32, i32
  }
  func.func @transform_5(%arg0: i32) -> (i32, i32) {
    %c0_i32 = arith.constant 0 : i32
    %c0_i32_0 = arith.constant 0 : i32
    %c0_i32_1 = arith.constant 0 : i32
    return %c0_i32, %c0_i32_0 : i32, i32
  }
  func.func @transform_6(%arg0: i32) -> (i32, i32) {
    %c0_i32 = arith.constant 0 : i32
    %c0_i32_0 = arith.constant 0 : i32
    %c0_i32_1 = arith.constant 0 : i32
    return %c0_i32, %c0_i32_0 : i32, i32
  }
  func.func @transform_7(%arg0: i32) -> (i32, i32) {
    %c0_i32 = arith.constant 0 : i32
    %c0_i32_0 = arith.constant 0 : i32
    %c0_i32_1 = arith.constant 0 : i32
    return %c0_i32, %c0_i32_0 : i32, i32
  }
  func.func @transform_8(%arg0: i32) -> (i32, i32) {
    %c0_i32 = arith.constant 0 : i32
    %c0_i32_0 = arith.constant 0 : i32
    %c0_i32_1 = arith.constant 0 : i32
    return %c0_i32, %c0_i32_0 : i32, i32
  }
  func.func @transform_9(%arg0: i32) -> (i32, i32) {
    %c0_i32 = arith.constant 0 : i32
    %c0_i32_0 = arith.constant 0 : i32
    %c0_i32_1 = arith.constant 0 : i32
    return %c0_i32, %c0_i32_0 : i32, i32
  }
  func.func @transform_10(%arg0: i32) -> (i32, i32) {
    %c0_i32 = arith.constant 0 : i32
    %c0_i32_0 = arith.constant 0 : i32
    %c0_i32_1 = arith.constant 0 : i32
    return %c0_i32, %c0_i32_0 : i32, i32
  }
  func.func @transform_11(%arg0: i32) -> (i32, i32, i32) {
    %c0_i32 = arith.constant 0 : i32
    %c0_i32_0 = arith.constant 0 : i32
    %c0_i32_1 = arith.constant 0 : i32
    return %arg0, %c0_i32, %c0_i32_0 : i32, i32, i32
  }
}

</mosaic_0001>

<llo_original>
// kernel: basic_block_forward.1
$region0: #{basic_block_forward.1}
  #allocation0 [shape = 'u32[]', space=smem, size = 0x4, offset = 0x4, fixed_abs, tag = 'smem constant byte address 0x4 - core index']
  #allocation1 [shape = 'u32[144,128]{1,0:T(1,128)}', space=vmem, size = 0x12000, scoped, tag = 'internal scratch']
  #allocation2 [shape = 'f32[18,18,4]{2,1,0:T(8,128)}', space=vmem, size = 0x36000, scoped, tag = 'scratch operand']
  #allocation3 [shape = 'f32[256,36]{1,0:T(8,128)}', space=vmem, size = 0x20000, scoped, tag = 'scratch operand']
  #allocation4 [shape = 'f32[10,10,8]{2,1,0:T(8,128)}', space=vmem, size = 0x14000, scoped, tag = 'scratch operand']
  #allocation5 [shape = 'f32[64,72]{1,0:T(8,128)}', space=vmem, size = 0x8000, scoped, tag = 'scratch operand']
  %s0 = inlined_call_operand.vmem [shape: f32[2,16,16,4], index: 0, kind: input, shape index: {}]
  %s1 = inlined_call_operand.vmem [shape: bf16[36,8], index: 1, kind: input, shape index: {}]
  %s2 = inlined_call_operand.vmem [shape: f32[1,8], index: 2, kind: input, shape index: {}]
  %s3 = inlined_call_operand.vmem [shape: f32[1,8], index: 3, kind: input, shape index: {}]
  %s4 = inlined_call_operand.vmem [shape: bf16[72,8], index: 4, kind: input, shape index: {}]
  %s5 = inlined_call_operand.vmem [shape: f32[1,8], index: 5, kind: input, shape index: {}]
  %s6 = inlined_call_operand.vmem [shape: f32[1,8], index: 6, kind: input, shape index: {}]
  %s7 = inlined_call_operand.vmem [shape: bf16[64,256], index: 7, kind: input, shape index: {}]
  %s8 = inlined_call_operand.vmem [shape: bf16[4,8], index: 8, kind: input, shape index: {}]
  %s9 = inlined_call_operand.vmem [shape: f32[1,8], index: 9, kind: input, shape index: {}]
  %s10 = inlined_call_operand.vmem [shape: f32[1,8], index: 10, kind: input, shape index: {}]
  %s11 = inlined_call_operand.vmem [shape: f32[2,8,64], index: 11, kind: output, shape index: {}]
  %s12 = sld [smem:[#allocation0]]
  $region77: #{basic_block_forward.1} parent=0
    _
  %s14 = ssub.s32 1, %s12
  %s15 = scalar_select 0, %s14, %s12
  loop: start=0, step=1, limit=4
  $region2: #{basic_block_forward.1} parent=0 // loop_pre_header
    _
  $region3: #{basic_block_forward.1} parent=0 // loop_header
    %s17 = sphi 0, %s21
    %p18 = scmp.ge.s32.totalorder %s17, 4
    %s27 = sphi 0, %s29
    %s30 = sphi 0, %s27
    %s31 = sphi 0, %s30
    %s47 = sphi 0, %s31
    %s51 = sphi 0, %s51
    %s53 = sphi 0, %s51
    %s54 = sphi 0, %s53
    %s68 = sphi 0, %s54
    %s72 = sphi 0, %s72
    %s74 = sphi 0, %s72
    %s75 = sphi 0, %s74
    %s89 = sphi 0, %s75
    %s93 = sphi 0, %s93
    %s95 = sphi 0, %s93
    %s96 = sphi 0, %s95
    %s110 = sphi 0, %s96
    %s114 = sphi 0, %s114
    %s116 = sphi 0, %s114
    %s117 = sphi 0, %s116
    %s131 = sphi 0, %s117
    %s135 = sphi 0, %s135
    %s137 = sphi 0, %s135
    %s138 = sphi 0, %s137
    %s152 = sphi 0, %s138
    %s156 = sphi 0, %s156
    %s158 = sphi 0, %s156
    %s159 = sphi 0, %s158
    %s173 = sphi 0, %s159
    %s177 = sphi 0, %s177
    %s179 = sphi 0, %s177
    %s180 = sphi 0, %s179
    %s194 = sphi 0, %s180
    %s198 = sphi 0, %s198
    %s200 = sphi 0, %s198
    %s201 = sphi 0, %s200
    %s215 = sphi 0, %s201
    %s219 = sphi 0, %s219
    %s221 = sphi 0, %s219
    %s222 = sphi 0, %s221
    %s236 = sphi 0, %s222
    %s240 = sphi 0, %s240
    %s242 = sphi 0, %s240
    %s243 = sphi 0, %s242
    %s257 = sphi 0, %s243
    %s263 = sphi 0, %s265
    %s266 = sphi 0, %s263
    %s267 = sphi 0, %s266
    %s283 = sphi 0, %s267
  $region4: #{basic_block_forward.1} parent=0 // loop_header_branch
    %20 = sbr.rel (%p18) target = $region8
  $region5: #{basic_block_forward.1} parent=0 // loop_body
    %s22 = ssub.s32 %s17, 1
    %s23 = ssub.s32 %s17, 2
    %s24 = sadd.s32 %s17, 1
    %s25 = ssub.s32 %s17, %s24
    %p26 = scmp.eq.s32.totalorder %s25, 0
    %s28 = sadd.s32 %s27, 1
    %s29 = scalar_select %p26, %s27, %s28
    %p32 = pneg %p26
    %p33 = scmp.eq.s32.totalorder %s17, 1
    %p34 = por %p32, %p33
    %p35 = scmp.ne.s32.totalorder %s27, %s30
    %p36 = scmp.eq.s32.totalorder %s17, 0
    %p37 = por %p35, %p36
    %p38 = scmp.ne.s32.totalorder %s27, %s30
    %p39 = scmp.eq.s32.totalorder %s22, 1
    %p40 = por %p38, %p39
    %p41 = scmp.ne.s32.totalorder %s30, %s31
    %p42 = scmp.eq.s32.totalorder %s22, 0
    %p43 = por %p41, %p42
    %p44 = scmp.ne.s32.totalorder %s30, %s31
    %p45 = scmp.eq.s32.totalorder %s23, 1
    %p46 = por %p44, %p45
    %p48 = scmp.ne.s32.totalorder %s31, %s47
    %p49 = scmp.eq.s32.totalorder %s23, 0
    %p50 = por %p48, %p49
    %s52 = sadd.s32 %s51, 1
    %p55 = scmp.eq.s32.totalorder %s17, 1
    %p56 = scmp.ne.s32.totalorder %s51, %s53
    %p57 = scmp.eq.s32.totalorder %s17, 0
    %p58 = por %p56, %p57
    %p59 = scmp.ne.s32.totalorder %s51, %s53
    %p60 = scmp.eq.s32.totalorder %s22, 1
    %p61 = por %p59, %p60
    %p62 = scmp.ne.s32.totalorder %s53, %s54
    %p63 = scmp.eq.s32.totalorder %s22, 0
    %p64 = por %p62, %p63
    %p65 = scmp.ne.s32.totalorder %s53, %s54
    %p66 = scmp.eq.s32.totalorder %s23, 1
    %p67 = por %p65, %p66
    %p69 = scmp.ne.s32.totalorder %s54, %s68
    %p70 = scmp.eq.s32.totalorder %s23, 0
    %p71 = por %p69, %p70
    %s73 = sadd.s32 %s72, 1
    %p76 = scmp.eq.s32.totalorder %s17, 1
    %p77 = scmp.ne.s32.totalorder %s72, %s74
    %p78 = scmp.eq.s32.totalorder %s17, 0
    %p79 = por %p77, %p78
    %p80 = scmp.ne.s32.totalorder %s72, %s74
    %p81 = scmp.eq.s32.totalorder %s22, 1
    %p82 = por %p80, %p81
    %p83 = scmp.ne.s32.totalorder %s74, %s75
    %p84 = scmp.eq.s32.totalorder %s22, 0
    %p85 = por %p83, %p84
    %p86 = scmp.ne.s32.totalorder %s74, %s75
    %p87 = scmp.eq.s32.totalorder %s23, 1
    %p88 = por %p86, %p87
    %p90 = scmp.ne.s32.totalorder %s75, %s89
    %p91 = scmp.eq.s32.totalorder %s23, 0
    %p92 = por %p90, %p91
    %s94 = sadd.s32 %s93, 1
    %p97 = scmp.eq.s32.totalorder %s17, 1
    %p98 = scmp.ne.s32.totalorder %s93, %s95
    %p99 = scmp.eq.s32.totalorder %s17, 0
    %p100 = por %p98, %p99
    %p101 = scmp.ne.s32.totalorder %s93, %s95
    %p102 = scmp.eq.s32.totalorder %s22, 1
    %p103 = por %p101, %p102
    %p104 = scmp.ne.s32.totalorder %s95, %s96
    %p105 = scmp.eq.s32.totalorder %s22, 0
    %p106 = por %p104, %p105
    %p107 = scmp.ne.s32.totalorder %s95, %s96
    %p108 = scmp.eq.s32.totalorder %s23, 1
    %p109 = por %p107, %p108
    %p111 = scmp.ne.s32.totalorder %s96, %s110
    %p112 = scmp.eq.s32.totalorder %s23, 0
    %p113 = por %p111, %p112
    %s115 = sadd.s32 %s114, 1
    %p118 = scmp.eq.s32.totalorder %s17, 1
    %p119 = scmp.ne.s32.totalorder %s114, %s116
    %p120 = scmp.eq.s32.totalorder %s17, 0
    %p121 = por %p119, %p120
    %p122 = scmp.ne.s32.totalorder %s114, %s116
    %p123 = scmp.eq.s32.totalorder %s22, 1
    %p124 = por %p122, %p123
    %p125 = scmp.ne.s32.totalorder %s116, %s117
    %p126 = scmp.eq.s32.totalorder %s22, 0
    %p127 = por %p125, %p126
    %p128 = scmp.ne.s32.totalorder %s116, %s117
    %p129 = scmp.eq.s32.totalorder %s23, 1
    %p130 = por %p128, %p129
    %p132 = scmp.ne.s32.totalorder %s117, %s131
    %p133 = scmp.eq.s32.totalorder %s23, 0
    %p134 = por %p132, %p133
    %s136 = sadd.s32 %s135, 1
    %p139 = scmp.eq.s32.totalorder %s17, 1
    %p140 = scmp.ne.s32.totalorder %s135, %s137
    %p141 = scmp.eq.s32.totalorder %s17, 0
    %p142 = por %p140, %p141
    %p143 = scmp.ne.s32.totalorder %s135, %s137
    %p144 = scmp.eq.s32.totalorder %s22, 1
    %p145 = por %p143, %p144
    %p146 = scmp.ne.s32.totalorder %s137, %s138
    %p147 = scmp.eq.s32.totalorder %s22, 0
    %p148 = por %p146, %p147
    %p149 = scmp.ne.s32.totalorder %s137, %s138
    %p150 = scmp.eq.s32.totalorder %s23, 1
    %p151 = por %p149, %p150
    %p153 = scmp.ne.s32.totalorder %s138, %s152
    %p154 = scmp.eq.s32.totalorder %s23, 0
    %p155 = por %p153, %p154
    %s157 = sadd.s32 %s156, 1
    %p160 = scmp.eq.s32.totalorder %s17, 1
    %p161 = scmp.ne.s32.totalorder %s156, %s158
    %p162 = scmp.eq.s32.totalorder %s17, 0
    %p163 = por %p161, %p162
    %p164 = scmp.ne.s32.totalorder %s156, %s158
    %p165 = scmp.eq.s32.totalorder %s22, 1
    %p166 = por %p164, %p165
    %p167 = scmp.ne.s32.totalorder %s158, %s159
    %p168 = scmp.eq.s32.totalorder %s22, 0
    %p169 = por %p167, %p168
    %p170 = scmp.ne.s32.totalorder %s158, %s159
    %p171 = scmp.eq.s32.totalorder %s23, 1
    %p172 = por %p170, %p171
    %p174 = scmp.ne.s32.totalorder %s159, %s173
    %p175 = scmp.eq.s32.totalorder %s23, 0
    %p176 = por %p174, %p175
    %s178 = sadd.s32 %s177, 1
    %p181 = scmp.eq.s32.totalorder %s17, 1
    %p182 = scmp.ne.s32.totalorder %s177, %s179
    %p183 = scmp.eq.s32.totalorder %s17, 0
    %p184 = por %p182, %p183
    %p185 = scmp.ne.s32.totalorder %s177, %s179
    %p186 = scmp.eq.s32.totalorder %s22, 1
    %p187 = por %p185, %p186
    %p188 = scmp.ne.s32.totalorder %s179, %s180
    %p189 = scmp.eq.s32.totalorder %s22, 0
    %p190 = por %p188, %p189
    %p191 = scmp.ne.s32.totalorder %s179, %s180
    %p192 = scmp.eq.s32.totalorder %s23, 1
    %p193 = por %p191, %p192
    %p195 = scmp.ne.s32.totalorder %s180, %s194
    %p196 = scmp.eq.s32.totalorder %s23, 0
    %p197 = por %p195, %p196
    %s199 = sadd.s32 %s198, 1
    %p202 = scmp.eq.s32.totalorder %s17, 1
    %p203 = scmp.ne.s32.totalorder %s198, %s200
    %p204 = scmp.eq.s32.totalorder %s17, 0
    %p205 = por %p203, %p204
    %p206 = scmp.ne.s32.totalorder %s198, %s200
    %p207 = scmp.eq.s32.totalorder %s22, 1
    %p208 = por %p206, %p207
    %p209 = scmp.ne.s32.totalorder %s200, %s201
    %p210 = scmp.eq.s32.totalorder %s22, 0
    %p211 = por %p209, %p210
    %p212 = scmp.ne.s32.totalorder %s200, %s201
    %p213 = scmp.eq.s32.totalorder %s23, 1
    %p214 = por %p212, %p213
    %p216 = scmp.ne.s32.totalorder %s201, %s215
    %p217 = scmp.eq.s32.totalorder %s23, 0
    %p218 = por %p216, %p217
    %s220 = sadd.s32 %s219, 1
    %p223 = scmp.eq.s32.totalorder %s17, 1
    %p224 = scmp.ne.s32.totalorder %s219, %s221
    %p225 = scmp.eq.s32.totalorder %s17, 0
    %p226 = por %p224, %p225
    %p227 = scmp.ne.s32.totalorder %s219, %s221
    %p228 = scmp.eq.s32.totalorder %s22, 1
    %p229 = por %p227, %p228
    %p230 = scmp.ne.s32.totalorder %s221, %s222
    %p231 = scmp.eq.s32.totalorder %s22, 0
    %p232 = por %p230, %p231
    %p233 = scmp.ne.s32.totalorder %s221, %s222
    %p234 = scmp.eq.s32.totalorder %s23, 1
    %p235 = por %p233, %p234
    %p237 = scmp.ne.s32.totalorder %s222, %s236
    %p238 = scmp.eq.s32.totalorder %s23, 0
    %p239 = por %p237, %p238
    %s241 = sadd.s32 %s240, 1
    %p244 = scmp.eq.s32.totalorder %s17, 1
    %p245 = scmp.ne.s32.totalorder %s240, %s242
    %p246 = scmp.eq.s32.totalorder %s17, 0
    %p247 = por %p245, %p246
    %p248 = scmp.ne.s32.totalorder %s240, %s242
    %p249 = scmp.eq.s32.totalorder %s22, 1
    %p250 = por %p248, %p249
    %p251 = scmp.ne.s32.totalorder %s242, %s243
    %p252 = scmp.eq.s32.totalorder %s22, 0
    %p253 = por %p251, %p252
    %p254 = scmp.ne.s32.totalorder %s242, %s243
    %p255 = scmp.eq.s32.totalorder %s23, 1
    %p256 = por %p254, %p255
    %p258 = scmp.ne.s32.totalorder %s243, %s257
    %p259 = scmp.eq.s32.totalorder %s23, 0
    %p260 = por %p258, %p259
    %s261 = ssub.s32 %s17, %s24
    %p262 = scmp.eq.s32.totalorder %s261, 0
    %s264 = sadd.s32 %s263, 1
    %s265 = scalar_select %p262, %s263, %s264
    %p268 = pneg %p262
    %p269 = scmp.eq.s32.totalorder %s17, 1
    %p270 = por %p268, %p269
    %p271 = scmp.ne.s32.totalorder %s263, %s266
    %p272 = scmp.eq.s32.totalorder %s17, 0
    %p273 = por %p271, %p272
    %p274 = scmp.ne.s32.totalorder %s263, %s266
    %p275 = scmp.eq.s32.totalorder %s22, 1
    %p276 = por %p274, %p275
    %p277 = scmp.ne.s32.totalorder %s266, %s267
    %p278 = scmp.eq.s32.totalorder %s22, 0
    %p279 = por %p277, %p278
    %p280 = scmp.ne.s32.totalorder %s266, %s267
    %p281 = scmp.eq.s32.totalorder %s23, 1
    %p282 = por %p280, %p281
    %p284 = scmp.ne.s32.totalorder %s267, %s283
    %p285 = scmp.eq.s32.totalorder %s23, 0
    %p286 = por %p284, %p285
    %p287 = scmp.le.s32.totalorder 1, %s17
    %p288 = scmp.lt.s32.totalorder %s17, 3
    %p289 = pnand %p287, %p288
    %p290 = pneg %p289
    // Predicated region
    $region9: #{basic_block_forward.1} parent=5 // pred_check
      _
    $region10: #{basic_block_forward.1} parent=5 // pred_check_branch
      %292 = sbr.rel (%p289) target = $region12
    $region11: #{basic_block_forward.1} parent=5 // pred_region
      %s293 = ssub.s32 %s17, 1
      // Predicated region
      $region13: #{basic_block_forward.1} parent=11 // pred_check
        %p294 = pneg %p64
      $region14: #{basic_block_forward.1} parent=11 // pred_check_branch
        %296 = sbr.rel (%p294) target = $region16
      $region15: #{basic_block_forward.1} parent=11 // pred_region
        _
      $region16: #{basic_block_forward.1} parent=11 // pred_fallthru
        _
      // Predicated region
      $region17: #{basic_block_forward.1} parent=11 // pred_check
        %p297 = pneg %p85
      $region18: #{basic_block_forward.1} parent=11 // pred_check_branch
        %299 = sbr.rel (%p297) target = $region20
      $region19: #{basic_block_forward.1} parent=11 // pred_region
        _
      $region20: #{basic_block_forward.1} parent=11 // pred_fallthru
        _
      // Predicated region
      $region21: #{basic_block_forward.1} parent=11 // pred_check
        %p300 = pneg %p106
      $region22: #{basic_block_forward.1} parent=11 // pred_check_branch
        %302 = sbr.rel (%p300) target = $region24
      $region23: #{basic_block_forward.1} parent=11 // pred_region
        _
      $region24: #{basic_block_forward.1} parent=11 // pred_fallthru
        _
      // Predicated region
      $region25: #{basic_block_forward.1} parent=11 // pred_check
        %p303 = pneg %p127
      $region26: #{basic_block_forward.1} parent=11 // pred_check_branch
        %305 = sbr.rel (%p303) target = $region28
      $region27: #{basic_block_forward.1} parent=11 // pred_region
        _
      $region28: #{basic_block_forward.1} parent=11 // pred_fallthru
        _
      // Predicated region
      $region29: #{basic_block_forward.1} parent=11 // pred_check
        %p306 = pneg %p148
      $region30: #{basic_block_forward.1} parent=11 // pred_check_branch
        %308 = sbr.rel (%p306) target = $region32
      $region31: #{basic_block_forward.1} parent=11 // pred_region
        _
      $region32: #{basic_block_forward.1} parent=11 // pred_fallthru
        _
      // Predicated region
      $region33: #{basic_block_forward.1} parent=11 // pred_check
        %p309 = pneg %p169
      $region34: #{basic_block_forward.1} parent=11 // pred_check_branch
        %311 = sbr.rel (%p309) target = $region36
      $region35: #{basic_block_forward.1} parent=11 // pred_region
        _
      $region36: #{basic_block_forward.1} parent=11 // pred_fallthru
        _
      // Predicated region
      $region37: #{basic_block_forward.1} parent=11 // pred_check
        %p312 = pneg %p190
      $region38: #{basic_block_forward.1} parent=11 // pred_check_branch
        %314 = sbr.rel (%p312) target = $region40
      $region39: #{basic_block_forward.1} parent=11 // pred_region
        _
      $region40: #{basic_block_forward.1} parent=11 // pred_fallthru
        _
      // Predicated region
      $region41: #{basic_block_forward.1} parent=11 // pred_check
        %p315 = pneg %p211
      $region42: #{basic_block_forward.1} parent=11 // pred_check_branch
        %317 = sbr.rel (%p315) target = $region44
      $region43: #{basic_block_forward.1} parent=11 // pred_region
        _
      $region44: #{basic_block_forward.1} parent=11 // pred_fallthru
        _
      // Predicated region
      $region45: #{basic_block_forward.1} parent=11 // pred_check
        %p318 = pneg %p232
      $region46: #{basic_block_forward.1} parent=11 // pred_check_branch
        %320 = sbr.rel (%p318) target = $region48
      $region47: #{basic_block_forward.1} parent=11 // pred_region
        _
      $region48: #{basic_block_forward.1} parent=11 // pred_fallthru
        _
      // Predicated region
      $region49: #{basic_block_forward.1} parent=11 // pred_check
        %p321 = pneg %p253
      $region50: #{basic_block_forward.1} parent=11 // pred_check_branch
        %323 = sbr.rel (%p321) target = $region52
      $region51: #{basic_block_forward.1} parent=11 // pred_region
        _
      $region52: #{basic_block_forward.1} parent=11 // pred_fallthru
        _
    $region12: #{basic_block_forward.1} parent=5 // pred_fallthru
      _
    %p324 = scmp.lt.s32.totalorder %s17, 2
    // Predicated region
    $region53: #{basic_block_forward.1} parent=5 // pred_check
      %p325 = pneg %p324
    $region54: #{basic_block_forward.1} parent=5 // pred_check_branch
      %327 = sbr.rel (%p325) target = $region56
    $region55: #{basic_block_forward.1} parent=5 // pred_region
      // Predicated region
      $region57: #{basic_block_forward.1} parent=55 // pred_check
        %p328 = pneg %p37
      $region58: #{basic_block_forward.1} parent=55 // pred_check_branch
        %330 = sbr.rel (%p328) target = $region60
      $region59: #{basic_block_forward.1} parent=55 // pred_region
        %p331 = scmp.lt.s32.totalorder %s17, 1
        %s332 = scalar_select %p331, %s17, 1
        %s333 = smul.addr %s332, 32
        %s334 = smul.addr %s333, 8
        %s335 = scalar_lea.vmem %s0, %s334
      $region60: #{basic_block_forward.1} parent=55 // pred_fallthru
        _
    $region56: #{basic_block_forward.1} parent=5 // pred_fallthru
      _
    %p336 = scmp.le.s32.totalorder 1, %s17
    %p337 = scmp.lt.s32.totalorder %s17, 3
    %p338 = pnand %p336, %p337
    %p339 = pneg %p338
    // Predicated region
    $region61: #{basic_block_forward.1} parent=5 // pred_check
      _
    $region62: #{basic_block_forward.1} parent=5 // pred_check_branch
      %341 = sbr.rel (%p338) target = $region64
    $region63: #{basic_block_forward.1} parent=5 // pred_region
      %s342 = ssub.s32 %s17, 1
      %p343 = scmp.lt.s32.totalorder %s22, 1
      %s344 = scalar_select %p343, %s22, 1
      %s345 = smul.addr %s344, 32
      %s346 = smul.addr %s345, 8
      %s347 = scalar_lea.vmem %s0, %s346
      %p348 = pneg %p43
      %p349 = pneg %p40
      %p350 = pneg %p64
      %p351 = pneg %p61
      %p352 = pneg %p85
      %p353 = pneg %p82
      %p354 = pneg %p106
      %p355 = pneg %p103
      %p356 = pneg %p127
      %p357 = pneg %p124
      %p358 = pneg %p148
      %p359 = pneg %p145
      %p360 = pneg %p169
      %p361 = pneg %p166
      %p362 = pneg %p190
      %p363 = pneg %p187
      %p364 = pneg %p211
      %p365 = pneg %p208
      %p366 = pneg %p232
      %p367 = pneg %p229
      %p368 = pneg %p253
      %p369 = pneg %p250
      %p370 = pneg %p279
      %p371 = pneg %p276
      %p372 = scmp.lt.s32.totalorder %s22, 1
      %s373 = scalar_select %p372, %s22, 1
      %s374 = smul.addr %s373, 8
      %s375 = scalar_lea.vmem %s11, %s374
      %p376 = scmp.lt.s32.totalorder %s22, 1
      %s377 = scalar_select %p376, %s22, 1
      %s378 = smul.addr %s377, 32
      %s379 = smul.addr %s378, 8
      %s380 = scalar_lea.vmem %s0, %s379
      %p381 = scmp.lt.s32.totalorder %s22, 1
      %s382 = scalar_select %p381, %s22, 1
      %s383 = smul.addr %s382, 8
      %s384 = scalar_lea.vmem %s11, %s383
      %vm386 = vcmask 31744
      %387 = vst.msk [vmem:[#allocation2] sm:$0xff] %vm386, 0.0
      %388 = vst.msk [vmem:[#allocation2 + $0x8] sm:$0xff] %vm386, 0.0
      %vm389 = vcmask 25600
      %390 = vst.msk [vmem:[#allocation2 + $0x10] sm:$0x3] %vm389, 0.0
      %391 = vst.msk [vmem:[#allocation2 + $0x18] sm:$0xff] %vm386, 0.0
      %392 = vst.msk [vmem:[#allocation2 + $0x20] sm:$0xff] %vm386, 0.0
      %393 = vst.msk [vmem:[#allocation2 + $0x28] sm:$0x3] %vm389, 0.0
      %394 = vst.msk [vmem:[#allocation2 + $0x30] sm:$0xff] %vm386, 0.0
      %395 = vst.msk [vmem:[#allocation2 + $0x38] sm:$0xff] %vm386, 0.0
      %396 = vst.msk [vmem:[#allocation2 + $0x40] sm:$0x3] %vm389, 0.0
      %397 = vst.msk [vmem:[#allocation2 + $0x48] sm:$0xff] %vm386, 0.0
      %398 = vst.msk [vmem:[#allocation2 + $0x50] sm:$0xff] %vm386, 0.0
      %399 = vst.msk [vmem:[#allocation2 + $0x58] sm:$0x3] %vm389, 0.0
      %400 = vst.msk [vmem:[#allocation2 + $0x60] sm:$0xff] %vm386, 0.0
      %401 = vst.msk [vmem:[#allocation2 + $0x68] sm:$0xff] %vm386, 0.0
      %402 = vst.msk [vmem:[#allocation2 + $0x70] sm:$0x3] %vm389, 0.0
      %403 = vst.msk [vmem:[#allocation2 + $0x78] sm:$0xff] %vm386, 0.0
      %404 = vst.msk [vmem:[#allocation2 + $0x80] sm:$0xff] %vm386, 0.0
      %405 = vst.msk [vmem:[#allocation2 + $0x88] sm:$0x3] %vm389, 0.0
      %406 = vst.msk [vmem:[#allocation2 + $0x90] sm:$0xff] %vm386, 0.0
      %407 = vst.msk [vmem:[#allocation2 + $0x98] sm:$0xff] %vm386, 0.0
      %408 = vst.msk [vmem:[#allocation2 + $0xa0] sm:$0x3] %vm389, 0.0
      %409 = vst.msk [vmem:[#allocation2 + $0xa8] sm:$0xff] %vm386, 0.0
      %410 = vst.msk [vmem:[#allocation2 + $0xb0] sm:$0xff] %vm386, 0.0
      %411 = vst.msk [vmem:[#allocation2 + $0xb8] sm:$0x3] %vm389, 0.0
      %412 = vst.msk [vmem:[#allocation2 + $0xc0] sm:$0xff] %vm386, 0.0
      %413 = vst.msk [vmem:[#allocation2 + $0xc8] sm:$0xff] %vm386, 0.0
      %414 = vst.msk [vmem:[#allocation2 + $0xd0] sm:$0x3] %vm389, 0.0
      %415 = vst.msk [vmem:[#allocation2 + $0xd8] sm:$0xff] %vm386, 0.0
      %416 = vst.msk [vmem:[#allocation2 + $0xe0] sm:$0xff] %vm386, 0.0
      %417 = vst.msk [vmem:[#allocation2 + $0xe8] sm:$0x3] %vm389, 0.0
      %418 = vst.msk [vmem:[#allocation2 + $0xf0] sm:$0xff] %vm386, 0.0
      %419 = vst.msk [vmem:[#allocation2 + $0xf8] sm:$0xff] %vm386, 0.0
      %420 = vst.msk [vmem:[#allocation2 + $0x100] sm:$0x3] %vm389, 0.0
      %421 = vst.msk [vmem:[#allocation2 + $0x108] sm:$0xff] %vm386, 0.0
      %422 = vst.msk [vmem:[#allocation2 + $0x110] sm:$0xff] %vm386, 0.0
      %423 = vst.msk [vmem:[#allocation2 + $0x118] sm:$0x3] %vm389, 0.0
      %424 = vst.msk [vmem:[#allocation2 + $0x120] sm:$0xff] %vm386, 0.0
      %425 = vst.msk [vmem:[#allocation2 + $0x128] sm:$0xff] %vm386, 0.0
      %426 = vst.msk [vmem:[#allocation2 + $0x130] sm:$0x3] %vm389, 0.0
      %427 = vst.msk [vmem:[#allocation2 + $0x138] sm:$0xff] %vm386, 0.0
      %428 = vst.msk [vmem:[#allocation2 + $0x140] sm:$0xff] %vm386, 0.0
      %429 = vst.msk [vmem:[#allocation2 + $0x148] sm:$0x3] %vm389, 0.0
      %430 = vst.msk [vmem:[#allocation2 + $0x150] sm:$0xff] %vm386, 0.0
      %431 = vst.msk [vmem:[#allocation2 + $0x158] sm:$0xff] %vm386, 0.0
      %432 = vst.msk [vmem:[#allocation2 + $0x160] sm:$0x3] %vm389, 0.0
      %433 = vst.msk [vmem:[#allocation2 + $0x168] sm:$0xff] %vm386, 0.0
      %434 = vst.msk [vmem:[#allocation2 + $0x170] sm:$0xff] %vm386, 0.0
      %435 = vst.msk [vmem:[#allocation2 + $0x178] sm:$0x3] %vm389, 0.0
      %436 = vst.msk [vmem:[#allocation2 + $0x180] sm:$0xff] %vm386, 0.0
      %437 = vst.msk [vmem:[#allocation2 + $0x188] sm:$0xff] %vm386, 0.0
      %438 = vst.msk [vmem:[#allocation2 + $0x190] sm:$0x3] %vm389, 0.0
      %439 = vst.msk [vmem:[#allocation2 + $0x198] sm:$0xff] %vm386, 0.0
      %440 = vst.msk [vmem:[#allocation2 + $0x1a0] sm:$0xff] %vm386, 0.0
      %441 = vst.msk [vmem:[#allocation2 + $0x1a8] sm:$0x3] %vm389, 0.0
      %v442 = vld [vmem:[%s380] sm:$0xff]
      %v443 = vld [vmem:[%s380 + $0x8] sm:$0xff]
      %v444 = vld [vmem:[%s380 + $0x10] sm:$0xff]
      %v445 = vld [vmem:[%s380 + $0x18] sm:$0xff]
      %v446 = vld [vmem:[%s380 + $0x20] sm:$0xff]
      %v447 = vld [vmem:[%s380 + $0x28] sm:$0xff]
      %v448 = vld [vmem:[%s380 + $0x30] sm:$0xff]
      %v449 = vld [vmem:[%s380 + $0x38] sm:$0xff]
      %v450 = vld [vmem:[%s380 + $0x40] sm:$0xff]
      %v451 = vld [vmem:[%s380 + $0x48] sm:$0xff]
      %v452 = vld [vmem:[%s380 + $0x50] sm:$0xff]
      %v453 = vld [vmem:[%s380 + $0x58] sm:$0xff]
      %v454 = vld [vmem:[%s380 + $0x60] sm:$0xff]
      %v455 = vld [vmem:[%s380 + $0x68] sm:$0xff]
      %v456 = vld [vmem:[%s380 + $0x70] sm:$0xff]
      %v457 = vld [vmem:[%s380 + $0x78] sm:$0xff]
      %v458 = vld [vmem:[%s380 + $0x80] sm:$0xff]
      %v459 = vld [vmem:[%s380 + $0x88] sm:$0xff]
      %v460 = vld [vmem:[%s380 + $0x90] sm:$0xff]
      %v461 = vld [vmem:[%s380 + $0x98] sm:$0xff]
      %v462 = vld [vmem:[%s380 + $0xa0] sm:$0xff]
      %v463 = vld [vmem:[%s380 + $0xa8] sm:$0xff]
      %v464 = vld [vmem:[%s380 + $0xb0] sm:$0xff]
      %v465 = vld [vmem:[%s380 + $0xb8] sm:$0xff]
      %v466 = vld [vmem:[%s380 + $0xc0] sm:$0xff]
      %v467 = vld [vmem:[%s380 + $0xc8] sm:$0xff]
      %v468 = vld [vmem:[%s380 + $0xd0] sm:$0xff]
      %v469 = vld [vmem:[%s380 + $0xd8] sm:$0xff]
      %v470 = vld [vmem:[%s380 + $0xe0] sm:$0xff]
      %v471 = vld [vmem:[%s380 + $0xe8] sm:$0xff]
      %v472 = vld [vmem:[%s380 + $0xf0] sm:$0xff]
      %v473 = vld [vmem:[%s380 + $0xf8] sm:$0xff]
      %s474 = scalar_lea.vmem [#allocation2], 24
      %475 = vst.msk [vmem:[%s474 + $0x1] sm:$0xff] %vm386, %v442
      %476 = vst.msk [vmem:[%s474 + $0x9] sm:$0xff] %vm386, %v443
      %477 = vst.msk [vmem:[%s474 + $0x19] sm:$0xff] %vm386, %v444
      %478 = vst.msk [vmem:[%s474 + $0x21] sm:$0xff] %vm386, %v445
      %479 = vst.msk [vmem:[%s474 + $0x31] sm:$0xff] %vm386, %v446
      %480 = vst.msk [vmem:[%s474 + $0x39] sm:$0xff] %vm386, %v447
      %481 = vst.msk [vmem:[%s474 + $0x49] sm:$0xff] %vm386, %v448
      %482 = vst.msk [vmem:[%s474 + $0x51] sm:$0xff] %vm386, %v449
      %483 = vst.msk [vmem:[%s474 + $0x61] sm:$0xff] %vm386, %v450
      %484 = vst.msk [vmem:[%s474 + $0x69] sm:$0xff] %vm386, %v451
      %485 = vst.msk [vmem:[%s474 + $0x79] sm:$0xff] %vm386, %v452
      %486 = vst.msk [vmem:[%s474 + $0x81] sm:$0xff] %vm386, %v453
      %487 = vst.msk [vmem:[%s474 + $0x91] sm:$0xff] %vm386, %v454
      %488 = vst.msk [vmem:[%s474 + $0x99] sm:$0xff] %vm386, %v455
      %489 = vst.msk [vmem:[%s474 + $0xa9] sm:$0xff] %vm386, %v456
      %490 = vst.msk [vmem:[%s474 + $0xb1] sm:$0xff] %vm386, %v457
      %491 = vst.msk [vmem:[%s474 + $0xc1] sm:$0xff] %vm386, %v458
      %492 = vst.msk [vmem:[%s474 + $0xc9] sm:$0xff] %vm386, %v459
      %493 = vst.msk [vmem:[%s474 + $0xd9] sm:$0xff] %vm386, %v460
      %494 = vst.msk [vmem:[%s474 + $0xe1] sm:$0xff] %vm386, %v461
      %495 = vst.msk [vmem:[%s474 + $0xf1] sm:$0xff] %vm386, %v462
      %496 = vst.msk [vmem:[%s474 + $0xf9] sm:$0xff] %vm386, %v463
      %497 = vst.msk [vmem:[%s474 + $0x109] sm:$0xff] %vm386, %v464
      %498 = vst.msk [vmem:[%s474 + $0x111] sm:$0xff] %vm386, %v465
      %499 = vst.msk [vmem:[%s474 + $0x121] sm:$0xff] %vm386, %v466
      %500 = vst.msk [vmem:[%s474 + $0x129] sm:$0xff] %vm386, %v467
      %501 = vst.msk [vmem:[%s474 + $0x139] sm:$0xff] %vm386, %v468
      %502 = vst.msk [vmem:[%s474 + $0x141] sm:$0xff] %vm386, %v469
      %503 = vst.msk [vmem:[%s474 + $0x151] sm:$0xff] %vm386, %v470
      %504 = vst.msk [vmem:[%s474 + $0x159] sm:$0xff] %vm386, %v471
      %505 = vst.msk [vmem:[%s474 + $0x169] sm:$0xff] %vm386, %v472
      %506 = vst.msk [vmem:[%s474 + $0x171] sm:$0xff] %vm386, %v473
      %v507 = vld [vmem:[#allocation2] sm:$0xff]
      %v508 = vld [vmem:[#allocation2 + $0x8] sm:$0xff]
      %v509 = vld [vmem:[#allocation2 + $0x18] sm:$0xff]
      %v510 = vld [vmem:[#allocation2 + $0x20] sm:$0xff]
      %v511 = vld [vmem:[#allocation2 + $0x30] sm:$0xff]
      %v512 = vld [vmem:[#allocation2 + $0x38] sm:$0xff]
      %v513 = vld [vmem:[#allocation2 + $0x48] sm:$0xff]
      %v514 = vld [vmem:[#allocation2 + $0x50] sm:$0xff]
      %v515 = vld [vmem:[#allocation2 + $0x60] sm:$0xff]
      %v516 = vld [vmem:[#allocation2 + $0x68] sm:$0xff]
      %v517 = vld [vmem:[#allocation2 + $0x78] sm:$0xff]
      %v518 = vld [vmem:[#allocation2 + $0x80] sm:$0xff]
      %v519 = vld [vmem:[#allocation2 + $0x90] sm:$0xff]
      %v520 = vld [vmem:[#allocation2 + $0x98] sm:$0xff]
      %v521 = vld [vmem:[#allocation2 + $0xa8] sm:$0xff]
      %v522 = vld [vmem:[#allocation2 + $0xb0] sm:$0xff]
      %v523 = vld [vmem:[#allocation2 + $0xc0] sm:$0xff]
      %v524 = vld [vmem:[#allocation2 + $0xc8] sm:$0xff]
      %v525 = vld [vmem:[#allocation2 + $0xd8] sm:$0xff]
      %v526 = vld [vmem:[#allocation2 + $0xe0] sm:$0xff]
      %v527 = vld [vmem:[#allocation2 + $0xf0] sm:$0xff]
      %v528 = vld [vmem:[#allocation2 + $0xf8] sm:$0xff]
      %v529 = vld [vmem:[#allocation2 + $0x108] sm:$0xff]
      %v530 = vld [vmem:[#allocation2 + $0x110] sm:$0xff]
      %v531 = vld [vmem:[#allocation2 + $0x120] sm:$0xff]
      %v532 = vld [vmem:[#allocation2 + $0x128] sm:$0xff]
      %v533 = vld [vmem:[#allocation2 + $0x138] sm:$0xff]
      %v534 = vld [vmem:[#allocation2 + $0x140] sm:$0xff]
      %v535 = vld [vmem:[#allocation2 + $0x150] sm:$0xff]
      %v536 = vld [vmem:[#allocation2 + $0x158] sm:$0xff]
      %v537 = vld [vmem:[#allocation2 + $0x168] sm:$0xff]
      %v538 = vld [vmem:[#allocation2 + $0x170] sm:$0xff]
      %539 = vst.msk [vmem:[#allocation3] sm:$0xff] %vm386, %v507
      %540 = vst.msk [vmem:[#allocation3 + $0x8] sm:$0xff] %vm386, %v508
      %541 = vst.msk [vmem:[#allocation3 + $0x10] sm:$0xff] %vm386, %v509
      %542 = vst.msk [vmem:[#allocation3 + $0x18] sm:$0xff] %vm386, %v510
      %543 = vst.msk [vmem:[#allocation3 + $0x20] sm:$0xff] %vm386, %v511
      %544 = vst.msk [vmem:[#allocation3 + $0x28] sm:$0xff] %vm386, %v512
      %545 = vst.msk [vmem:[#allocation3 + $0x30] sm:$0xff] %vm386, %v513
      %546 = vst.msk [vmem:[#allocation3 + $0x38] sm:$0xff] %vm386, %v514
      %547 = vst.msk [vmem:[#allocation3 + $0x40] sm:$0xff] %vm386, %v515
      %548 = vst.msk [vmem:[#allocation3 + $0x48] sm:$0xff] %vm386, %v516
      %549 = vst.msk [vmem:[#allocation3 + $0x50] sm:$0xff] %vm386, %v517
      %550 = vst.msk [vmem:[#allocation3 + $0x58] sm:$0xff] %vm386, %v518
      %551 = vst.msk [vmem:[#allocation3 + $0x60] sm:$0xff] %vm386, %v519
      %552 = vst.msk [vmem:[#allocation3 + $0x68] sm:$0xff] %vm386, %v520
      %553 = vst.msk [vmem:[#allocation3 + $0x70] sm:$0xff] %vm386, %v521
      %554 = vst.msk [vmem:[#allocation3 + $0x78] sm:$0xff] %vm386, %v522
      %555 = vst.msk [vmem:[#allocation3 + $0x80] sm:$0xff] %vm386, %v523
      %556 = vst.msk [vmem:[#allocation3 + $0x88] sm:$0xff] %vm386, %v524
      %557 = vst.msk [vmem:[#allocation3 + $0x90] sm:$0xff] %vm386, %v525
      %558 = vst.msk [vmem:[#allocation3 + $0x98] sm:$0xff] %vm386, %v526
      %559 = vst.msk [vmem:[#allocation3 + $0xa0] sm:$0xff] %vm386, %v527
      %560 = vst.msk [vmem:[#allocation3 + $0xa8] sm:$0xff] %vm386, %v528
      %561 = vst.msk [vmem:[#allocation3 + $0xb0] sm:$0xff] %vm386, %v529
      %562 = vst.msk [vmem:[#allocation3 + $0xb8] sm:$0xff] %vm386, %v530
      %563 = vst.msk [vmem:[#allocation3 + $0xc0] sm:$0xff] %vm386, %v531
      %564 = vst.msk [vmem:[#allocation3 + $0xc8] sm:$0xff] %vm386, %v532
      %565 = vst.msk [vmem:[#allocation3 + $0xd0] sm:$0xff] %vm386, %v533
      %566 = vst.msk [vmem:[#allocation3 + $0xd8] sm:$0xff] %vm386, %v534
      %567 = vst.msk [vmem:[#allocation3 + $0xe0] sm:$0xff] %vm386, %v535
      %568 = vst.msk [vmem:[#allocation3 + $0xe8] sm:$0xff] %vm386, %v536
      %569 = vst.msk [vmem:[#allocation3 + $0xf0] sm:$0xff] %vm386, %v537
      %570 = vst.msk [vmem:[#allocation3 + $0xf8] sm:$0xff] %vm386, %v538
      %v571 = vld [vmem:[#allocation2 + $0x1] sm:$0xff]
      %v572 = vld [vmem:[#allocation2 + $0x9] sm:$0xff]
      %v573 = vld [vmem:[#allocation2 + $0x19] sm:$0xff]
      %v574 = vld [vmem:[#allocation2 + $0x21] sm:$0xff]
      %v575 = vld [vmem:[#allocation2 + $0x31] sm:$0xff]
      %v576 = vld [vmem:[#allocation2 + $0x39] sm:$0xff]
      %v577 = vld [vmem:[#allocation2 + $0x49] sm:$0xff]
      %v578 = vld [vmem:[#allocation2 + $0x51] sm:$0xff]
      %v579 = vld [vmem:[#allocation2 + $0x61] sm:$0xff]
      %v580 = vld [vmem:[#allocation2 + $0x69] sm:$0xff]
      %v581 = vld [vmem:[#allocation2 + $0x79] sm:$0xff]
      %v582 = vld [vmem:[#allocation2 + $0x81] sm:$0xff]
      %v583 = vld [vmem:[#allocation2 + $0x91] sm:$0xff]
      %v584 = vld [vmem:[#allocation2 + $0x99] sm:$0xff]
      %v585 = vld [vmem:[#allocation2 + $0xa9] sm:$0xff]
      %v586 = vld [vmem:[#allocation2 + $0xb1] sm:$0xff]
      %v587 = vld [vmem:[#allocation2 + $0xc1] sm:$0xff]
      %v588 = vld [vmem:[#allocation2 + $0xc9] sm:$0xff]
      %v589 = vld [vmem:[#allocation2 + $0xd9] sm:$0xff]
      %v590 = vld [vmem:[#allocation2 + $0xe1] sm:$0xff]
      %v591 = vld [vmem:[#allocation2 + $0xf1] sm:$0xff]
      %v592 = vld [vmem:[#allocation2 + $0xf9] sm:$0xff]
      %v593 = vld [vmem:[#allocation2 + $0x109] sm:$0xff]
      %v594 = vld [vmem:[#allocation2 + $0x111] sm:$0xff]
      %v595 = vld [vmem:[#allocation2 + $0x121] sm:$0xff]
      %v596 = vld [vmem:[#allocation2 + $0x129] sm:$0xff]
      %v597 = vld [vmem:[#allocation2 + $0x139] sm:$0xff]
      %v598 = vld [vmem:[#allocation2 + $0x141] sm:$0xff]
      %v599 = vld [vmem:[#allocation2 + $0x151] sm:$0xff]
      %v600 = vld [vmem:[#allocation2 + $0x159] sm:$0xff]
      %v601 = vld [vmem:[#allocation2 + $0x169] sm:$0xff]
      %v602 = vld [vmem:[#allocation2 + $0x171] sm:$0xff]
      %635 = vrot.lane.b32.xlu0 %v571, 4
      %v636 = vpop.permute.xlu0 %635
      %637 = vrot.lane.b32.xlu0 %v572, 4
      %v638 = vpop.permute.xlu0 %637
      %639 = vrot.lane.b32.xlu0 %v573, 4
      %v640 = vpop.permute.xlu0 %639
      %641 = vrot.lane.b32.xlu0 %v574, 4
      %v642 = vpop.permute.xlu0 %641
      %643 = vrot.lane.b32.xlu0 %v575, 4
      %v644 = vpop.permute.xlu0 %643
      %645 = vrot.lane.b32.xlu0 %v576, 4
      %v646 = vpop.permute.xlu0 %645
      %647 = vrot.lane.b32.xlu0 %v577, 4
      %v648 = vpop.permute.xlu0 %647
      %649 = vrot.lane.b32.xlu0 %v578, 4
      %v650 = vpop.permute.xlu0 %649
      %651 = vrot.lane.b32.xlu0 %v579, 4
      %v652 = vpop.permute.xlu0 %651
      %653 = vrot.lane.b32.xlu0 %v580, 4
      %v654 = vpop.permute.xlu0 %653
      %655 = vrot.lane.b32.xlu0 %v581, 4
      %v656 = vpop.permute.xlu0 %655
      %657 = vrot.lane.b32.xlu0 %v582, 4
      %v658 = vpop.permute.xlu0 %657
      %659 = vrot.lane.b32.xlu0 %v583, 4
      %v660 = vpop.permute.xlu0 %659
      %661 = vrot.lane.b32.xlu0 %v584, 4
      %v662 = vpop.permute.xlu0 %661
      %663 = vrot.lane.b32.xlu0 %v585, 4
      %v664 = vpop.permute.xlu0 %663
      %665 = vrot.lane.b32.xlu0 %v586, 4
      %v666 = vpop.permute.xlu0 %665
      %667 = vrot.lane.b32.xlu0 %v587, 4
      %v668 = vpop.permute.xlu0 %667
      %669 = vrot.lane.b32.xlu0 %v588, 4
      %v670 = vpop.permute.xlu0 %669
      %671 = vrot.lane.b32.xlu0 %v589, 4
      %v672 = vpop.permute.xlu0 %671
      %673 = vrot.lane.b32.xlu0 %v590, 4
      %v674 = vpop.permute.xlu0 %673
      %675 = vrot.lane.b32.xlu0 %v591, 4
      %v676 = vpop.permute.xlu0 %675
      %677 = vrot.lane.b32.xlu0 %v592, 4
      %v678 = vpop.permute.xlu0 %677
      %679 = vrot.lane.b32.xlu0 %v593, 4
      %v680 = vpop.permute.xlu0 %679
      %681 = vrot.lane.b32.xlu0 %v594, 4
      %v682 = vpop.permute.xlu0 %681
      %683 = vrot.lane.b32.xlu0 %v595, 4
      %v684 = vpop.permute.xlu0 %683
      %685 = vrot.lane.b32.xlu0 %v596, 4
      %v686 = vpop.permute.xlu0 %685
      %687 = vrot.lane.b32.xlu0 %v597, 4
      %v688 = vpop.permute.xlu0 %687
      %689 = vrot.lane.b32.xlu0 %v598, 4
      %v690 = vpop.permute.xlu0 %689
      %691 = vrot.lane.b32.xlu0 %v599, 4
      %v692 = vpop.permute.xlu0 %691
      %693 = vrot.lane.b32.xlu0 %v600, 4
      %v694 = vpop.permute.xlu0 %693
      %695 = vrot.lane.b32.xlu0 %v601, 4
      %v696 = vpop.permute.xlu0 %695
      %697 = vrot.lane.b32.xlu0 %v602, 4
      %v698 = vpop.permute.xlu0 %697
      %vm731 = vcmask 64544
      %732 = vst.msk [vmem:[#allocation3] sm:$0xff] %vm731, %v636
      %733 = vst.msk [vmem:[#allocation3 + $0x8] sm:$0xff] %vm731, %v638
      %734 = vst.msk [vmem:[#allocation3 + $0x10] sm:$0xff] %vm731, %v640
      %735 = vst.msk [vmem:[#allocation3 + $0x18] sm:$0xff] %vm731, %v642
      %736 = vst.msk [vmem:[#allocation3 + $0x20] sm:$0xff] %vm731, %v644
      %737 = vst.msk [vmem:[#allocation3 + $0x28] sm:$0xff] %vm731, %v646
      %738 = vst.msk [vmem:[#allocation3 + $0x30] sm:$0xff] %vm731, %v648
      %739 = vst.msk [vmem:[#allocation3 + $0x38] sm:$0xff] %vm731, %v650
      %740 = vst.msk [vmem:[#allocation3 + $0x40] sm:$0xff] %vm731, %v652
      %741 = vst.msk [vmem:[#allocation3 + $0x48] sm:$0xff] %vm731, %v654
      %742 = vst.msk [vmem:[#allocation3 + $0x50] sm:$0xff] %vm731, %v656
      %743 = vst.msk [vmem:[#allocation3 + $0x58] sm:$0xff] %vm731, %v658
      %744 = vst.msk [vmem:[#allocation3 + $0x60] sm:$0xff] %vm731, %v660
      %745 = vst.msk [vmem:[#allocation3 + $0x68] sm:$0xff] %vm731, %v662
      %746 = vst.msk [vmem:[#allocation3 + $0x70] sm:$0xff] %vm731, %v664
      %747 = vst.msk [vmem:[#allocation3 + $0x78] sm:$0xff] %vm731, %v666
      %748 = vst.msk [vmem:[#allocation3 + $0x80] sm:$0xff] %vm731, %v668
      %749 = vst.msk [vmem:[#allocation3 + $0x88] sm:$0xff] %vm731, %v670
      %750 = vst.msk [vmem:[#allocation3 + $0x90] sm:$0xff] %vm731, %v672
      %751 = vst.msk [vmem:[#allocation3 + $0x98] sm:$0xff] %vm731, %v674
      %752 = vst.msk [vmem:[#allocation3 + $0xa0] sm:$0xff] %vm731, %v676
      %753 = vst.msk [vmem:[#allocation3 + $0xa8] sm:$0xff] %vm731, %v678
      %754 = vst.msk [vmem:[#allocation3 + $0xb0] sm:$0xff] %vm731, %v680
      %755 = vst.msk [vmem:[#allocation3 + $0xb8] sm:$0xff] %vm731, %v682
      %756 = vst.msk [vmem:[#allocation3 + $0xc0] sm:$0xff] %vm731, %v684
      %757 = vst.msk [vmem:[#allocation3 + $0xc8] sm:$0xff] %vm731, %v686
      %758 = vst.msk [vmem:[#allocation3 + $0xd0] sm:$0xff] %vm731, %v688
      %759 = vst.msk [vmem:[#allocation3 + $0xd8] sm:$0xff] %vm731, %v690
      %760 = vst.msk [vmem:[#allocation3 + $0xe0] sm:$0xff] %vm731, %v692
      %761 = vst.msk [vmem:[#allocation3 + $0xe8] sm:$0xff] %vm731, %v694
      %762 = vst.msk [vmem:[#allocation3 + $0xf0] sm:$0xff] %vm731, %v696
      %763 = vst.msk [vmem:[#allocation3 + $0xf8] sm:$0xff] %vm731, %v698
      %v764 = vld [vmem:[#allocation2 + $0x2] sm:$0xff]
      %v765 = vld [vmem:[#allocation2 + $0xa] sm:$0xff]
      %v766 = vld [vmem:[#allocation2 + $0x1a] sm:$0xff]
      %v767 = vld [vmem:[#allocation2 + $0x22] sm:$0xff]
      %v768 = vld [vmem:[#allocation2 + $0x32] sm:$0xff]
      %v769 = vld [vmem:[#allocation2 + $0x3a] sm:$0xff]
      %v770 = vld [vmem:[#allocation2 + $0x4a] sm:$0xff]
      %v771 = vld [vmem:[#allocation2 + $0x52] sm:$0xff]
      %v772 = vld [vmem:[#allocation2 + $0x62] sm:$0xff]
      %v773 = vld [vmem:[#allocation2 + $0x6a] sm:$0xff]
      %v774 = vld [vmem:[#allocation2 + $0x7a] sm:$0xff]
      %v775 = vld [vmem:[#allocation2 + $0x82] sm:$0xff]
      %v776 = vld [vmem:[#allocation2 + $0x92] sm:$0xff]
      %v777 = vld [vmem:[#allocation2 + $0x9a] sm:$0xff]
      %v778 = vld [vmem:[#allocation2 + $0xaa] sm:$0xff]
      %v779 = vld [vmem:[#allocation2 + $0xb2] sm:$0xff]
      %v780 = vld [vmem:[#allocation2 + $0xc2] sm:$0xff]
      %v781 = vld [vmem:[#allocation2 + $0xca] sm:$0xff]
      %v782 = vld [vmem:[#allocation2 + $0xda] sm:$0xff]
      %v783 = vld [vmem:[#allocation2 + $0xe2] sm:$0xff]
      %v784 = vld [vmem:[#allocation2 + $0xf2] sm:$0xff]
      %v785 = vld [vmem:[#allocation2 + $0xfa] sm:$0xff]
      %v786 = vld [vmem:[#allocation2 + $0x10a] sm:$0xff]
      %v787 = vld [vmem:[#allocation2 + $0x112] sm:$0xff]
      %v788 = vld [vmem:[#allocation2 + $0x122] sm:$0xff]
      %v789 = vld [vmem:[#allocation2 + $0x12a] sm:$0xff]
      %v790 = vld [vmem:[#allocation2 + $0x13a] sm:$0xff]
      %v791 = vld [vmem:[#allocation2 + $0x142] sm:$0xff]
      %v792 = vld [vmem:[#allocation2 + $0x152] sm:$0xff]
      %v793 = vld [vmem:[#allocation2 + $0x15a] sm:$0xff]
      %v794 = vld [vmem:[#allocation2 + $0x16a] sm:$0xff]
      %v795 = vld [vmem:[#allocation2 + $0x172] sm:$0xff]
      %828 = vrot.lane.b32.xlu0 %v764, 8
      %v829 = vpop.permute.xlu0 %828
      %830 = vrot.lane.b32.xlu0 %v765, 8
      %v831 = vpop.permute.xlu0 %830
      %832 = vrot.lane.b32.xlu0 %v766, 8
      %v833 = vpop.permute.xlu0 %832
      %834 = vrot.lane.b32.xlu0 %v767, 8
      %v835 = vpop.permute.xlu0 %834
      %836 = vrot.lane.b32.xlu0 %v768, 8
      %v837 = vpop.permute.xlu0 %836
      %838 = vrot.lane.b32.xlu0 %v769, 8
      %v839 = vpop.permute.xlu0 %838
      %840 = vrot.lane.b32.xlu0 %v770, 8
      %v841 = vpop.permute.xlu0 %840
      %842 = vrot.lane.b32.xlu0 %v771, 8
      %v843 = vpop.permute.xlu0 %842
      %844 = vrot.lane.b32.xlu0 %v772, 8
      %v845 = vpop.permute.xlu0 %844
      %846 = vrot.lane.b32.xlu0 %v773, 8
      %v847 = vpop.permute.xlu0 %846
      %848 = vrot.lane.b32.xlu0 %v774, 8
      %v849 = vpop.permute.xlu0 %848
      %850 = vrot.lane.b32.xlu0 %v775, 8
      %v851 = vpop.permute.xlu0 %850
      %852 = vrot.lane.b32.xlu0 %v776, 8
      %v853 = vpop.permute.xlu0 %852
      %854 = vrot.lane.b32.xlu0 %v777, 8
      %v855 = vpop.permute.xlu0 %854
      %856 = vrot.lane.b32.xlu0 %v778, 8
      %v857 = vpop.permute.xlu0 %856
      %858 = vrot.lane.b32.xlu0 %v779, 8
      %v859 = vpop.permute.xlu0 %858
      %860 = vrot.lane.b32.xlu0 %v780, 8
      %v861 = vpop.permute.xlu0 %860
      %862 = vrot.lane.b32.xlu0 %v781, 8
      %v863 = vpop.permute.xlu0 %862
      %864 = vrot.lane.b32.xlu0 %v782, 8
      %v865 = vpop.permute.xlu0 %864
      %866 = vrot.lane.b32.xlu0 %v783, 8
      %v867 = vpop.permute.xlu0 %866
      %868 = vrot.lane.b32.xlu0 %v784, 8
      %v869 = vpop.permute.xlu0 %868
      %870 = vrot.lane.b32.xlu0 %v785, 8
      %v871 = vpop.permute.xlu0 %870
      %872 = vrot.lane.b32.xlu0 %v786, 8
      %v873 = vpop.permute.xlu0 %872
      %874 = vrot.lane.b32.xlu0 %v787, 8
      %v875 = vpop.permute.xlu0 %874
      %876 = vrot.lane.b32.xlu0 %v788, 8
      %v877 = vpop.permute.xlu0 %876
      %878 = vrot.lane.b32.xlu0 %v789, 8
      %v879 = vpop.permute.xlu0 %878
      %880 = vrot.lane.b32.xlu0 %v790, 8
      %v881 = vpop.permute.xlu0 %880
      %882 = vrot.lane.b32.xlu0 %v791, 8
      %v883 = vpop.permute.xlu0 %882
      %884 = vrot.lane.b32.xlu0 %v792, 8
      %v885 = vpop.permute.xlu0 %884
      %886 = vrot.lane.b32.xlu0 %v793, 8
      %v887 = vpop.permute.xlu0 %886
      %888 = vrot.lane.b32.xlu0 %v794, 8
      %v889 = vpop.permute.xlu0 %888
      %890 = vrot.lane.b32.xlu0 %v795, 8
      %v891 = vpop.permute.xlu0 %890
      %vm924 = vcmask 97344
      %925 = vst.msk [vmem:[#allocation3] sm:$0xff] %vm924, %v829
      %926 = vst.msk [vmem:[#allocation3 + $0x8] sm:$0xff] %vm924, %v831
      %927 = vst.msk [vmem:[#allocation3 + $0x10] sm:$0xff] %vm924, %v833
      %928 = vst.msk [vmem:[#allocation3 + $0x18] sm:$0xff] %vm924, %v835
      %929 = vst.msk [vmem:[#allocation3 + $0x20] sm:$0xff] %vm924, %v837
      %930 = vst.msk [vmem:[#allocation3 + $0x28] sm:$0xff] %vm924, %v839
      %931 = vst.msk [vmem:[#allocation3 + $0x30] sm:$0xff] %vm924, %v841
      %932 = vst.msk [vmem:[#allocation3 + $0x38] sm:$0xff] %vm924, %v843
      %933 = vst.msk [vmem:[#allocation3 + $0x40] sm:$0xff] %vm924, %v845
      %934 = vst.msk [vmem:[#allocation3 + $0x48] sm:$0xff] %vm924, %v847
      %935 = vst.msk [vmem:[#allocation3 + $0x50] sm:$0xff] %vm924, %v849
      %936 = vst.msk [vmem:[#allocation3 + $0x58] sm:$0xff] %vm924, %v851
      %937 = vst.msk [vmem:[#allocation3 + $0x60] sm:$0xff] %vm924, %v853
      %938 = vst.msk [vmem:[#allocation3 + $0x68] sm:$0xff] %vm924, %v855
      %939 = vst.msk [vmem:[#allocation3 + $0x70] sm:$0xff] %vm924, %v857
      %940 = vst.msk [vmem:[#allocation3 + $0x78] sm:$0xff] %vm924, %v859
      %941 = vst.msk [vmem:[#allocation3 + $0x80] sm:$0xff] %vm924, %v861
      %942 = vst.msk [vmem:[#allocation3 + $0x88] sm:$0xff] %vm924, %v863
      %943 = vst.msk [vmem:[#allocation3 + $0x90] sm:$0xff] %vm924, %v865
      %944 = vst.msk [vmem:[#allocation3 + $0x98] sm:$0xff] %vm924, %v867
      %945 = vst.msk [vmem:[#allocation3 + $0xa0] sm:$0xff] %vm924, %v869
      %946 = vst.msk [vmem:[#allocation3 + $0xa8] sm:$0xff] %vm924, %v871
      %947 = vst.msk [vmem:[#allocation3 + $0xb0] sm:$0xff] %vm924, %v873
      %948 = vst.msk [vmem:[#allocation3 + $0xb8] sm:$0xff] %vm924, %v875
      %949 = vst.msk [vmem:[#allocation3 + $0xc0] sm:$0xff] %vm924, %v877
      %950 = vst.msk [vmem:[#allocation3 + $0xc8] sm:$0xff] %vm924, %v879
      %951 = vst.msk [vmem:[#allocation3 + $0xd0] sm:$0xff] %vm924, %v881
      %952 = vst.msk [vmem:[#allocation3 + $0xd8] sm:$0xff] %vm924, %v883
      %953 = vst.msk [vmem:[#allocation3 + $0xe0] sm:$0xff] %vm924, %v885
      %954 = vst.msk [vmem:[#allocation3 + $0xe8] sm:$0xff] %vm924, %v887
      %955 = vst.msk [vmem:[#allocation3 + $0xf0] sm:$0xff] %vm924, %v889
      %956 = vst.msk [vmem:[#allocation3 + $0xf8] sm:$0xff] %vm924, %v891
      %v957 = vld [vmem:[%s474] sm:$0xff]
      %v958 = vld [vmem:[%s474 + $0x8] sm:$0xff]
      %v959 = vld [vmem:[%s474 + $0x18] sm:$0xff]
      %v960 = vld [vmem:[%s474 + $0x20] sm:$0xff]
      %v961 = vld [vmem:[%s474 + $0x30] sm:$0xff]
      %v962 = vld [vmem:[%s474 + $0x38] sm:$0xff]
      %v963 = vld [vmem:[%s474 + $0x48] sm:$0xff]
      %v964 = vld [vmem:[%s474 + $0x50] sm:$0xff]
      %v965 = vld [vmem:[%s474 + $0x60] sm:$0xff]
      %v966 = vld [vmem:[%s474 + $0x68] sm:$0xff]
      %v967 = vld [vmem:[%s474 + $0x78] sm:$0xff]
      %v968 = vld [vmem:[%s474 + $0x80] sm:$0xff]
      %v969 = vld [vmem:[%s474 + $0x90] sm:$0xff]
      %v970 = vld [vmem:[%s474 + $0x98] sm:$0xff]
      %v971 = vld [vmem:[%s474 + $0xa8] sm:$0xff]
      %v972 = vld [vmem:[%s474 + $0xb0] sm:$0xff]
      %v973 = vld [vmem:[%s474 + $0xc0] sm:$0xff]
      %v974 = vld [vmem:[%s474 + $0xc8] sm:$0xff]
      %v975 = vld [vmem:[%s474 + $0xd8] sm:$0xff]
      %v976 = vld [vmem:[%s474 + $0xe0] sm:$0xff]
      %v977 = vld [vmem:[%s474 + $0xf0] sm:$0xff]
      %v978 = vld [vmem:[%s474 + $0xf8] sm:$0xff]
      %v979 = vld [vmem:[%s474 + $0x108] sm:$0xff]
      %v980 = vld [vmem:[%s474 + $0x110] sm:$0xff]
      %v981 = vld [vmem:[%s474 + $0x120] sm:$0xff]
      %v982 = vld [vmem:[%s474 + $0x128] sm:$0xff]
      %v983 = vld [vmem:[%s474 + $0x138] sm:$0xff]
      %v984 = vld [vmem:[%s474 + $0x140] sm:$0xff]
      %v985 = vld [vmem:[%s474 + $0x150] sm:$0xff]
      %v986 = vld [vmem:[%s474 + $0x158] sm:$0xff]
      %v987 = vld [vmem:[%s474 + $0x168] sm:$0xff]
      %v988 = vld [vmem:[%s474 + $0x170] sm:$0xff]
      %1021 = vrot.lane.b32.xlu0 %v957, 12
      %v1022 = vpop.permute.xlu0 %1021
      %1023 = vrot.lane.b32.xlu0 %v958, 12
      %v1024 = vpop.permute.xlu0 %1023
      %1025 = vrot.lane.b32.xlu0 %v959, 12
      %v1026 = vpop.permute.xlu0 %1025
      %1027 = vrot.lane.b32.xlu0 %v960, 12
      %v1028 = vpop.permute.xlu0 %1027
      %1029 = vrot.lane.b32.xlu0 %v961, 12
      %v1030 = vpop.permute.xlu0 %1029
      %1031 = vrot.lane.b32.xlu0 %v962, 12
      %v1032 = vpop.permute.xlu0 %1031
      %1033 = vrot.lane.b32.xlu0 %v963, 12
      %v1034 = vpop.permute.xlu0 %1033
      %1035 = vrot.lane.b32.xlu0 %v964, 12
      %v1036 = vpop.permute.xlu0 %1035
      %1037 = vrot.lane.b32.xlu0 %v965, 12
      %v1038 = vpop.permute.xlu0 %1037
      %1039 = vrot.lane.b32.xlu0 %v966, 12
      %v1040 = vpop.permute.xlu0 %1039
      %1041 = vrot.lane.b32.xlu0 %v967, 12
      %v1042 = vpop.permute.xlu0 %1041
      %1043 = vrot.lane.b32.xlu0 %v968, 12
      %v1044 = vpop.permute.xlu0 %1043
      %1045 = vrot.lane.b32.xlu0 %v969, 12
      %v1046 = vpop.permute.xlu0 %1045
      %1047 = vrot.lane.b32.xlu0 %v970, 12
      %v1048 = vpop.permute.xlu0 %1047
      %1049 = vrot.lane.b32.xlu0 %v971, 12
      %v1050 = vpop.permute.xlu0 %1049
      %1051 = vrot.lane.b32.xlu0 %v972, 12
      %v1052 = vpop.permute.xlu0 %1051
      %1053 = vrot.lane.b32.xlu0 %v973, 12
      %v1054 = vpop.permute.xlu0 %1053
      %1055 = vrot.lane.b32.xlu0 %v974, 12
      %v1056 = vpop.permute.xlu0 %1055
      %1057 = vrot.lane.b32.xlu0 %v975, 12
      %v1058 = vpop.permute.xlu0 %1057
      %1059 = vrot.lane.b32.xlu0 %v976, 12
      %v1060 = vpop.permute.xlu0 %1059
      %1061 = vrot.lane.b32.xlu0 %v977, 12
      %v1062 = vpop.permute.xlu0 %1061
      %1063 = vrot.lane.b32.xlu0 %v978, 12
      %v1064 = vpop.permute.xlu0 %1063
      %1065 = vrot.lane.b32.xlu0 %v979, 12
      %v1066 = vpop.permute.xlu0 %1065
      %1067 = vrot.lane.b32.xlu0 %v980, 12
      %v1068 = vpop.permute.xlu0 %1067
      %1069 = vrot.lane.b32.xlu0 %v981, 12
      %v1070 = vpop.permute.xlu0 %1069
      %1071 = vrot.lane.b32.xlu0 %v982, 12
      %v1072 = vpop.permute.xlu0 %1071
      %1073 = vrot.lane.b32.xlu0 %v983, 12
      %v1074 = vpop.permute.xlu0 %1073
      %1075 = vrot.lane.b32.xlu0 %v984, 12
      %v1076 = vpop.permute.xlu0 %1075
      %1077 = vrot.lane.b32.xlu0 %v985, 12
      %v1078 = vpop.permute.xlu0 %1077
      %1079 = vrot.lane.b32.xlu0 %v986, 12
      %v1080 = vpop.permute.xlu0 %1079
      %1081 = vrot.lane.b32.xlu0 %v987, 12
      %v1082 = vpop.permute.xlu0 %1081
      %1083 = vrot.lane.b32.xlu0 %v988, 12
      %v1084 = vpop.permute.xlu0 %1083
      %vm1117 = vcmask 130144
      %1118 = vst.msk [vmem:[#allocation3] sm:$0xff] %vm1117, %v1022
      %1119 = vst.msk [vmem:[#allocation3 + $0x8] sm:$0xff] %vm1117, %v1024
      %1120 = vst.msk [vmem:[#allocation3 + $0x10] sm:$0xff] %vm1117, %v1026
      %1121 = vst.msk [vmem:[#allocation3 + $0x18] sm:$0xff] %vm1117, %v1028
      %1122 = vst.msk [vmem:[#allocation3 + $0x20] sm:$0xff] %vm1117, %v1030
      %1123 = vst.msk [vmem:[#allocation3 + $0x28] sm:$0xff] %vm1117, %v1032
      %1124 = vst.msk [vmem:[#allocation3 + $0x30] sm:$0xff] %vm1117, %v1034
      %1125 = vst.msk [vmem:[#allocation3 + $0x38] sm:$0xff] %vm1117, %v1036
      %1126 = vst.msk [vmem:[#allocation3 + $0x40] sm:$0xff] %vm1117, %v1038
      %1127 = vst.msk [vmem:[#allocation3 + $0x48] sm:$0xff] %vm1117, %v1040
      %1128 = vst.msk [vmem:[#allocation3 + $0x50] sm:$0xff] %vm1117, %v1042
      %1129 = vst.msk [vmem:[#allocation3 + $0x58] sm:$0xff] %vm1117, %v1044
      %1130 = vst.msk [vmem:[#allocation3 + $0x60] sm:$0xff] %vm1117, %v1046
      %1131 = vst.msk [vmem:[#allocation3 + $0x68] sm:$0xff] %vm1117, %v1048
      %1132 = vst.msk [vmem:[#allocation3 + $0x70] sm:$0xff] %vm1117, %v1050
      %1133 = vst.msk [vmem:[#allocation3 + $0x78] sm:$0xff] %vm1117, %v1052
      %1134 = vst.msk [vmem:[#allocation3 + $0x80] sm:$0xff] %vm1117, %v1054
      %1135 = vst.msk [vmem:[#allocation3 + $0x88] sm:$0xff] %vm1117, %v1056
      %1136 = vst.msk [vmem:[#allocation3 + $0x90] sm:$0xff] %vm1117, %v1058
      %1137 = vst.msk [vmem:[#allocation3 + $0x98] sm:$0xff] %vm1117, %v1060
      %1138 = vst.msk [vmem:[#allocation3 + $0xa0] sm:$0xff] %vm1117, %v1062
      %1139 = vst.msk [vmem:[#allocation3 + $0xa8] sm:$0xff] %vm1117, %v1064
      %1140 = vst.msk [vmem:[#allocation3 + $0xb0] sm:$0xff] %vm1117, %v1066
      %1141 = vst.msk [vmem:[#allocation3 + $0xb8] sm:$0xff] %vm1117, %v1068
      %1142 = vst.msk [vmem:[#allocation3 + $0xc0] sm:$0xff] %vm1117, %v1070
      %1143 = vst.msk [vmem:[#allocation3 + $0xc8] sm:$0xff] %vm1117, %v1072
      %1144 = vst.msk [vmem:[#allocation3 + $0xd0] sm:$0xff] %vm1117, %v1074
      %1145 = vst.msk [vmem:[#allocation3 + $0xd8] sm:$0xff] %vm1117, %v1076
      %1146 = vst.msk [vmem:[#allocation3 + $0xe0] sm:$0xff] %vm1117, %v1078
      %1147 = vst.msk [vmem:[#allocation3 + $0xe8] sm:$0xff] %vm1117, %v1080
      %1148 = vst.msk [vmem:[#allocation3 + $0xf0] sm:$0xff] %vm1117, %v1082
      %1149 = vst.msk [vmem:[#allocation3 + $0xf8] sm:$0xff] %vm1117, %v1084
      %v1150 = vld [vmem:[%s474 + $0x1] sm:$0xff]
      %v1151 = vld [vmem:[%s474 + $0x9] sm:$0xff]
      %v1152 = vld [vmem:[%s474 + $0x19] sm:$0xff]
      %v1153 = vld [vmem:[%s474 + $0x21] sm:$0xff]
      %v1154 = vld [vmem:[%s474 + $0x31] sm:$0xff]
      %v1155 = vld [vmem:[%s474 + $0x39] sm:$0xff]
      %v1156 = vld [vmem:[%s474 + $0x49] sm:$0xff]
      %v1157 = vld [vmem:[%s474 + $0x51] sm:$0xff]
      %v1158 = vld [vmem:[%s474 + $0x61] sm:$0xff]
      %v1159 = vld [vmem:[%s474 + $0x69] sm:$0xff]
      %v1160 = vld [vmem:[%s474 + $0x79] sm:$0xff]
      %v1161 = vld [vmem:[%s474 + $0x81] sm:$0xff]
      %v1162 = vld [vmem:[%s474 + $0x91] sm:$0xff]
      %v1163 = vld [vmem:[%s474 + $0x99] sm:$0xff]
      %v1164 = vld [vmem:[%s474 + $0xa9] sm:$0xff]
      %v1165 = vld [vmem:[%s474 + $0xb1] sm:$0xff]
      %v1166 = vld [vmem:[%s474 + $0xc1] sm:$0xff]
      %v1167 = vld [vmem:[%s474 + $0xc9] sm:$0xff]
      %v1168 = vld [vmem:[%s474 + $0xd9] sm:$0xff]
      %v1169 = vld [vmem:[%s474 + $0xe1] sm:$0xff]
      %v1170 = vld [vmem:[%s474 + $0xf1] sm:$0xff]
      %v1171 = vld [vmem:[%s474 + $0xf9] sm:$0xff]
      %v1172 = vld [vmem:[%s474 + $0x109] sm:$0xff]
      %v1173 = vld [vmem:[%s474 + $0x111] sm:$0xff]
      %v1174 = vld [vmem:[%s474 + $0x121] sm:$0xff]
      %v1175 = vld [vmem:[%s474 + $0x129] sm:$0xff]
      %v1176 = vld [vmem:[%s474 + $0x139] sm:$0xff]
      %v1177 = vld [vmem:[%s474 + $0x141] sm:$0xff]
      %v1178 = vld [vmem:[%s474 + $0x151] sm:$0xff]
      %v1179 = vld [vmem:[%s474 + $0x159] sm:$0xff]
      %v1180 = vld [vmem:[%s474 + $0x169] sm:$0xff]
      %v1181 = vld [vmem:[%s474 + $0x171] sm:$0xff]
      %1214 = vrot.lane.b32.xlu0 %v1150, 16
      %v1215 = vpop.permute.xlu0 %1214
      %1216 = vrot.lane.b32.xlu0 %v1151, 16
      %v1217 = vpop.permute.xlu0 %1216
      %1218 = vrot.lane.b32.xlu0 %v1152, 16
      %v1219 = vpop.permute.xlu0 %1218
      %1220 = vrot.lane.b32.xlu0 %v1153, 16
      %v1221 = vpop.permute.xlu0 %1220
      %1222 = vrot.lane.b32.xlu0 %v1154, 16
      %v1223 = vpop.permute.xlu0 %1222
      %1224 = vrot.lane.b32.xlu0 %v1155, 16
      %v1225 = vpop.permute.xlu0 %1224
      %1226 = vrot.lane.b32.xlu0 %v1156, 16
      %v1227 = vpop.permute.xlu0 %1226
      %1228 = vrot.lane.b32.xlu0 %v1157, 16
      %v1229 = vpop.permute.xlu0 %1228
      %1230 = vrot.lane.b32.xlu0 %v1158, 16
      %v1231 = vpop.permute.xlu0 %1230
      %1232 = vrot.lane.b32.xlu0 %v1159, 16
      %v1233 = vpop.permute.xlu0 %1232
      %1234 = vrot.lane.b32.xlu0 %v1160, 16
      %v1235 = vpop.permute.xlu0 %1234
      %1236 = vrot.lane.b32.xlu0 %v1161, 16
      %v1237 = vpop.permute.xlu0 %1236
      %1238 = vrot.lane.b32.xlu0 %v1162, 16
      %v1239 = vpop.permute.xlu0 %1238
      %1240 = vrot.lane.b32.xlu0 %v1163, 16
      %v1241 = vpop.permute.xlu0 %1240
      %1242 = vrot.lane.b32.xlu0 %v1164, 16
      %v1243 = vpop.permute.xlu0 %1242
      %1244 = vrot.lane.b32.xlu0 %v1165, 16
      %v1245 = vpop.permute.xlu0 %1244
      %1246 = vrot.lane.b32.xlu0 %v1166, 16
      %v1247 = vpop.permute.xlu0 %1246
      %1248 = vrot.lane.b32.xlu0 %v1167, 16
      %v1249 = vpop.permute.xlu0 %1248
      %1250 = vrot.lane.b32.xlu0 %v1168, 16
      %v1251 = vpop.permute.xlu0 %1250
      %1252 = vrot.lane.b32.xlu0 %v1169, 16
      %v1253 = vpop.permute.xlu0 %1252
      %1254 = vrot.lane.b32.xlu0 %v1170, 16
      %v1255 = vpop.permute.xlu0 %1254
      %1256 = vrot.lane.b32.xlu0 %v1171, 16
      %v1257 = vpop.permute.xlu0 %1256
      %1258 = vrot.lane.b32.xlu0 %v1172, 16
      %v1259 = vpop.permute.xlu0 %1258
      %1260 = vrot.lane.b32.xlu0 %v1173, 16
      %v1261 = vpop.permute.xlu0 %1260
      %1262 = vrot.lane.b32.xlu0 %v1174, 16
      %v1263 = vpop.permute.xlu0 %1262
      %1264 = vrot.lane.b32.xlu0 %v1175, 16
      %v1265 = vpop.permute.xlu0 %1264
      %1266 = vrot.lane.b32.xlu0 %v1176, 16
      %v1267 = vpop.permute.xlu0 %1266
      %1268 = vrot.lane.b32.xlu0 %v1177, 16
      %v1269 = vpop.permute.xlu0 %1268
      %1270 = vrot.lane.b32.xlu0 %v1178, 16
      %v1271 = vpop.permute.xlu0 %1270
      %1272 = vrot.lane.b32.xlu0 %v1179, 16
      %v1273 = vpop.permute.xlu0 %1272
      %1274 = vrot.lane.b32.xlu0 %v1180, 16
      %v1275 = vpop.permute.xlu0 %1274
      %1276 = vrot.lane.b32.xlu0 %v1181, 16
      %v1277 = vpop.permute.xlu0 %1276
      %vm1310 = vcmask 162944
      %1311 = vst.msk [vmem:[#allocation3] sm:$0xff] %vm1310, %v1215
      %1312 = vst.msk [vmem:[#allocation3 + $0x8] sm:$0xff] %vm1310, %v1217
      %1313 = vst.msk [vmem:[#allocation3 + $0x10] sm:$0xff] %vm1310, %v1219
      %1314 = vst.msk [vmem:[#allocation3 + $0x18] sm:$0xff] %vm1310, %v1221
      %1315 = vst.msk [vmem:[#allocation3 + $0x20] sm:$0xff] %vm1310, %v1223
      %1316 = vst.msk [vmem:[#allocation3 + $0x28] sm:$0xff] %vm1310, %v1225
      %1317 = vst.msk [vmem:[#allocation3 + $0x30] sm:$0xff] %vm1310, %v1227
      %1318 = vst.msk [vmem:[#allocation3 + $0x38] sm:$0xff] %vm1310, %v1229
      %1319 = vst.msk [vmem:[#allocation3 + $0x40] sm:$0xff] %vm1310, %v1231
      %1320 = vst.msk [vmem:[#allocation3 + $0x48] sm:$0xff] %vm1310, %v1233
      %1321 = vst.msk [vmem:[#allocation3 + $0x50] sm:$0xff] %vm1310, %v1235
      %1322 = vst.msk [vmem:[#allocation3 + $0x58] sm:$0xff] %vm1310, %v1237
      %1323 = vst.msk [vmem:[#allocation3 + $0x60] sm:$0xff] %vm1310, %v1239
      %1324 = vst.msk [vmem:[#allocation3 + $0x68] sm:$0xff] %vm1310, %v1241
      %1325 = vst.msk [vmem:[#allocation3 + $0x70] sm:$0xff] %vm1310, %v1243
      %1326 = vst.msk [vmem:[#allocation3 + $0x78] sm:$0xff] %vm1310, %v1245
      %1327 = vst.msk [vmem:[#allocation3 + $0x80] sm:$0xff] %vm1310, %v1247
      %1328 = vst.msk [vmem:[#allocation3 + $0x88] sm:$0xff] %vm1310, %v1249
      %1329 = vst.msk [vmem:[#allocation3 + $0x90] sm:$0xff] %vm1310, %v1251
      %1330 = vst.msk [vmem:[#allocation3 + $0x98] sm:$0xff] %vm1310, %v1253
      %1331 = vst.msk [vmem:[#allocation3 + $0xa0] sm:$0xff] %vm1310, %v1255
      %1332 = vst.msk [vmem:[#allocation3 + $0xa8] sm:$0xff] %vm1310, %v1257
      %1333 = vst.msk [vmem:[#allocation3 + $0xb0] sm:$0xff] %vm1310, %v1259
      %1334 = vst.msk [vmem:[#allocation3 + $0xb8] sm:$0xff] %vm1310, %v1261
      %1335 = vst.msk [vmem:[#allocation3 + $0xc0] sm:$0xff] %vm1310, %v1263
      %1336 = vst.msk [vmem:[#allocation3 + $0xc8] sm:$0xff] %vm1310, %v1265
      %1337 = vst.msk [vmem:[#allocation3 + $0xd0] sm:$0xff] %vm1310, %v1267
      %1338 = vst.msk [vmem:[#allocation3 + $0xd8] sm:$0xff] %vm1310, %v1269
      %1339 = vst.msk [vmem:[#allocation3 + $0xe0] sm:$0xff] %vm1310, %v1271
      %1340 = vst.msk [vmem:[#allocation3 + $0xe8] sm:$0xff] %vm1310, %v1273
      %1341 = vst.msk [vmem:[#allocation3 + $0xf0] sm:$0xff] %vm1310, %v1275
      %1342 = vst.msk [vmem:[#allocation3 + $0xf8] sm:$0xff] %vm1310, %v1277
      %v1343 = vld [vmem:[%s474 + $0x2] sm:$0xff]
      %v1344 = vld [vmem:[%s474 + $0xa] sm:$0xff]
      %v1345 = vld [vmem:[%s474 + $0x1a] sm:$0xff]
      %v1346 = vld [vmem:[%s474 + $0x22] sm:$0xff]
      %v1347 = vld [vmem:[%s474 + $0x32] sm:$0xff]
      %v1348 = vld [vmem:[%s474 + $0x3a] sm:$0xff]
      %v1349 = vld [vmem:[%s474 + $0x4a] sm:$0xff]
      %v1350 = vld [vmem:[%s474 + $0x52] sm:$0xff]
      %v1351 = vld [vmem:[%s474 + $0x62] sm:$0xff]
      %v1352 = vld [vmem:[%s474 + $0x6a] sm:$0xff]
      %v1353 = vld [vmem:[%s474 + $0x7a] sm:$0xff]
      %v1354 = vld [vmem:[%s474 + $0x82] sm:$0xff]
      %v1355 = vld [vmem:[%s474 + $0x92] sm:$0xff]
      %v1356 = vld [vmem:[%s474 + $0x9a] sm:$0xff]
      %v1357 = vld [vmem:[%s474 + $0xaa] sm:$0xff]
      %v1358 = vld [vmem:[%s474 + $0xb2] sm:$0xff]
      %v1359 = vld [vmem:[%s474 + $0xc2] sm:$0xff]
      %v1360 = vld [vmem:[%s474 + $0xca] sm:$0xff]
      %v1361 = vld [vmem:[%s474 + $0xda] sm:$0xff]
      %v1362 = vld [vmem:[%s474 + $0xe2] sm:$0xff]
      %v1363 = vld [vmem:[%s474 + $0xf2] sm:$0xff]
      %v1364 = vld [vmem:[%s474 + $0xfa] sm:$0xff]
      %v1365 = vld [vmem:[%s474 + $0x10a] sm:$0xff]
      %v1366 = vld [vmem:[%s474 + $0x112] sm:$0xff]
      %v1367 = vld [vmem:[%s474 + $0x122] sm:$0xff]
      %v1368 = vld [vmem:[%s474 + $0x12a] sm:$0xff]
      %v1369 = vld [vmem:[%s474 + $0x13a] sm:$0xff]
      %v1370 = vld [vmem:[%s474 + $0x142] sm:$0xff]
      %v1371 = vld [vmem:[%s474 + $0x152] sm:$0xff]
      %v1372 = vld [vmem:[%s474 + $0x15a] sm:$0xff]
      %v1373 = vld [vmem:[%s474 + $0x16a] sm:$0xff]
      %v1374 = vld [vmem:[%s474 + $0x172] sm:$0xff]
      %1407 = vrot.lane.b32.xlu0 %v1343, 20
      %v1408 = vpop.permute.xlu0 %1407
      %1409 = vrot.lane.b32.xlu0 %v1344, 20
      %v1410 = vpop.permute.xlu0 %1409
      %1411 = vrot.lane.b32.xlu0 %v1345, 20
      %v1412 = vpop.permute.xlu0 %1411
      %1413 = vrot.lane.b32.xlu0 %v1346, 20
      %v1414 = vpop.permute.xlu0 %1413
      %1415 = vrot.lane.b32.xlu0 %v1347, 20
      %v1416 = vpop.permute.xlu0 %1415
      %1417 = vrot.lane.b32.xlu0 %v1348, 20
      %v1418 = vpop.permute.xlu0 %1417
      %1419 = vrot.lane.b32.xlu0 %v1349, 20
      %v1420 = vpop.permute.xlu0 %1419
      %1421 = vrot.lane.b32.xlu0 %v1350, 20
      %v1422 = vpop.permute.xlu0 %1421
      %1423 = vrot.lane.b32.xlu0 %v1351, 20
      %v1424 = vpop.permute.xlu0 %1423
      %1425 = vrot.lane.b32.xlu0 %v1352, 20
      %v1426 = vpop.permute.xlu0 %1425
      %1427 = vrot.lane.b32.xlu0 %v1353, 20
      %v1428 = vpop.permute.xlu0 %1427
      %1429 = vrot.lane.b32.xlu0 %v1354, 20
      %v1430 = vpop.permute.xlu0 %1429
      %1431 = vrot.lane.b32.xlu0 %v1355, 20
      %v1432 = vpop.permute.xlu0 %1431
      %1433 = vrot.lane.b32.xlu0 %v1356, 20
      %v1434 = vpop.permute.xlu0 %1433
      %1435 = vrot.lane.b32.xlu0 %v1357, 20
      %v1436 = vpop.permute.xlu0 %1435
      %1437 = vrot.lane.b32.xlu0 %v1358, 20
      %v1438 = vpop.permute.xlu0 %1437
      %1439 = vrot.lane.b32.xlu0 %v1359, 20
      %v1440 = vpop.permute.xlu0 %1439
      %1441 = vrot.lane.b32.xlu0 %v1360, 20
      %v1442 = vpop.permute.xlu0 %1441
      %1443 = vrot.lane.b32.xlu0 %v1361, 20
      %v1444 = vpop.permute.xlu0 %1443
      %1445 = vrot.lane.b32.xlu0 %v1362, 20
      %v1446 = vpop.permute.xlu0 %1445
      %1447 = vrot.lane.b32.xlu0 %v1363, 20
      %v1448 = vpop.permute.xlu0 %1447
      %1449 = vrot.lane.b32.xlu0 %v1364, 20
      %v1450 = vpop.permute.xlu0 %1449
      %1451 = vrot.lane.b32.xlu0 %v1365, 20
      %v1452 = vpop.permute.xlu0 %1451
      %1453 = vrot.lane.b32.xlu0 %v1366, 20
      %v1454 = vpop.permute.xlu0 %1453
      %1455 = vrot.lane.b32.xlu0 %v1367, 20
      %v1456 = vpop.permute.xlu0 %1455
      %1457 = vrot.lane.b32.xlu0 %v1368, 20
      %v1458 = vpop.permute.xlu0 %1457
      %1459 = vrot.lane.b32.xlu0 %v1369, 20
      %v1460 = vpop.permute.xlu0 %1459
      %1461 = vrot.lane.b32.xlu0 %v1370, 20
      %v1462 = vpop.permute.xlu0 %1461
      %1463 = vrot.lane.b32.xlu0 %v1371, 20
      %v1464 = vpop.permute.xlu0 %1463
      %1465 = vrot.lane.b32.xlu0 %v1372, 20
      %v1466 = vpop.permute.xlu0 %1465
      %1467 = vrot.lane.b32.xlu0 %v1373, 20
      %v1468 = vpop.permute.xlu0 %1467
      %1469 = vrot.lane.b32.xlu0 %v1374, 20
      %v1470 = vpop.permute.xlu0 %1469
      %vm1503 = vcmask 195744
      %1504 = vst.msk [vmem:[#allocation3] sm:$0xff] %vm1503, %v1408
      %1505 = vst.msk [vmem:[#allocation3 + $0x8] sm:$0xff] %vm1503, %v1410
      %1506 = vst.msk [vmem:[#allocation3 + $0x10] sm:$0xff] %vm1503, %v1412
      %1507 = vst.msk [vmem:[#allocation3 + $0x18] sm:$0xff] %vm1503, %v1414
      %1508 = vst.msk [vmem:[#allocation3 + $0x20] sm:$0xff] %vm1503, %v1416
      %1509 = vst.msk [vmem:[#allocation3 + $0x28] sm:$0xff] %vm1503, %v1418
      %1510 = vst.msk [vmem:[#allocation3 + $0x30] sm:$0xff] %vm1503, %v1420
      %1511 = vst.msk [vmem:[#allocation3 + $0x38] sm:$0xff] %vm1503, %v1422
      %1512 = vst.msk [vmem:[#allocation3 + $0x40] sm:$0xff] %vm1503, %v1424
      %1513 = vst.msk [vmem:[#allocation3 + $0x48] sm:$0xff] %vm1503, %v1426
      %1514 = vst.msk [vmem:[#allocation3 + $0x50] sm:$0xff] %vm1503, %v1428
      %1515 = vst.msk [vmem:[#allocation3 + $0x58] sm:$0xff] %vm1503, %v1430
      %1516 = vst.msk [vmem:[#allocation3 + $0x60] sm:$0xff] %vm1503, %v1432
      %1517 = vst.msk [vmem:[#allocation3 + $0x68] sm:$0xff] %vm1503, %v1434
      %1518 = vst.msk [vmem:[#allocation3 + $0x70] sm:$0xff] %vm1503, %v1436
      %1519 = vst.msk [vmem:[#allocation3 + $0x78] sm:$0xff] %vm1503, %v1438
      %1520 = vst.msk [vmem:[#allocation3 + $0x80] sm:$0xff] %vm1503, %v1440
      %1521 = vst.msk [vmem:[#allocation3 + $0x88] sm:$0xff] %vm1503, %v1442
      %1522 = vst.msk [vmem:[#allocation3 + $0x90] sm:$0xff] %vm1503, %v1444
      %1523 = vst.msk [vmem:[#allocation3 + $0x98] sm:$0xff] %vm1503, %v1446
      %1524 = vst.msk [vmem:[#allocation3 + $0xa0] sm:$0xff] %vm1503, %v1448
      %1525 = vst.msk [vmem:[#allocation3 + $0xa8] sm:$0xff] %vm1503, %v1450
      %1526 = vst.msk [vmem:[#allocation3 + $0xb0] sm:$0xff] %vm1503, %v1452
      %1527 = vst.msk [vmem:[#allocation3 + $0xb8] sm:$0xff] %vm1503, %v1454
      %1528 = vst.msk [vmem:[#allocation3 + $0xc0] sm:$0xff] %vm1503, %v1456
      %1529 = vst.msk [vmem:[#allocation3 + $0xc8] sm:$0xff] %vm1503, %v1458
      %1530 = vst.msk [vmem:[#allocation3 + $0xd0] sm:$0xff] %vm1503, %v1460
      %1531 = vst.msk [vmem:[#allocation3 + $0xd8] sm:$0xff] %vm1503, %v1462
      %1532 = vst.msk [vmem:[#allocation3 + $0xe0] sm:$0xff] %vm1503, %v1464
      %1533 = vst.msk [vmem:[#allocation3 + $0xe8] sm:$0xff] %vm1503, %v1466
      %1534 = vst.msk [vmem:[#allocation3 + $0xf0] sm:$0xff] %vm1503, %v1468
      %1535 = vst.msk [vmem:[#allocation3 + $0xf8] sm:$0xff] %vm1503, %v1470
      %s1536 = scalar_lea.vmem [#allocation2], 48
      %v1537 = vld [vmem:[%s1536] sm:$0xff]
      %v1538 = vld [vmem:[%s1536 + $0x8] sm:$0xff]
      %v1539 = vld [vmem:[%s1536 + $0x18] sm:$0xff]
      %v1540 = vld [vmem:[%s1536 + $0x20] sm:$0xff]
      %v1541 = vld [vmem:[%s1536 + $0x30] sm:$0xff]
      %v1542 = vld [vmem:[%s1536 + $0x38] sm:$0xff]
      %v1543 = vld [vmem:[%s1536 + $0x48] sm:$0xff]
      %v1544 = vld [vmem:[%s1536 + $0x50] sm:$0xff]
      %v1545 = vld [vmem:[%s1536 + $0x60] sm:$0xff]
      %v1546 = vld [vmem:[%s1536 + $0x68] sm:$0xff]
      %v1547 = vld [vmem:[%s1536 + $0x78] sm:$0xff]
      %v1548 = vld [vmem:[%s1536 + $0x80] sm:$0xff]
      %v1549 = vld [vmem:[%s1536 + $0x90] sm:$0xff]
      %v1550 = vld [vmem:[%s1536 + $0x98] sm:$0xff]
      %v1551 = vld [vmem:[%s1536 + $0xa8] sm:$0xff]
      %v1552 = vld [vmem:[%s1536 + $0xb0] sm:$0xff]
      %v1553 = vld [vmem:[%s1536 + $0xc0] sm:$0xff]
      %v1554 = vld [vmem:[%s1536 + $0xc8] sm:$0xff]
      %v1555 = vld [vmem:[%s1536 + $0xd8] sm:$0xff]
      %v1556 = vld [vmem:[%s1536 + $0xe0] sm:$0xff]
      %v1557 = vld [vmem:[%s1536 + $0xf0] sm:$0xff]
      %v1558 = vld [vmem:[%s1536 + $0xf8] sm:$0xff]
      %v1559 = vld [vmem:[%s1536 + $0x108] sm:$0xff]
      %v1560 = vld [vmem:[%s1536 + $0x110] sm:$0xff]
      %v1561 = vld [vmem:[%s1536 + $0x120] sm:$0xff]
      %v1562 = vld [vmem:[%s1536 + $0x128] sm:$0xff]
      %v1563 = vld [vmem:[%s1536 + $0x138] sm:$0xff]
      %v1564 = vld [vmem:[%s1536 + $0x140] sm:$0xff]
      %v1565 = vld [vmem:[%s1536 + $0x150] sm:$0xff]
      %v1566 = vld [vmem:[%s1536 + $0x158] sm:$0xff]
      %v1567 = vld [vmem:[%s1536 + $0x168] sm:$0xff]
      %v1568 = vld [vmem:[%s1536 + $0x170] sm:$0xff]
      %1601 = vrot.lane.b32.xlu0 %v1537, 24
      %v1602 = vpop.permute.xlu0 %1601
      %1603 = vrot.lane.b32.xlu0 %v1538, 24
      %v1604 = vpop.permute.xlu0 %1603
      %1605 = vrot.lane.b32.xlu0 %v1539, 24
      %v1606 = vpop.permute.xlu0 %1605
      %1607 = vrot.lane.b32.xlu0 %v1540, 24
      %v1608 = vpop.permute.xlu0 %1607
      %1609 = vrot.lane.b32.xlu0 %v1541, 24
      %v1610 = vpop.permute.xlu0 %1609
      %1611 = vrot.lane.b32.xlu0 %v1542, 24
      %v1612 = vpop.permute.xlu0 %1611
      %1613 = vrot.lane.b32.xlu0 %v1543, 24
      %v1614 = vpop.permute.xlu0 %1613
      %1615 = vrot.lane.b32.xlu0 %v1544, 24
      %v1616 = vpop.permute.xlu0 %1615
      %1617 = vrot.lane.b32.xlu0 %v1545, 24
      %v1618 = vpop.permute.xlu0 %1617
      %1619 = vrot.lane.b32.xlu0 %v1546, 24
      %v1620 = vpop.permute.xlu0 %1619
      %1621 = vrot.lane.b32.xlu0 %v1547, 24
      %v1622 = vpop.permute.xlu0 %1621
      %1623 = vrot.lane.b32.xlu0 %v1548, 24
      %v1624 = vpop.permute.xlu0 %1623
      %1625 = vrot.lane.b32.xlu0 %v1549, 24
      %v1626 = vpop.permute.xlu0 %1625
      %1627 = vrot.lane.b32.xlu0 %v1550, 24
      %v1628 = vpop.permute.xlu0 %1627
      %1629 = vrot.lane.b32.xlu0 %v1551, 24
      %v1630 = vpop.permute.xlu0 %1629
      %1631 = vrot.lane.b32.xlu0 %v1552, 24
      %v1632 = vpop.permute.xlu0 %1631
      %1633 = vrot.lane.b32.xlu0 %v1553, 24
      %v1634 = vpop.permute.xlu0 %1633
      %1635 = vrot.lane.b32.xlu0 %v1554, 24
      %v1636 = vpop.permute.xlu0 %1635
      %1637 = vrot.lane.b32.xlu0 %v1555, 24
      %v1638 = vpop.permute.xlu0 %1637
      %1639 = vrot.lane.b32.xlu0 %v1556, 24
      %v1640 = vpop.permute.xlu0 %1639
      %1641 = vrot.lane.b32.xlu0 %v1557, 24
      %v1642 = vpop.permute.xlu0 %1641
      %1643 = vrot.lane.b32.xlu0 %v1558, 24
      %v1644 = vpop.permute.xlu0 %1643
      %1645 = vrot.lane.b32.xlu0 %v1559, 24
      %v1646 = vpop.permute.xlu0 %1645
      %1647 = vrot.lane.b32.xlu0 %v1560, 24
      %v1648 = vpop.permute.xlu0 %1647
      %1649 = vrot.lane.b32.xlu0 %v1561, 24
      %v1650 = vpop.permute.xlu0 %1649
      %1651 = vrot.lane.b32.xlu0 %v1562, 24
      %v1652 = vpop.permute.xlu0 %1651
      %1653 = vrot.lane.b32.xlu0 %v1563, 24
      %v1654 = vpop.permute.xlu0 %1653
      %1655 = vrot.lane.b32.xlu0 %v1564, 24
      %v1656 = vpop.permute.xlu0 %1655
      %1657 = vrot.lane.b32.xlu0 %v1565, 24
      %v1658 = vpop.permute.xlu0 %1657
      %1659 = vrot.lane.b32.xlu0 %v1566, 24
      %v1660 = vpop.permute.xlu0 %1659
      %1661 = vrot.lane.b32.xlu0 %v1567, 24
      %v1662 = vpop.permute.xlu0 %1661
      %1663 = vrot.lane.b32.xlu0 %v1568, 24
      %v1664 = vpop.permute.xlu0 %1663
      %vm1697 = vcmask 228544
      %1698 = vst.msk [vmem:[#allocation3] sm:$0xff] %vm1697, %v1602
      %1699 = vst.msk [vmem:[#allocation3 + $0x8] sm:$0xff] %vm1697, %v1604
      %1700 = vst.msk [vmem:[#allocation3 + $0x10] sm:$0xff] %vm1697, %v1606
      %1701 = vst.msk [vmem:[#allocation3 + $0x18] sm:$0xff] %vm1697, %v1608
      %1702 = vst.msk [vmem:[#allocation3 + $0x20] sm:$0xff] %vm1697, %v1610
      %1703 = vst.msk [vmem:[#allocation3 + $0x28] sm:$0xff] %vm1697, %v1612
      %1704 = vst.msk [vmem:[#allocation3 + $0x30] sm:$0xff] %vm1697, %v1614
      %1705 = vst.msk [vmem:[#allocation3 + $0x38] sm:$0xff] %vm1697, %v1616
      %1706 = vst.msk [vmem:[#allocation3 + $0x40] sm:$0xff] %vm1697, %v1618
      %1707 = vst.msk [vmem:[#allocation3 + $0x48] sm:$0xff] %vm1697, %v1620
      %1708 = vst.msk [vmem:[#allocation3 + $0x50] sm:$0xff] %vm1697, %v1622
      %1709 = vst.msk [vmem:[#allocation3 + $0x58] sm:$0xff] %vm1697, %v1624
      %1710 = vst.msk [vmem:[#allocation3 + $0x60] sm:$0xff] %vm1697, %v1626
      %1711 = vst.msk [vmem:[#allocation3 + $0x68] sm:$0xff] %vm1697, %v1628
      %1712 = vst.msk [vmem:[#allocation3 + $0x70] sm:$0xff] %vm1697, %v1630
      %1713 = vst.msk [vmem:[#allocation3 + $0x78] sm:$0xff] %vm1697, %v1632
      %1714 = vst.msk [vmem:[#allocation3 + $0x80] sm:$0xff] %vm1697, %v1634
      %1715 = vst.msk [vmem:[#allocation3 + $0x88] sm:$0xff] %vm1697, %v1636
      %1716 = vst.msk [vmem:[#allocation3 + $0x90] sm:$0xff] %vm1697, %v1638
      %1717 = vst.msk [vmem:[#allocation3 + $0x98] sm:$0xff] %vm1697, %v1640
      %1718 = vst.msk [vmem:[#allocation3 + $0xa0] sm:$0xff] %vm1697, %v1642
      %1719 = vst.msk [vmem:[#allocation3 + $0xa8] sm:$0xff] %vm1697, %v1644
      %1720 = vst.msk [vmem:[#allocation3 + $0xb0] sm:$0xff] %vm1697, %v1646
      %1721 = vst.msk [vmem:[#allocation3 + $0xb8] sm:$0xff] %vm1697, %v1648
      %1722 = vst.msk [vmem:[#allocation3 + $0xc0] sm:$0xff] %vm1697, %v1650
      %1723 = vst.msk [vmem:[#allocation3 + $0xc8] sm:$0xff] %vm1697, %v1652
      %1724 = vst.msk [vmem:[#allocation3 + $0xd0] sm:$0xff] %vm1697, %v1654
      %1725 = vst.msk [vmem:[#allocation3 + $0xd8] sm:$0xff] %vm1697, %v1656
      %1726 = vst.msk [vmem:[#allocation3 + $0xe0] sm:$0xff] %vm1697, %v1658
      %1727 = vst.msk [vmem:[#allocation3 + $0xe8] sm:$0xff] %vm1697, %v1660
      %1728 = vst.msk [vmem:[#allocation3 + $0xf0] sm:$0xff] %vm1697, %v1662
      %1729 = vst.msk [vmem:[#allocation3 + $0xf8] sm:$0xff] %vm1697, %v1664
      %v1730 = vld [vmem:[%s1536 + $0x1] sm:$0xff]
      %v1731 = vld [vmem:[%s1536 + $0x9] sm:$0xff]
      %v1732 = vld [vmem:[%s1536 + $0x19] sm:$0xff]
      %v1733 = vld [vmem:[%s1536 + $0x21] sm:$0xff]
      %v1734 = vld [vmem:[%s1536 + $0x31] sm:$0xff]
      %v1735 = vld [vmem:[%s1536 + $0x39] sm:$0xff]
      %v1736 = vld [vmem:[%s1536 + $0x49] sm:$0xff]
      %v1737 = vld [vmem:[%s1536 + $0x51] sm:$0xff]
      %v1738 = vld [vmem:[%s1536 + $0x61] sm:$0xff]
      %v1739 = vld [vmem:[%s1536 + $0x69] sm:$0xff]
      %v1740 = vld [vmem:[%s1536 + $0x79] sm:$0xff]
      %v1741 = vld [vmem:[%s1536 + $0x81] sm:$0xff]
      %v1742 = vld [vmem:[%s1536 + $0x91] sm:$0xff]
      %v1743 = vld [vmem:[%s1536 + $0x99] sm:$0xff]
      %v1744 = vld [vmem:[%s1536 + $0xa9] sm:$0xff]
      %v1745 = vld [vmem:[%s1536 + $0xb1] sm:$0xff]
      %v1746 = vld [vmem:[%s1536 + $0xc1] sm:$0xff]
      %v1747 = vld [vmem:[%s1536 + $0xc9] sm:$0xff]
      %v1748 = vld [vmem:[%s1536 + $0xd9] sm:$0xff]
      %v1749 = vld [vmem:[%s1536 + $0xe1] sm:$0xff]
      %v1750 = vld [vmem:[%s1536 + $0xf1] sm:$0xff]
      %v1751 = vld [vmem:[%s1536 + $0xf9] sm:$0xff]
      %v1752 = vld [vmem:[%s1536 + $0x109] sm:$0xff]
      %v1753 = vld [vmem:[%s1536 + $0x111] sm:$0xff]
      %v1754 = vld [vmem:[%s1536 + $0x121] sm:$0xff]
      %v1755 = vld [vmem:[%s1536 + $0x129] sm:$0xff]
      %v1756 = vld [vmem:[%s1536 + $0x139] sm:$0xff]
      %v1757 = vld [vmem:[%s1536 + $0x141] sm:$0xff]
      %v1758 = vld [vmem:[%s1536 + $0x151] sm:$0xff]
      %v1759 = vld [vmem:[%s1536 + $0x159] sm:$0xff]
      %v1760 = vld [vmem:[%s1536 + $0x169] sm:$0xff]
      %v1761 = vld [vmem:[%s1536 + $0x171] sm:$0xff]
      %1794 = vrot.lane.b32.xlu0 %v1730, 28
      %v1795 = vpop.permute.xlu0 %1794
      %1796 = vrot.lane.b32.xlu0 %v1731, 28
      %v1797 = vpop.permute.xlu0 %1796
      %1798 = vrot.lane.b32.xlu0 %v1732, 28
      %v1799 = vpop.permute.xlu0 %1798
      %1800 = vrot.lane.b32.xlu0 %v1733, 28
      %v1801 = vpop.permute.xlu0 %1800
      %1802 = vrot.lane.b32.xlu0 %v1734, 28
      %v1803 = vpop.permute.xlu0 %1802
      %1804 = vrot.lane.b32.xlu0 %v1735, 28
      %v1805 = vpop.permute.xlu0 %1804
      %1806 = vrot.lane.b32.xlu0 %v1736, 28
      %v1807 = vpop.permute.xlu0 %1806
      %1808 = vrot.lane.b32.xlu0 %v1737, 28
      %v1809 = vpop.permute.xlu0 %1808
      %1810 = vrot.lane.b32.xlu0 %v1738, 28
      %v1811 = vpop.permute.xlu0 %1810
      %1812 = vrot.lane.b32.xlu0 %v1739, 28
      %v1813 = vpop.permute.xlu0 %1812
      %1814 = vrot.lane.b32.xlu0 %v1740, 28
      %v1815 = vpop.permute.xlu0 %1814
      %1816 = vrot.lane.b32.xlu0 %v1741, 28
      %v1817 = vpop.permute.xlu0 %1816
      %1818 = vrot.lane.b32.xlu0 %v1742, 28
      %v1819 = vpop.permute.xlu0 %1818
      %1820 = vrot.lane.b32.xlu0 %v1743, 28
      %v1821 = vpop.permute.xlu0 %1820
      %1822 = vrot.lane.b32.xlu0 %v1744, 28
      %v1823 = vpop.permute.xlu0 %1822
      %1824 = vrot.lane.b32.xlu0 %v1745, 28
      %v1825 = vpop.permute.xlu0 %1824
      %1826 = vrot.lane.b32.xlu0 %v1746, 28
      %v1827 = vpop.permute.xlu0 %1826
      %1828 = vrot.lane.b32.xlu0 %v1747, 28
      %v1829 = vpop.permute.xlu0 %1828
      %1830 = vrot.lane.b32.xlu0 %v1748, 28
      %v1831 = vpop.permute.xlu0 %1830
      %1832 = vrot.lane.b32.xlu0 %v1749, 28
      %v1833 = vpop.permute.xlu0 %1832
      %1834 = vrot.lane.b32.xlu0 %v1750, 28
      %v1835 = vpop.permute.xlu0 %1834
      %1836 = vrot.lane.b32.xlu0 %v1751, 28
      %v1837 = vpop.permute.xlu0 %1836
      %1838 = vrot.lane.b32.xlu0 %v1752, 28
      %v1839 = vpop.permute.xlu0 %1838
      %1840 = vrot.lane.b32.xlu0 %v1753, 28
      %v1841 = vpop.permute.xlu0 %1840
      %1842 = vrot.lane.b32.xlu0 %v1754, 28
      %v1843 = vpop.permute.xlu0 %1842
      %1844 = vrot.lane.b32.xlu0 %v1755, 28
      %v1845 = vpop.permute.xlu0 %1844
      %1846 = vrot.lane.b32.xlu0 %v1756, 28
      %v1847 = vpop.permute.xlu0 %1846
      %1848 = vrot.lane.b32.xlu0 %v1757, 28
      %v1849 = vpop.permute.xlu0 %1848
      %1850 = vrot.lane.b32.xlu0 %v1758, 28
      %v1851 = vpop.permute.xlu0 %1850
      %1852 = vrot.lane.b32.xlu0 %v1759, 28
      %v1853 = vpop.permute.xlu0 %1852
      %1854 = vrot.lane.b32.xlu0 %v1760, 28
      %v1855 = vpop.permute.xlu0 %1854
      %1856 = vrot.lane.b32.xlu0 %v1761, 28
      %v1857 = vpop.permute.xlu0 %1856
      %vm1890 = vcmask 261344
      %1891 = vst.msk [vmem:[#allocation3] sm:$0xff] %vm1890, %v1795
      %1892 = vst.msk [vmem:[#allocation3 + $0x8] sm:$0xff] %vm1890, %v1797
      %1893 = vst.msk [vmem:[#allocation3 + $0x10] sm:$0xff] %vm1890, %v1799
      %1894 = vst.msk [vmem:[#allocation3 + $0x18] sm:$0xff] %vm1890, %v1801
      %1895 = vst.msk [vmem:[#allocation3 + $0x20] sm:$0xff] %vm1890, %v1803
      %1896 = vst.msk [vmem:[#allocation3 + $0x28] sm:$0xff] %vm1890, %v1805
      %1897 = vst.msk [vmem:[#allocation3 + $0x30] sm:$0xff] %vm1890, %v1807
      %1898 = vst.msk [vmem:[#allocation3 + $0x38] sm:$0xff] %vm1890, %v1809
      %1899 = vst.msk [vmem:[#allocation3 + $0x40] sm:$0xff] %vm1890, %v1811
      %1900 = vst.msk [vmem:[#allocation3 + $0x48] sm:$0xff] %vm1890, %v1813
      %1901 = vst.msk [vmem:[#allocation3 + $0x50] sm:$0xff] %vm1890, %v1815
      %1902 = vst.msk [vmem:[#allocation3 + $0x58] sm:$0xff] %vm1890, %v1817
      %1903 = vst.msk [vmem:[#allocation3 + $0x60] sm:$0xff] %vm1890, %v1819
      %1904 = vst.msk [vmem:[#allocation3 + $0x68] sm:$0xff] %vm1890, %v1821
      %1905 = vst.msk [vmem:[#allocation3 + $0x70] sm:$0xff] %vm1890, %v1823
      %1906 = vst.msk [vmem:[#allocation3 + $0x78] sm:$0xff] %vm1890, %v1825
      %1907 = vst.msk [vmem:[#allocation3 + $0x80] sm:$0xff] %vm1890, %v1827
      %1908 = vst.msk [vmem:[#allocation3 + $0x88] sm:$0xff] %vm1890, %v1829
      %1909 = vst.msk [vmem:[#allocation3 + $0x90] sm:$0xff] %vm1890, %v1831
      %1910 = vst.msk [vmem:[#allocation3 + $0x98] sm:$0xff] %vm1890, %v1833
      %1911 = vst.msk [vmem:[#allocation3 + $0xa0] sm:$0xff] %vm1890, %v1835
      %1912 = vst.msk [vmem:[#allocation3 + $0xa8] sm:$0xff] %vm1890, %v1837
      %1913 = vst.msk [vmem:[#allocation3 + $0xb0] sm:$0xff] %vm1890, %v1839
      %1914 = vst.msk [vmem:[#allocation3 + $0xb8] sm:$0xff] %vm1890, %v1841
      %1915 = vst.msk [vmem:[#allocation3 + $0xc0] sm:$0xff] %vm1890, %v1843
      %1916 = vst.msk [vmem:[#allocation3 + $0xc8] sm:$0xff] %vm1890, %v1845
      %1917 = vst.msk [vmem:[#allocation3 + $0xd0] sm:$0xff] %vm1890, %v1847
      %1918 = vst.msk [vmem:[#allocation3 + $0xd8] sm:$0xff] %vm1890, %v1849
      %1919 = vst.msk [vmem:[#allocation3 + $0xe0] sm:$0xff] %vm1890, %v1851
      %1920 = vst.msk [vmem:[#allocation3 + $0xe8] sm:$0xff] %vm1890, %v1853
      %1921 = vst.msk [vmem:[#allocation3 + $0xf0] sm:$0xff] %vm1890, %v1855
      %1922 = vst.msk [vmem:[#allocation3 + $0xf8] sm:$0xff] %vm1890, %v1857
      %v1923 = vld [vmem:[%s1536 + $0x2] sm:$0xff]
      %v1924 = vld [vmem:[%s1536 + $0xa] sm:$0xff]
      %v1925 = vld [vmem:[%s1536 + $0x1a] sm:$0xff]
      %v1926 = vld [vmem:[%s1536 + $0x22] sm:$0xff]
      %v1927 = vld [vmem:[%s1536 + $0x32] sm:$0xff]
      %v1928 = vld [vmem:[%s1536 + $0x3a] sm:$0xff]
      %v1929 = vld [vmem:[%s1536 + $0x4a] sm:$0xff]
      %v1930 = vld [vmem:[%s1536 + $0x52] sm:$0xff]
      %v1931 = vld [vmem:[%s1536 + $0x62] sm:$0xff]
      %v1932 = vld [vmem:[%s1536 + $0x6a] sm:$0xff]
      %v1933 = vld [vmem:[%s1536 + $0x7a] sm:$0xff]
      %v1934 = vld [vmem:[%s1536 + $0x82] sm:$0xff]
      %v1935 = vld [vmem:[%s1536 + $0x92] sm:$0xff]
      %v1936 = vld [vmem:[%s1536 + $0x9a] sm:$0xff]
      %v1937 = vld [vmem:[%s1536 + $0xaa] sm:$0xff]
      %v1938 = vld [vmem:[%s1536 + $0xb2] sm:$0xff]
      %v1939 = vld [vmem:[%s1536 + $0xc2] sm:$0xff]
      %v1940 = vld [vmem:[%s1536 + $0xca] sm:$0xff]
      %v1941 = vld [vmem:[%s1536 + $0xda] sm:$0xff]
      %v1942 = vld [vmem:[%s1536 + $0xe2] sm:$0xff]
      %v1943 = vld [vmem:[%s1536 + $0xf2] sm:$0xff]
      %v1944 = vld [vmem:[%s1536 + $0xfa] sm:$0xff]
      %v1945 = vld [vmem:[%s1536 + $0x10a] sm:$0xff]
      %v1946 = vld [vmem:[%s1536 + $0x112] sm:$0xff]
      %v1947 = vld [vmem:[%s1536 + $0x122] sm:$0xff]
      %v1948 = vld [vmem:[%s1536 + $0x12a] sm:$0xff]
      %v1949 = vld [vmem:[%s1536 + $0x13a] sm:$0xff]
      %v1950 = vld [vmem:[%s1536 + $0x142] sm:$0xff]
      %v1951 = vld [vmem:[%s1536 + $0x152] sm:$0xff]
      %v1952 = vld [vmem:[%s1536 + $0x15a] sm:$0xff]
      %v1953 = vld [vmem:[%s1536 + $0x16a] sm:$0xff]
      %v1954 = vld [vmem:[%s1536 + $0x172] sm:$0xff]
      %1987 = vrot.lane.b32.xlu0 %v1923, 32
      %v1988 = vpop.permute.xlu0 %1987
      %1989 = vrot.lane.b32.xlu0 %v1924, 32
      %v1990 = vpop.permute.xlu0 %1989
      %1991 = vrot.lane.b32.xlu0 %v1925, 32
      %v1992 = vpop.permute.xlu0 %1991
      %1993 = vrot.lane.b32.xlu0 %v1926, 32
      %v1994 = vpop.permute.xlu0 %1993
      %1995 = vrot.lane.b32.xlu0 %v1927, 32
      %v1996 = vpop.permute.xlu0 %1995
      %1997 = vrot.lane.b32.xlu0 %v1928, 32
      %v1998 = vpop.permute.xlu0 %1997
      %1999 = vrot.lane.b32.xlu0 %v1929, 32
      %v2000 = vpop.permute.xlu0 %1999
      %2001 = vrot.lane.b32.xlu0 %v1930, 32
      %v2002 = vpop.permute.xlu0 %2001
      %2003 = vrot.lane.b32.xlu0 %v1931, 32
      %v2004 = vpop.permute.xlu0 %2003
      %2005 = vrot.lane.b32.xlu0 %v1932, 32
      %v2006 = vpop.permute.xlu0 %2005
      %2007 = vrot.lane.b32.xlu0 %v1933, 32
      %v2008 = vpop.permute.xlu0 %2007
      %2009 = vrot.lane.b32.xlu0 %v1934, 32
      %v2010 = vpop.permute.xlu0 %2009
      %2011 = vrot.lane.b32.xlu0 %v1935, 32
      %v2012 = vpop.permute.xlu0 %2011
      %2013 = vrot.lane.b32.xlu0 %v1936, 32
      %v2014 = vpop.permute.xlu0 %2013
      %2015 = vrot.lane.b32.xlu0 %v1937, 32
      %v2016 = vpop.permute.xlu0 %2015
      %2017 = vrot.lane.b32.xlu0 %v1938, 32
      %v2018 = vpop.permute.xlu0 %2017
      %2019 = vrot.lane.b32.xlu0 %v1939, 32
      %v2020 = vpop.permute.xlu0 %2019
      %2021 = vrot.lane.b32.xlu0 %v1940, 32
      %v2022 = vpop.permute.xlu0 %2021
      %2023 = vrot.lane.b32.xlu0 %v1941, 32
      %v2024 = vpop.permute.xlu0 %2023
      %2025 = vrot.lane.b32.xlu0 %v1942, 32
      %v2026 = vpop.permute.xlu0 %2025
      %2027 = vrot.lane.b32.xlu0 %v1943, 32
      %v2028 = vpop.permute.xlu0 %2027
      %2029 = vrot.lane.b32.xlu0 %v1944, 32
      %v2030 = vpop.permute.xlu0 %2029
      %2031 = vrot.lane.b32.xlu0 %v1945, 32
      %v2032 = vpop.permute.xlu0 %2031
      %2033 = vrot.lane.b32.xlu0 %v1946, 32
      %v2034 = vpop.permute.xlu0 %2033
      %2035 = vrot.lane.b32.xlu0 %v1947, 32
      %v2036 = vpop.permute.xlu0 %2035
      %2037 = vrot.lane.b32.xlu0 %v1948, 32
      %v2038 = vpop.permute.xlu0 %2037
      %2039 = vrot.lane.b32.xlu0 %v1949, 32
      %v2040 = vpop.permute.xlu0 %2039
      %2041 = vrot.lane.b32.xlu0 %v1950, 32
      %v2042 = vpop.permute.xlu0 %2041
      %2043 = vrot.lane.b32.xlu0 %v1951, 32
      %v2044 = vpop.permute.xlu0 %2043
      %2045 = vrot.lane.b32.xlu0 %v1952, 32
      %v2046 = vpop.permute.xlu0 %2045
      %2047 = vrot.lane.b32.xlu0 %v1953, 32
      %v2048 = vpop.permute.xlu0 %2047
      %2049 = vrot.lane.b32.xlu0 %v1954, 32
      %v2050 = vpop.permute.xlu0 %2049
      %vm2083 = vcmask 294144
      %2084 = vst.msk [vmem:[#allocation3] sm:$0xff] %vm2083, %v1988
      %2085 = vst.msk [vmem:[#allocation3 + $0x8] sm:$0xff] %vm2083, %v1990
      %2086 = vst.msk [vmem:[#allocation3 + $0x10] sm:$0xff] %vm2083, %v1992
      %2087 = vst.msk [vmem:[#allocation3 + $0x18] sm:$0xff] %vm2083, %v1994
      %2088 = vst.msk [vmem:[#allocation3 + $0x20] sm:$0xff] %vm2083, %v1996
      %2089 = vst.msk [vmem:[#allocation3 + $0x28] sm:$0xff] %vm2083, %v1998
      %2090 = vst.msk [vmem:[#allocation3 + $0x30] sm:$0xff] %vm2083, %v2000
      %2091 = vst.msk [vmem:[#allocation3 + $0x38] sm:$0xff] %vm2083, %v2002
      %2092 = vst.msk [vmem:[#allocation3 + $0x40] sm:$0xff] %vm2083, %v2004
      %2093 = vst.msk [vmem:[#allocation3 + $0x48] sm:$0xff] %vm2083, %v2006
      %2094 = vst.msk [vmem:[#allocation3 + $0x50] sm:$0xff] %vm2083, %v2008
      %2095 = vst.msk [vmem:[#allocation3 + $0x58] sm:$0xff] %vm2083, %v2010
      %2096 = vst.msk [vmem:[#allocation3 + $0x60] sm:$0xff] %vm2083, %v2012
      %2097 = vst.msk [vmem:[#allocation3 + $0x68] sm:$0xff] %vm2083, %v2014
      %2098 = vst.msk [vmem:[#allocation3 + $0x70] sm:$0xff] %vm2083, %v2016
      %2099 = vst.msk [vmem:[#allocation3 + $0x78] sm:$0xff] %vm2083, %v2018
      %2100 = vst.msk [vmem:[#allocation3 + $0x80] sm:$0xff] %vm2083, %v2020
      %2101 = vst.msk [vmem:[#allocation3 + $0x88] sm:$0xff] %vm2083, %v2022
      %2102 = vst.msk [vmem:[#allocation3 + $0x90] sm:$0xff] %vm2083, %v2024
      %2103 = vst.msk [vmem:[#allocation3 + $0x98] sm:$0xff] %vm2083, %v2026
      %2104 = vst.msk [vmem:[#allocation3 + $0xa0] sm:$0xff] %vm2083, %v2028
      %2105 = vst.msk [vmem:[#allocation3 + $0xa8] sm:$0xff] %vm2083, %v2030
      %2106 = vst.msk [vmem:[#allocation3 + $0xb0] sm:$0xff] %vm2083, %v2032
      %2107 = vst.msk [vmem:[#allocation3 + $0xb8] sm:$0xff] %vm2083, %v2034
      %2108 = vst.msk [vmem:[#allocation3 + $0xc0] sm:$0xff] %vm2083, %v2036
      %2109 = vst.msk [vmem:[#allocation3 + $0xc8] sm:$0xff] %vm2083, %v2038
      %2110 = vst.msk [vmem:[#allocation3 + $0xd0] sm:$0xff] %vm2083, %v2040
      %2111 = vst.msk [vmem:[#allocation3 + $0xd8] sm:$0xff] %vm2083, %v2042
      %2112 = vst.msk [vmem:[#allocation3 + $0xe0] sm:$0xff] %vm2083, %v2044
      %2113 = vst.msk [vmem:[#allocation3 + $0xe8] sm:$0xff] %vm2083, %v2046
      %2114 = vst.msk [vmem:[#allocation3 + $0xf0] sm:$0xff] %vm2083, %v2048
      %2115 = vst.msk [vmem:[#allocation3 + $0xf8] sm:$0xff] %vm2083, %v2050
      %v2116 = vld [vmem:[#allocation3] sm:$0xff]
      %v2117 = vld [vmem:[#allocation3 + $0x8] sm:$0xff]
      %v2118 = vld [vmem:[#allocation3 + $0x10] sm:$0xff]
      %v2119 = vld [vmem:[#allocation3 + $0x18] sm:$0xff]
      %v2120 = vld [vmem:[#allocation3 + $0x20] sm:$0xff]
      %v2121 = vld [vmem:[#allocation3 + $0x28] sm:$0xff]
      %v2122 = vld [vmem:[#allocation3 + $0x30] sm:$0xff]
      %v2123 = vld [vmem:[#allocation3 + $0x38] sm:$0xff]
      %v2124 = vld [vmem:[#allocation3 + $0x40] sm:$0xff]
      %v2125 = vld [vmem:[#allocation3 + $0x48] sm:$0xff]
      %v2126 = vld [vmem:[#allocation3 + $0x50] sm:$0xff]
      %v2127 = vld [vmem:[#allocation3 + $0x58] sm:$0xff]
      %v2128 = vld [vmem:[#allocation3 + $0x60] sm:$0xff]
      %v2129 = vld [vmem:[#allocation3 + $0x68] sm:$0xff]
      %v2130 = vld [vmem:[#allocation3 + $0x70] sm:$0xff]
      %v2131 = vld [vmem:[#allocation3 + $0x78] sm:$0xff]
      %v2132 = vld [vmem:[#allocation3 + $0x80] sm:$0xff]
      %v2133 = vld [vmem:[#allocation3 + $0x88] sm:$0xff]
      %v2134 = vld [vmem:[#allocation3 + $0x90] sm:$0xff]
      %v2135 = vld [vmem:[#allocation3 + $0x98] sm:$0xff]
      %v2136 = vld [vmem:[#allocation3 + $0xa0] sm:$0xff]
      %v2137 = vld [vmem:[#allocation3 + $0xa8] sm:$0xff]
      %v2138 = vld [vmem:[#allocation3 + $0xb0] sm:$0xff]
      %v2139 = vld [vmem:[#allocation3 + $0xb8] sm:$0xff]
      %v2140 = vld [vmem:[#allocation3 + $0xc0] sm:$0xff]
      %v2141 = vld [vmem:[#allocation3 + $0xc8] sm:$0xff]
      %v2142 = vld [vmem:[#allocation3 + $0xd0] sm:$0xff]
      %v2143 = vld [vmem:[#allocation3 + $0xd8] sm:$0xff]
      %v2144 = vld [vmem:[#allocation3 + $0xe0] sm:$0xff]
      %v2145 = vld [vmem:[#allocation3 + $0xe8] sm:$0xff]
      %v2146 = vld [vmem:[#allocation3 + $0xf0] sm:$0xff]
      %v2147 = vld [vmem:[#allocation3 + $0xf8] sm:$0xff]
      %v2148 = vpack.c.bf16 %v2117, %v2116
      %v2149 = vpack.c.bf16 %v2119, %v2118
      %v2150 = vpack.c.bf16 %v2121, %v2120
      %v2151 = vpack.c.bf16 %v2123, %v2122
      %v2152 = vpack.c.bf16 %v2125, %v2124
      %v2153 = vpack.c.bf16 %v2127, %v2126
      %v2154 = vpack.c.bf16 %v2129, %v2128
      %v2155 = vpack.c.bf16 %v2131, %v2130
      %v2156 = vpack.c.bf16 %v2133, %v2132
      %v2157 = vpack.c.bf16 %v2135, %v2134
      %v2158 = vpack.c.bf16 %v2137, %v2136
      %v2159 = vpack.c.bf16 %v2139, %v2138
      %v2160 = vpack.c.bf16 %v2141, %v2140
      %v2161 = vpack.c.bf16 %v2143, %v2142
      %v2162 = vpack.c.bf16 %v2145, %v2144
      %v2163 = vpack.c.bf16 %v2147, %v2146
      %v2164 = vld [vmem:[%s7] sm:$0xff]
      %v2165 = vld [vmem:[%s7 + $0x8] sm:$0xff]
      %v2166 = vld [vmem:[%s7 + $0x10] sm:$0xff]
      %v2167 = vld [vmem:[%s7 + $0x18] sm:$0xff]
      %v2168 = vld [vmem:[%s7 + $0x20] sm:$0xff]
      %v2169 = vld [vmem:[%s7 + $0x28] sm:$0xff]
      %v2170 = vld [vmem:[%s7 + $0x30] sm:$0xff]
      %v2171 = vld [vmem:[%s7 + $0x38] sm:$0xff]
      %v2180 = vunpack.c.l.b16 %v2164
      %v2181 = vunpack.c.h.b16 %v2164
      %v2182 = vunpack.c.l.b16 %v2165
      %v2183 = vunpack.c.h.b16 %v2165
      %v2184 = vunpack.c.l.b16 %v2166
      %v2185 = vunpack.c.h.b16 %v2166
      %v2186 = vunpack.c.l.b16 %v2167
      %v2187 = vunpack.c.h.b16 %v2167
      %v2188 = vunpack.c.l.b16 %v2168
      %v2189 = vunpack.c.h.b16 %v2168
      %v2190 = vunpack.c.l.b16 %v2169
      %v2191 = vunpack.c.h.b16 %v2169
      %v2192 = vunpack.c.l.b16 %v2170
      %v2193 = vunpack.c.h.b16 %v2170
      %v2194 = vunpack.c.l.b16 %v2171
      %v2195 = vunpack.c.h.b16 %v2171
      %v2196 = vpack.c.b16 %v2182, %v2180
      %v2197 = vpack.c.b16 %v2183, %v2181
      %v2198 = vpack.c.b16 %v2186, %v2184
      %v2199 = vpack.c.b16 %v2187, %v2185
      %v2200 = vpack.c.b16 %v2190, %v2188
      %v2201 = vpack.c.b16 %v2191, %v2189
      %v2202 = vpack.c.b16 %v2194, %v2192
      %v2203 = vpack.c.b16 %v2195, %v2193
      %2212 = vmatprep.subr.bf16.mxu0 0
      %2213 = vmatpush1.bf16.msra.mxu0 %v2148
      %2214 = vmatprep.subr.bf16.mxu0 0
      %2215 = vmatpush1.bf16.msra.mxu0 %v2149
      %2216 = vmatprep.subr.bf16.mxu0 0
      %2217 = vmatpush1.bf16.msra.mxu0 %v2150
      %2218 = vmatprep.subr.bf16.mxu0 0
      %2219 = vmatpush1.bf16.msra.mxu0 %v2151
      %2220 = vmatprep.subr.bf16.mxu0 0
      %2221 = vmatpush1.bf16.msra.mxu0 %v2152
      %2222 = vmatprep.subr.bf16.mxu0 0
      %2223 = vmatpush1.bf16.msra.mxu0 %v2153
      %2224 = vmatprep.subr.bf16.mxu0 0
      %2225 = vmatpush1.bf16.msra.mxu0 %v2154
      %2226 = vmatprep.subr.bf16.mxu0 0
      %2227 = vmatpush1.bf16.msra.mxu0 %v2155
      %2228 = vmatprep.subr.bf16.mxu0 0
      %2229 = vmatpush1.bf16.msra.mxu0 %v2156
      %2230 = vmatprep.subr.bf16.mxu0 0
      %2231 = vmatpush1.bf16.msra.mxu0 %v2157
      %2232 = vmatprep.subr.bf16.mxu0 0
      %2233 = vmatpush1.bf16.msra.mxu0 %v2158
      %2234 = vmatprep.subr.bf16.mxu0 0
      %2235 = vmatpush1.bf16.msra.mxu0 %v2159
      %2236 = vmatprep.subr.bf16.mxu0 0
      %2237 = vmatpush1.bf16.msra.mxu0 %v2160
      %2238 = vmatprep.subr.bf16.mxu0 0
      %2239 = vmatpush1.bf16.msra.mxu0 %v2161
      %2240 = vmatprep.subr.bf16.mxu0 0
      %2241 = vmatpush1.bf16.msra.mxu0 %v2162
      %2242 = vmatprep.subr.bf16.mxu0 0
      %2243 = vmatpush1.bf16.msra.mxu0 %v2163
      %2244 = vmatprep.mubr.bf16.mxu0 %v2197
      %2245 = vmatmul.mubr.bf16.gmra.mrb[0].mxu0 %v2196
      %v2246 = vpop.f32.mrb[0].mxu0
      %v2247 = vadd.f32 0.0, %v2246
      %v2248 = vpop.f32.mrb[0].mxu0
      %v2249 = vpop.f32.mrb[0].mxu0
      %v2250 = vadd.f32 0.0, %v2249
      %v2251 = vpop.f32.mrb[0].mxu0
      %2252 = vmatprep.mubr.bf16.mxu0 %v2199
      %2253 = vmatmul.mubr.bf16.gmra.mrb[0].mxu0 %v2198
      %v2254 = vpop.f32.mrb[0].mxu0
      %v2255 = vadd.f32 0.0, %v2254
      %v2256 = vpop.f32.mrb[0].mxu0
      %v2257 = vpop.f32.mrb[0].mxu0
      %v2258 = vadd.f32 0.0, %v2257
      %v2259 = vpop.f32.mrb[0].mxu0
      %2260 = vmatprep.mubr.bf16.mxu0 %v2201
      %2261 = vmatmul.mubr.bf16.gmra.mrb[0].mxu0 %v2200
      %v2262 = vpop.f32.mrb[0].mxu0
      %v2263 = vadd.f32 0.0, %v2262
      %v2264 = vpop.f32.mrb[0].mxu0
      %v2265 = vpop.f32.mrb[0].mxu0
      %v2266 = vadd.f32 0.0, %v2265
      %v2267 = vpop.f32.mrb[0].mxu0
      %2268 = vmatprep.mubr.bf16.mxu0 %v2203
      %2269 = vmatmul.mubr.bf16.gmra.mrb[0].mxu0 %v2202
      %v2270 = vpop.f32.mrb[0].mxu0
      %v2271 = vadd.f32 0.0, %v2270
      %v2272 = vpop.f32.mrb[0].mxu0
      %v2273 = vpop.f32.mrb[0].mxu0
      %v2274 = vadd.f32 0.0, %v2273
      %v2275 = vpop.f32.mrb[0].mxu0
      %2276 = vdwg.mxu0
      %v2277 = vpack.c.bf16 %v2250, %v2247
      %v2278 = vpack.c.bf16 %v2258, %v2255
      %v2279 = vpack.c.bf16 %v2266, %v2263
      %v2280 = vpack.c.bf16 %v2274, %v2271
      %v2281 = vld [vmem:[%s1] sm:$0xf]
      %v2282 = vld [vmem:[%s1 + $0x4] sm:$0xf]
      %v2283 = vld [vmem:[%s1 + $0x8] sm:$0xf]
      %v2284 = vld [vmem:[%s1 + $0xc] sm:$0xf]
      %v2285 = vld [vmem:[%s1 + $0x10] sm:$0x3]
      %v2291 = vunpack.c.l.b16 %v2281
      %v2292 = vunpack.c.l.b16 %v2282
      %v2293 = vunpack.c.l.b16 %v2283
      %v2294 = vunpack.c.l.b16 %v2284
      %v2295 = vunpack.c.l.b16 %v2285
      %v2296 = vpack.c.b16 %v2292, %v2291
      %v2297 = vpack.c.b16 %v2294, %v2293
      %v2298 = vpack.c.b16 %v2295, %v2295
      %vm2301 = vcmask 293888
      %v2303 = vsel %vm2301, %v2277, 0
      %v2306 = vsel %vm2301, %v2278, 0
      %v2309 = vsel %vm2301, %v2279, 0
      %v2312 = vsel %vm2301, %v2280, 0
      %vm2314 = vcmask 1041408
      %v2316 = vsel %vm2314, %v2298, 0
      %2318 = vmatprep.subr.bf16.mxu0 0
      %2319 = vmatpush1.bf16.msra.mxu0 %v2296
      %2320 = vmatprep.subr.bf16.mxu0 0
      %2321 = vmatpush1.bf16.msra.mxu0 %v2297
      %2322 = vmatprep.subr.bf16.mxu0 0
      %2323 = vmatpush1.bf16.msra.mxu0 %v2316
      %2324 = vmatprep.subr.bf16.mxu0 0
      %2325 = vmatpush1.bf16.msra.mxu0 0
      %2326 = vmatprep.subr.bf16.mxu0 0
      %2327 = vmatpush1.bf16.msra.mxu0 0
      %2328 = vmatprep.subr.bf16.mxu0 0
      %2329 = vmatpush1.bf16.msra.mxu0 0
      %2330 = vmatprep.subr.bf16.mxu0 0
      %2331 = vmatpush1.bf16.msra.mxu0 0
      %2332 = vmatprep.subr.bf16.mxu0 0
      %2333 = vmatpush1.bf16.msra.mxu0 0
      %2334 = vmatprep.subr.bf16.mxu0 0
      %2335 = vmatpush1.bf16.msra.mxu0 0
      %2336 = vmatprep.subr.bf16.mxu0 0
      %2337 = vmatpush1.bf16.msra.mxu0 0
      %2338 = vmatprep.subr.bf16.mxu0 0
      %2339 = vmatpush1.bf16.msra.mxu0 0
      %2340 = vmatprep.subr.bf16.mxu0 0
      %2341 = vmatpush1.bf16.msra.mxu0 0
      %2342 = vmatprep.subr.bf16.mxu0 0
      %2343 = vmatpush1.bf16.msra.mxu0 0
      %2344 = vmatprep.subr.bf16.mxu0 0
      %2345 = vmatpush1.bf16.msra.mxu0 0
      %2346 = vmatprep.subr.bf16.mxu0 0
      %2347 = vmatpush1.bf16.msra.mxu0 0
      %2348 = vmatprep.subr.bf16.mxu0 0
      %2349 = vmatpush1.bf16.msra.mxu0 0
      %2350 = vmatprep.mubr.bf16.mxu0 0
      %2351 = vmatmul.mubr.bf16.gmra.mrb[0].mxu0 %v2303
      %v2352 = vpop.f32.mrb[0].mxu0
      %v2353 = vadd.f32 0.0, %v2352
      %v2354 = vpop.f32.mrb[0].mxu0
      %v2355 = vpop.f32.mrb[0].mxu0
      %v2356 = vadd.f32 0.0, %v2355
      %v2357 = vpop.f32.mrb[0].mxu0
      %2358 = vmatprep.mubr.bf16.mxu0 0
      %2359 = vmatmul.mubr.bf16.gmra.mrb[0].mxu0 %v2306
      %v2360 = vpop.f32.mrb[0].mxu0
      %v2361 = vadd.f32 0.0, %v2360
      %v2362 = vpop.f32.mrb[0].mxu0
      %v2363 = vpop.f32.mrb[0].mxu0
      %v2364 = vadd.f32 0.0, %v2363
      %v2365 = vpop.f32.mrb[0].mxu0
      %2366 = vmatprep.mubr.bf16.mxu0 0
      %2367 = vmatmul.mubr.bf16.gmra.mrb[0].mxu0 %v2309
      %v2368 = vpop.f32.mrb[0].mxu0
      %v2369 = vadd.f32 0.0, %v2368
      %v2370 = vpop.f32.mrb[0].mxu0
      %v2371 = vpop.f32.mrb[0].mxu0
      %v2372 = vadd.f32 0.0, %v2371
      %v2373 = vpop.f32.mrb[0].mxu0
      %2374 = vmatprep.mubr.bf16.mxu0 0
      %2375 = vmatmul.mubr.bf16.gmra.mrb[0].mxu0 %v2312
      %v2376 = vpop.f32.mrb[0].mxu0
      %v2377 = vadd.f32 0.0, %v2376
      %v2378 = vpop.f32.mrb[0].mxu0
      %v2379 = vpop.f32.mrb[0].mxu0
      %v2380 = vadd.f32 0.0, %v2379
      %v2381 = vpop.f32.mrb[0].mxu0
      %2382 = vdwg.mxu0
      %v2383 = vld [vmem:[%s2] sm:$0x1]
      %v2385 = vlaneseq
      %v2386 = vshrl.u32 %v2385, 7
      %v2387 = vsub.s32 0, %v2386
      %v2388 = vrot.slane %v2383, %v2387
      %v2390 = vmul.f32 %v2353, %v2388
      %v2391 = vmul.f32 %v2356, %v2388
      %v2392 = vmul.f32 %v2361, %v2388
      %v2393 = vmul.f32 %v2364, %v2388
      %v2394 = vmul.f32 %v2369, %v2388
      %v2395 = vmul.f32 %v2372, %v2388
      %v2396 = vmul.f32 %v2377, %v2388
      %v2397 = vmul.f32 %v2380, %v2388
      %v2398 = vld [vmem:[%s3] sm:$0x1]
      %v2400 = vlaneseq
      %v2401 = vshrl.u32 %v2400, 7
      %v2402 = vsub.s32 0, %v2401
      %v2403 = vrot.slane %v2398, %v2402
      %v2405 = vadd.f32 %v2390, %v2403
      %v2406 = vadd.f32 %v2391, %v2403
      %v2407 = vadd.f32 %v2392, %v2403
      %v2408 = vadd.f32 %v2393, %v2403
      %v2409 = vadd.f32 %v2394, %v2403
      %v2410 = vadd.f32 %v2395, %v2403
      %v2411 = vadd.f32 %v2396, %v2403
      %v2412 = vadd.f32 %v2397, %v2403
      %v2413 = vmax.f32 %v2405, 0.0
      %v2414 = vmax.f32 %v2406, 0.0
      %v2415 = vmax.f32 %v2407, 0.0
      %v2416 = vmax.f32 %v2408, 0.0
      %v2417 = vmax.f32 %v2409, 0.0
      %v2418 = vmax.f32 %v2410, 0.0
      %v2419 = vmax.f32 %v2411, 0.0
      %v2420 = vmax.f32 %v2412, 0.0
      %vm2421 = vcmask 64512
      %2422 = vst.msk [vmem:[#allocation4] sm:$0xff] %vm2421, 0.0
      %vm2423 = vcmask 58368
      %2424 = vst.msk [vmem:[#allocation4 + $0x8] sm:$0x3] %vm2423, 0.0
      %2425 = vst.msk [vmem:[#allocation4 + $0x10] sm:$0xff] %vm2421, 0.0
      %2426 = vst.msk [vmem:[#allocation4 + $0x18] sm:$0x3] %vm2423, 0.0
      %2427 = vst.msk [vmem:[#allocation4 + $0x20] sm:$0xff] %vm2421, 0.0
      %2428 = vst.msk [vmem:[#allocation4 + $0x28] sm:$0x3] %vm2423, 0.0
      %2429 = vst.msk [vmem:[#allocation4 + $0x30] sm:$0xff] %vm2421, 0.0
      %2430 = vst.msk [vmem:[#allocation4 + $0x38] sm:$0x3] %vm2423, 0.0
      %2431 = vst.msk [vmem:[#allocation4 + $0x40] sm:$0xff] %vm2421, 0.0
      %2432 = vst.msk [vmem:[#allocation4 + $0x48] sm:$0x3] %vm2423, 0.0
      %2433 = vst.msk [vmem:[#allocation4 + $0x50] sm:$0xff] %vm2421, 0.0
      %2434 = vst.msk [vmem:[#allocation4 + $0x58] sm:$0x3] %vm2423, 0.0
      %2435 = vst.msk [vmem:[#allocation4 + $0x60] sm:$0xff] %vm2421, 0.0
      %2436 = vst.msk [vmem:[#allocation4 + $0x68] sm:$0x3] %vm2423, 0.0
      %2437 = vst.msk [vmem:[#allocation4 + $0x70] sm:$0xff] %vm2421, 0.0
      %2438 = vst.msk [vmem:[#allocation4 + $0x78] sm:$0x3] %vm2423, 0.0
      %2439 = vst.msk [vmem:[#allocation4 + $0x80] sm:$0xff] %vm2421, 0.0
      %2440 = vst.msk [vmem:[#allocation4 + $0x88] sm:$0x3] %vm2423, 0.0
      %2441 = vst.msk [vmem:[#allocation4 + $0x90] sm:$0xff] %vm2421, 0.0
      %2442 = vst.msk [vmem:[#allocation4 + $0x98] sm:$0x3] %vm2423, 0.0
      %s2443 = scalar_lea.vmem [#allocation4], 16
      %2444 = vst.msk [vmem:[%s2443 + $0x1] sm:$0xff] %vm2421, %v2413
      %2445 = vst.msk [vmem:[%s2443 + $0x11] sm:$0xff] %vm2421, %v2414
      %2446 = vst.msk [vmem:[%s2443 + $0x21] sm:$0xff] %vm2421, %v2415
      %2447 = vst.msk [vmem:[%s2443 + $0x31] sm:$0xff] %vm2421, %v2416
      %2448 = vst.msk [vmem:[%s2443 + $0x41] sm:$0xff] %vm2421, %v2417
      %2449 = vst.msk [vmem:[%s2443 + $0x51] sm:$0xff] %vm2421, %v2418
      %2450 = vst.msk [vmem:[%s2443 + $0x61] sm:$0xff] %vm2421, %v2419
      %2451 = vst.msk [vmem:[%s2443 + $0x71] sm:$0xff] %vm2421, %v2420
      %v2452 = vld [vmem:[#allocation4] sm:$0xff]
      %v2453 = vld [vmem:[#allocation4 + $0x10] sm:$0xff]
      %v2454 = vld [vmem:[#allocation4 + $0x20] sm:$0xff]
      %v2455 = vld [vmem:[#allocation4 + $0x30] sm:$0xff]
      %v2456 = vld [vmem:[#allocation4 + $0x40] sm:$0xff]
      %v2457 = vld [vmem:[#allocation4 + $0x50] sm:$0xff]
      %v2458 = vld [vmem:[#allocation4 + $0x60] sm:$0xff]
      %v2459 = vld [vmem:[#allocation4 + $0x70] sm:$0xff]
      %2460 = vst.msk [vmem:[#allocation5] sm:$0xff] %vm2421, %v2452
      %2461 = vst.msk [vmem:[#allocation5 + $0x8] sm:$0xff] %vm2421, %v2453
      %2462 = vst.msk [vmem:[#allocation5 + $0x10] sm:$0xff] %vm2421, %v2454
      %2463 = vst.msk [vmem:[#allocation5 + $0x18] sm:$0xff] %vm2421, %v2455
      %2464 = vst.msk [vmem:[#allocation5 + $0x20] sm:$0xff] %vm2421, %v2456
      %2465 = vst.msk [vmem:[#allocation5 + $0x28] sm:$0xff] %vm2421, %v2457
      %2466 = vst.msk [vmem:[#allocation5 + $0x30] sm:$0xff] %vm2421, %v2458
      %2467 = vst.msk [vmem:[#allocation5 + $0x38] sm:$0xff] %vm2421, %v2459
      %v2468 = vld [vmem:[#allocation4 + $0x1] sm:$0xff]
      %v2469 = vld [vmem:[#allocation4 + $0x11] sm:$0xff]
      %v2470 = vld [vmem:[#allocation4 + $0x21] sm:$0xff]
      %v2471 = vld [vmem:[#allocation4 + $0x31] sm:$0xff]
      %v2472 = vld [vmem:[#allocation4 + $0x41] sm:$0xff]
      %v2473 = vld [vmem:[#allocation4 + $0x51] sm:$0xff]
      %v2474 = vld [vmem:[#allocation4 + $0x61] sm:$0xff]
      %v2475 = vld [vmem:[#allocation4 + $0x71] sm:$0xff]
      %2484 = vrot.lane.b32.xlu0 %v2468, 8
      %v2485 = vpop.permute.xlu0 %2484
      %2486 = vrot.lane.b32.xlu0 %v2469, 8
      %v2487 = vpop.permute.xlu0 %2486
      %2488 = vrot.lane.b32.xlu0 %v2470, 8
      %v2489 = vpop.permute.xlu0 %2488
      %2490 = vrot.lane.b32.xlu0 %v2471, 8
      %v2491 = vpop.permute.xlu0 %2490
      %2492 = vrot.lane.b32.xlu0 %v2472, 8
      %v2493 = vpop.permute.xlu0 %2492
      %2494 = vrot.lane.b32.xlu0 %v2473, 8
      %v2495 = vpop.permute.xlu0 %2494
      %2496 = vrot.lane.b32.xlu0 %v2474, 8
      %v2497 = vpop.permute.xlu0 %2496
      %2498 = vrot.lane.b32.xlu0 %v2475, 8
      %v2499 = vpop.permute.xlu0 %2498
      %vm2508 = vcmask 130112
      %2509 = vst.msk [vmem:[#allocation5] sm:$0xff] %vm2508, %v2485
      %2510 = vst.msk [vmem:[#allocation5 + $0x8] sm:$0xff] %vm2508, %v2487
      %2511 = vst.msk [vmem:[#allocation5 + $0x10] sm:$0xff] %vm2508, %v2489
      %2512 = vst.msk [vmem:[#allocation5 + $0x18] sm:$0xff] %vm2508, %v2491
      %2513 = vst.msk [vmem:[#allocation5 + $0x20] sm:$0xff] %vm2508, %v2493
      %2514 = vst.msk [vmem:[#allocation5 + $0x28] sm:$0xff] %vm2508, %v2495
      %2515 = vst.msk [vmem:[#allocation5 + $0x30] sm:$0xff] %vm2508, %v2497
      %2516 = vst.msk [vmem:[#allocation5 + $0x38] sm:$0xff] %vm2508, %v2499
      %v2517 = vld [vmem:[#allocation4 + $0x2] sm:$0xff]
      %v2518 = vld [vmem:[#allocation4 + $0x12] sm:$0xff]
      %v2519 = vld [vmem:[#allocation4 + $0x22] sm:$0xff]
      %v2520 = vld [vmem:[#allocation4 + $0x32] sm:$0xff]
      %v2521 = vld [vmem:[#allocation4 + $0x42] sm:$0xff]
      %v2522 = vld [vmem:[#allocation4 + $0x52] sm:$0xff]
      %v2523 = vld [vmem:[#allocation4 + $0x62] sm:$0xff]
      %v2524 = vld [vmem:[#allocation4 + $0x72] sm:$0xff]
      %2533 = vrot.lane.b32.xlu0 %v2517, 16
      %v2534 = vpop.permute.xlu0 %2533
      %2535 = vrot.lane.b32.xlu0 %v2518, 16
      %v2536 = vpop.permute.xlu0 %2535
      %2537 = vrot.lane.b32.xlu0 %v2519, 16
      %v2538 = vpop.permute.xlu0 %2537
      %2539 = vrot.lane.b32.xlu0 %v2520, 16
      %v2540 = vpop.permute.xlu0 %2539
      %2541 = vrot.lane.b32.xlu0 %v2521, 16
      %v2542 = vpop.permute.xlu0 %2541
      %2543 = vrot.lane.b32.xlu0 %v2522, 16
      %v2544 = vpop.permute.xlu0 %2543
      %2545 = vrot.lane.b32.xlu0 %v2523, 16
      %v2546 = vpop.permute.xlu0 %2545
      %2547 = vrot.lane.b32.xlu0 %v2524, 16
      %v2548 = vpop.permute.xlu0 %2547
      %vm2557 = vcmask 195712
      %2558 = vst.msk [vmem:[#allocation5] sm:$0xff] %vm2557, %v2534
      %2559 = vst.msk [vmem:[#allocation5 + $0x8] sm:$0xff] %vm2557, %v2536
      %2560 = vst.msk [vmem:[#allocation5 + $0x10] sm:$0xff] %vm2557, %v2538
      %2561 = vst.msk [vmem:[#allocation5 + $0x18] sm:$0xff] %vm2557, %v2540
      %2562 = vst.msk [vmem:[#allocation5 + $0x20] sm:$0xff] %vm2557, %v2542
      %2563 = vst.msk [vmem:[#allocation5 + $0x28] sm:$0xff] %vm2557, %v2544
      %2564 = vst.msk [vmem:[#allocation5 + $0x30] sm:$0xff] %vm2557, %v2546
      %2565 = vst.msk [vmem:[#allocation5 + $0x38] sm:$0xff] %vm2557, %v2548
      %v2566 = vld [vmem:[%s2443] sm:$0xff]
      %v2567 = vld [vmem:[%s2443 + $0x10] sm:$0xff]
      %v2568 = vld [vmem:[%s2443 + $0x20] sm:$0xff]
      %v2569 = vld [vmem:[%s2443 + $0x30] sm:$0xff]
      %v2570 = vld [vmem:[%s2443 + $0x40] sm:$0xff]
      %v2571 = vld [vmem:[%s2443 + $0x50] sm:$0xff]
      %v2572 = vld [vmem:[%s2443 + $0x60] sm:$0xff]
      %v2573 = vld [vmem:[%s2443 + $0x70] sm:$0xff]
      %2582 = vrot.lane.b32.xlu0 %v2566, 24
      %v2583 = vpop.permute.xlu0 %2582
      %2584 = vrot.lane.b32.xlu0 %v2567, 24
      %v2585 = vpop.permute.xlu0 %2584
      %2586 = vrot.lane.b32.xlu0 %v2568, 24
      %v2587 = vpop.permute.xlu0 %2586
      %2588 = vrot.lane.b32.xlu0 %v2569, 24
      %v2589 = vpop.permute.xlu0 %2588
      %2590 = vrot.lane.b32.xlu0 %v2570, 24
      %v2591 = vpop.permute.xlu0 %2590
      %2592 = vrot.lane.b32.xlu0 %v2571, 24
      %v2593 = vpop.permute.xlu0 %2592
      %2594 = vrot.lane.b32.xlu0 %v2572, 24
      %v2595 = vpop.permute.xlu0 %2594
      %2596 = vrot.lane.b32.xlu0 %v2573, 24
      %v2597 = vpop.permute.xlu0 %2596
      %vm2606 = vcmask 261312
      %2607 = vst.msk [vmem:[#allocation5] sm:$0xff] %vm2606, %v2583
      %2608 = vst.msk [vmem:[#allocation5 + $0x8] sm:$0xff] %vm2606, %v2585
      %2609 = vst.msk [vmem:[#allocation5 + $0x10] sm:$0xff] %vm2606, %v2587
      %2610 = vst.msk [vmem:[#allocation5 + $0x18] sm:$0xff] %vm2606, %v2589
      %2611 = vst.msk [vmem:[#allocation5 + $0x20] sm:$0xff] %vm2606, %v2591
      %2612 = vst.msk [vmem:[#allocation5 + $0x28] sm:$0xff] %vm2606, %v2593
      %2613 = vst.msk [vmem:[#allocation5 + $0x30] sm:$0xff] %vm2606, %v2595
      %2614 = vst.msk [vmem:[#allocation5 + $0x38] sm:$0xff] %vm2606, %v2597
      %v2615 = vld [vmem:[%s2443 + $0x1] sm:$0xff]
      %v2616 = vld [vmem:[%s2443 + $0x11] sm:$0xff]
      %v2617 = vld [vmem:[%s2443 + $0x21] sm:$0xff]
      %v2618 = vld [vmem:[%s2443 + $0x31] sm:$0xff]
      %v2619 = vld [vmem:[%s2443 + $0x41] sm:$0xff]
      %v2620 = vld [vmem:[%s2443 + $0x51] sm:$0xff]
      %v2621 = vld [vmem:[%s2443 + $0x61] sm:$0xff]
      %v2622 = vld [vmem:[%s2443 + $0x71] sm:$0xff]
      %2631 = vrot.lane.b32.xlu0 %v2615, 32
      %v2632 = vpop.permute.xlu0 %2631
      %2633 = vrot.lane.b32.xlu0 %v2616, 32
      %v2634 = vpop.permute.xlu0 %2633
      %2635 = vrot.lane.b32.xlu0 %v2617, 32
      %v2636 = vpop.permute.xlu0 %2635
      %2637 = vrot.lane.b32.xlu0 %v2618, 32
      %v2638 = vpop.permute.xlu0 %2637
      %2639 = vrot.lane.b32.xlu0 %v2619, 32
      %v2640 = vpop.permute.xlu0 %2639
      %2641 = vrot.lane.b32.xlu0 %v2620, 32
      %v2642 = vpop.permute.xlu0 %2641
      %2643 = vrot.lane.b32.xlu0 %v2621, 32
      %v2644 = vpop.permute.xlu0 %2643
      %2645 = vrot.lane.b32.xlu0 %v2622, 32
      %v2646 = vpop.permute.xlu0 %2645
      %vm2655 = vcmask 326912
      %2656 = vst.msk [vmem:[#allocation5] sm:$0xff] %vm2655, %v2632
      %2657 = vst.msk [vmem:[#allocation5 + $0x8] sm:$0xff] %vm2655, %v2634
      %2658 = vst.msk [vmem:[#allocation5 + $0x10] sm:$0xff] %vm2655, %v2636
      %2659 = vst.msk [vmem:[#allocation5 + $0x18] sm:$0xff] %vm2655, %v2638
      %2660 = vst.msk [vmem:[#allocation5 + $0x20] sm:$0xff] %vm2655, %v2640
      %2661 = vst.msk [vmem:[#allocation5 + $0x28] sm:$0xff] %vm2655, %v2642
      %2662 = vst.msk [vmem:[#allocation5 + $0x30] sm:$0xff] %vm2655, %v2644
      %2663 = vst.msk [vmem:[#allocation5 + $0x38] sm:$0xff] %vm2655, %v2646
      %v2664 = vld [vmem:[%s2443 + $0x2] sm:$0xff]
      %v2665 = vld [vmem:[%s2443 + $0x12] sm:$0xff]
      %v2666 = vld [vmem:[%s2443 + $0x22] sm:$0xff]
      %v2667 = vld [vmem:[%s2443 + $0x32] sm:$0xff]
      %v2668 = vld [vmem:[%s2443 + $0x42] sm:$0xff]
      %v2669 = vld [vmem:[%s2443 + $0x52] sm:$0xff]
      %v2670 = vld [vmem:[%s2443 + $0x62] sm:$0xff]
      %v2671 = vld [vmem:[%s2443 + $0x72] sm:$0xff]
      %2680 = vrot.lane.b32.xlu0 %v2664, 40
      %v2681 = vpop.permute.xlu0 %2680
      %2682 = vrot.lane.b32.xlu0 %v2665, 40
      %v2683 = vpop.permute.xlu0 %2682
      %2684 = vrot.lane.b32.xlu0 %v2666, 40
      %v2685 = vpop.permute.xlu0 %2684
      %2686 = vrot.lane.b32.xlu0 %v2667, 40
      %v2687 = vpop.permute.xlu0 %2686
      %2688 = vrot.lane.b32.xlu0 %v2668, 40
      %v2689 = vpop.permute.xlu0 %2688
      %2690 = vrot.lane.b32.xlu0 %v2669, 40
      %v2691 = vpop.permute.xlu0 %2690
      %2692 = vrot.lane.b32.xlu0 %v2670, 40
      %v2693 = vpop.permute.xlu0 %2692
      %2694 = vrot.lane.b32.xlu0 %v2671, 40
      %v2695 = vpop.permute.xlu0 %2694
      %vm2704 = vcmask 392512
      %2705 = vst.msk [vmem:[#allocation5] sm:$0xff] %vm2704, %v2681
      %2706 = vst.msk [vmem:[#allocation5 + $0x8] sm:$0xff] %vm2704, %v2683
      %2707 = vst.msk [vmem:[#allocation5 + $0x10] sm:$0xff] %vm2704, %v2685
      %2708 = vst.msk [vmem:[#allocation5 + $0x18] sm:$0xff] %vm2704, %v2687
      %2709 = vst.msk [vmem:[#allocation5 + $0x20] sm:$0xff] %vm2704, %v2689
      %2710 = vst.msk [vmem:[#allocation5 + $0x28] sm:$0xff] %vm2704, %v2691
      %2711 = vst.msk [vmem:[#allocation5 + $0x30] sm:$0xff] %vm2704, %v2693
      %2712 = vst.msk [vmem:[#allocation5 + $0x38] sm:$0xff] %vm2704, %v2695
      %s2713 = scalar_lea.vmem [#allocation4], 32
      %v2714 = vld [vmem:[%s2713] sm:$0xff]
      %v2715 = vld [vmem:[%s2713 + $0x10] sm:$0xff]
      %v2716 = vld [vmem:[%s2713 + $0x20] sm:$0xff]
      %v2717 = vld [vmem:[%s2713 + $0x30] sm:$0xff]
      %v2718 = vld [vmem:[%s2713 + $0x40] sm:$0xff]
      %v2719 = vld [vmem:[%s2713 + $0x50] sm:$0xff]
      %v2720 = vld [vmem:[%s2713 + $0x60] sm:$0xff]
      %v2721 = vld [vmem:[%s2713 + $0x70] sm:$0xff]
      %2730 = vrot.lane.b32.xlu0 %v2714, 48
      %v2731 = vpop.permute.xlu0 %2730
      %2732 = vrot.lane.b32.xlu0 %v2715, 48
      %v2733 = vpop.permute.xlu0 %2732
      %2734 = vrot.lane.b32.xlu0 %v2716, 48
      %v2735 = vpop.permute.xlu0 %2734
      %2736 = vrot.lane.b32.xlu0 %v2717, 48
      %v2737 = vpop.permute.xlu0 %2736
      %2738 = vrot.lane.b32.xlu0 %v2718, 48
      %v2739 = vpop.permute.xlu0 %2738
      %2740 = vrot.lane.b32.xlu0 %v2719, 48
      %v2741 = vpop.permute.xlu0 %2740
      %2742 = vrot.lane.b32.xlu0 %v2720, 48
      %v2743 = vpop.permute.xlu0 %2742
      %2744 = vrot.lane.b32.xlu0 %v2721, 48
      %v2745 = vpop.permute.xlu0 %2744
      %vm2754 = vcmask 458112
      %2755 = vst.msk [vmem:[#allocation5] sm:$0xff] %vm2754, %v2731
      %2756 = vst.msk [vmem:[#allocation5 + $0x8] sm:$0xff] %vm2754, %v2733
      %2757 = vst.msk [vmem:[#allocation5 + $0x10] sm:$0xff] %vm2754, %v2735
      %2758 = vst.msk [vmem:[#allocation5 + $0x18] sm:$0xff] %vm2754, %v2737
      %2759 = vst.msk [vmem:[#allocation5 + $0x20] sm:$0xff] %vm2754, %v2739
      %2760 = vst.msk [vmem:[#allocation5 + $0x28] sm:$0xff] %vm2754, %v2741
      %2761 = vst.msk [vmem:[#allocation5 + $0x30] sm:$0xff] %vm2754, %v2743
      %2762 = vst.msk [vmem:[#allocation5 + $0x38] sm:$0xff] %vm2754, %v2745
      %v2763 = vld [vmem:[%s2713 + $0x1] sm:$0xff]
      %v2764 = vld [vmem:[%s2713 + $0x11] sm:$0xff]
      %v2765 = vld [vmem:[%s2713 + $0x21] sm:$0xff]
      %v2766 = vld [vmem:[%s2713 + $0x31] sm:$0xff]
      %v2767 = vld [vmem:[%s2713 + $0x41] sm:$0xff]
      %v2768 = vld [vmem:[%s2713 + $0x51] sm:$0xff]
      %v2769 = vld [vmem:[%s2713 + $0x61] sm:$0xff]
      %v2770 = vld [vmem:[%s2713 + $0x71] sm:$0xff]
      %2779 = vrot.lane.b32.xlu0 %v2763, 56
      %v2780 = vpop.permute.xlu0 %2779
      %2781 = vrot.lane.b32.xlu0 %v2764, 56
      %v2782 = vpop.permute.xlu0 %2781
      %2783 = vrot.lane.b32.xlu0 %v2765, 56
      %v2784 = vpop.permute.xlu0 %2783
      %2785 = vrot.lane.b32.xlu0 %v2766, 56
      %v2786 = vpop.permute.xlu0 %2785
      %2787 = vrot.lane.b32.xlu0 %v2767, 56
      %v2788 = vpop.permute.xlu0 %2787
      %2789 = vrot.lane.b32.xlu0 %v2768, 56
      %v2790 = vpop.permute.xlu0 %2789
      %2791 = vrot.lane.b32.xlu0 %v2769, 56
      %v2792 = vpop.permute.xlu0 %2791
      %2793 = vrot.lane.b32.xlu0 %v2770, 56
      %v2794 = vpop.permute.xlu0 %2793
      %vm2803 = vcmask 523712
      %2804 = vst.msk [vmem:[#allocation5] sm:$0xff] %vm2803, %v2780
      %2805 = vst.msk [vmem:[#allocation5 + $0x8] sm:$0xff] %vm2803, %v2782
      %2806 = vst.msk [vmem:[#allocation5 + $0x10] sm:$0xff] %vm2803, %v2784
      %2807 = vst.msk [vmem:[#allocation5 + $0x18] sm:$0xff] %vm2803, %v2786
      %2808 = vst.msk [vmem:[#allocation5 + $0x20] sm:$0xff] %vm2803, %v2788
      %2809 = vst.msk [vmem:[#allocation5 + $0x28] sm:$0xff] %vm2803, %v2790
      %2810 = vst.msk [vmem:[#allocation5 + $0x30] sm:$0xff] %vm2803, %v2792
      %2811 = vst.msk [vmem:[#allocation5 + $0x38] sm:$0xff] %vm2803, %v2794
      %v2812 = vld [vmem:[%s2713 + $0x2] sm:$0xff]
      %v2813 = vld [vmem:[%s2713 + $0x12] sm:$0xff]
      %v2814 = vld [vmem:[%s2713 + $0x22] sm:$0xff]
      %v2815 = vld [vmem:[%s2713 + $0x32] sm:$0xff]
      %v2816 = vld [vmem:[%s2713 + $0x42] sm:$0xff]
      %v2817 = vld [vmem:[%s2713 + $0x52] sm:$0xff]
      %v2818 = vld [vmem:[%s2713 + $0x62] sm:$0xff]
      %v2819 = vld [vmem:[%s2713 + $0x72] sm:$0xff]
      %2828 = vrot.lane.b32.xlu0 %v2812, 64
      %v2829 = vpop.permute.xlu0 %2828
      %2830 = vrot.lane.b32.xlu0 %v2813, 64
      %v2831 = vpop.permute.xlu0 %2830
      %2832 = vrot.lane.b32.xlu0 %v2814, 64
      %v2833 = vpop.permute.xlu0 %2832
      %2834 = vrot.lane.b32.xlu0 %v2815, 64
      %v2835 = vpop.permute.xlu0 %2834
      %2836 = vrot.lane.b32.xlu0 %v2816, 64
      %v2837 = vpop.permute.xlu0 %2836
      %2838 = vrot.lane.b32.xlu0 %v2817, 64
      %v2839 = vpop.permute.xlu0 %2838
      %2840 = vrot.lane.b32.xlu0 %v2818, 64
      %v2841 = vpop.permute.xlu0 %2840
      %2842 = vrot.lane.b32.xlu0 %v2819, 64
      %v2843 = vpop.permute.xlu0 %2842
      %vm2852 = vcmask 589312
      %2853 = vst.msk [vmem:[#allocation5] sm:$0xff] %vm2852, %v2829
      %2854 = vst.msk [vmem:[#allocation5 + $0x8] sm:$0xff] %vm2852, %v2831
      %2855 = vst.msk [vmem:[#allocation5 + $0x10] sm:$0xff] %vm2852, %v2833
      %2856 = vst.msk [vmem:[#allocation5 + $0x18] sm:$0xff] %vm2852, %v2835
      %2857 = vst.msk [vmem:[#allocation5 + $0x20] sm:$0xff] %vm2852, %v2837
      %2858 = vst.msk [vmem:[#allocation5 + $0x28] sm:$0xff] %vm2852, %v2839
      %2859 = vst.msk [vmem:[#allocation5 + $0x30] sm:$0xff] %vm2852, %v2841
      %2860 = vst.msk [vmem:[#allocation5 + $0x38] sm:$0xff] %vm2852, %v2843
      %v2861 = vld [vmem:[#allocation5] sm:$0xff]
      %v2862 = vld [vmem:[#allocation5 + $0x8] sm:$0xff]
      %v2863 = vld [vmem:[#allocation5 + $0x10] sm:$0xff]
      %v2864 = vld [vmem:[#allocation5 + $0x18] sm:$0xff]
      %v2865 = vld [vmem:[#allocation5 + $0x20] sm:$0xff]
      %v2866 = vld [vmem:[#allocation5 + $0x28] sm:$0xff]
      %v2867 = vld [vmem:[#allocation5 + $0x30] sm:$0xff]
      %v2868 = vld [vmem:[#allocation5 + $0x38] sm:$0xff]
      %v2869 = vpack.c.bf16 %v2862, %v2861
      %v2870 = vpack.c.bf16 %v2864, %v2863
      %v2871 = vpack.c.bf16 %v2866, %v2865
      %v2872 = vpack.c.bf16 %v2868, %v2867
      %v2873 = vld [vmem:[%s4] sm:$0xf]
      %v2874 = vld [vmem:[%s4 + $0x4] sm:$0xf]
      %v2875 = vld [vmem:[%s4 + $0x8] sm:$0xf]
      %v2876 = vld [vmem:[%s4 + $0xc] sm:$0xf]
      %v2877 = vld [vmem:[%s4 + $0x10] sm:$0xf]
      %v2878 = vld [vmem:[%s4 + $0x14] sm:$0xf]
      %v2879 = vld [vmem:[%s4 + $0x18] sm:$0xf]
      %v2880 = vld [vmem:[%s4 + $0x1c] sm:$0xf]
      %v2881 = vld [vmem:[%s4 + $0x20] sm:$0xf]
      %v2891 = vunpack.c.l.b16 %v2873
      %v2892 = vunpack.c.l.b16 %v2874
      %v2893 = vunpack.c.l.b16 %v2875
      %v2894 = vunpack.c.l.b16 %v2876
      %v2895 = vunpack.c.l.b16 %v2877
      %v2896 = vunpack.c.l.b16 %v2878
      %v2897 = vunpack.c.l.b16 %v2879
      %v2898 = vunpack.c.l.b16 %v2880
      %v2899 = vunpack.c.l.b16 %v2881
      %v2900 = vpack.c.b16 %v2892, %v2891
      %v2901 = vpack.c.b16 %v2894, %v2893
      %v2902 = vpack.c.b16 %v2896, %v2895
      %v2903 = vpack.c.b16 %v2898, %v2897
      %v2904 = vpack.c.b16 %v2899, %v2899
      %vm2909 = vcmask 588800
      %v2911 = vsel %vm2909, %v2869, 0
      %v2914 = vsel %vm2909, %v2870, 0
      %v2917 = vsel %vm2909, %v2871, 0
      %v2920 = vsel %vm2909, %v2872, 0
      %vm2922 = vcmask 1043456
      %v2924 = vsel %vm2922, %v2904, 0
      %2926 = vmatprep.subr.bf16.mxu0 0
      %2927 = vmatpush1.bf16.msra.mxu0 %v2900
      %2928 = vmatprep.subr.bf16.mxu0 0
      %2929 = vmatpush1.bf16.msra.mxu0 %v2901
      %2930 = vmatprep.subr.bf16.mxu0 0
      %2931 = vmatpush1.bf16.msra.mxu0 %v2902
      %2932 = vmatprep.subr.bf16.mxu0 0
      %2933 = vmatpush1.bf16.msra.mxu0 %v2903
      %2934 = vmatprep.subr.bf16.mxu0 0
      %2935 = vmatpush1.bf16.msra.mxu0 %v2924
      %2936 = vmatprep.subr.bf16.mxu0 0
      %2937 = vmatpush1.bf16.msra.mxu0 0
      %2938 = vmatprep.subr.bf16.mxu0 0
      %2939 = vmatpush1.bf16.msra.mxu0 0
      %2940 = vmatprep.subr.bf16.mxu0 0
      %2941 = vmatpush1.bf16.msra.mxu0 0
      %2942 = vmatprep.subr.bf16.mxu0 0
      %2943 = vmatpush1.bf16.msra.mxu0 0
      %2944 = vmatprep.subr.bf16.mxu0 0
      %2945 = vmatpush1.bf16.msra.mxu0 0
      %2946 = vmatprep.subr.bf16.mxu0 0
      %2947 = vmatpush1.bf16.msra.mxu0 0
      %2948 = vmatprep.subr.bf16.mxu0 0
      %2949 = vmatpush1.bf16.msra.mxu0 0
      %2950 = vmatprep.subr.bf16.mxu0 0
      %2951 = vmatpush1.bf16.msra.mxu0 0
      %2952 = vmatprep.subr.bf16.mxu0 0
      %2953 = vmatpush1.bf16.msra.mxu0 0
      %2954 = vmatprep.subr.bf16.mxu0 0
      %2955 = vmatpush1.bf16.msra.mxu0 0
      %2956 = vmatprep.subr.bf16.mxu0 0
      %2957 = vmatpush1.bf16.msra.mxu0 0
      %2958 = vmatprep.mubr.bf16.mxu0 0
      %2959 = vmatmul.mubr.bf16.gmra.mrb[0].mxu0 %v2911
      %v2960 = vpop.f32.mrb[0].mxu0
      %v2961 = vadd.f32 0.0, %v2960
      %v2962 = vpop.f32.mrb[0].mxu0
      %v2963 = vpop.f32.mrb[0].mxu0
      %v2964 = vadd.f32 0.0, %v2963
      %v2965 = vpop.f32.mrb[0].mxu0
      %2966 = vmatprep.mubr.bf16.mxu0 0
      %2967 = vmatmul.mubr.bf16.gmra.mrb[0].mxu0 %v2914
      %v2968 = vpop.f32.mrb[0].mxu0
      %v2969 = vadd.f32 0.0, %v2968
      %v2970 = vpop.f32.mrb[0].mxu0
      %v2971 = vpop.f32.mrb[0].mxu0
      %v2972 = vadd.f32 0.0, %v2971
      %v2973 = vpop.f32.mrb[0].mxu0
      %2974 = vmatprep.mubr.bf16.mxu0 0
      %2975 = vmatmul.mubr.bf16.gmra.mrb[0].mxu0 %v2917
      %v2976 = vpop.f32.mrb[0].mxu0
      %v2977 = vadd.f32 0.0, %v2976
      %v2978 = vpop.f32.mrb[0].mxu0
      %v2979 = vpop.f32.mrb[0].mxu0
      %v2980 = vadd.f32 0.0, %v2979
      %v2981 = vpop.f32.mrb[0].mxu0
      %2982 = vmatprep.mubr.bf16.mxu0 0
      %2983 = vmatmul.mubr.bf16.gmra.mrb[0].mxu0 %v2920
      %v2984 = vpop.f32.mrb[0].mxu0
      %v2985 = vadd.f32 0.0, %v2984
      %v2986 = vpop.f32.mrb[0].mxu0
      %v2987 = vpop.f32.mrb[0].mxu0
      %v2988 = vadd.f32 0.0, %v2987
      %v2989 = vpop.f32.mrb[0].mxu0
      %2990 = vdwg.mxu0
      %v2991 = vld [vmem:[%s5] sm:$0x1]
      %v2993 = vlaneseq
      %v2994 = vshrl.u32 %v2993, 7
      %v2995 = vsub.s32 0, %v2994
      %v2996 = vrot.slane %v2991, %v2995
      %v2998 = vmul.f32 %v2961, %v2996
      %v2999 = vmul.f32 %v2964, %v2996
      %v3000 = vmul.f32 %v2969, %v2996
      %v3001 = vmul.f32 %v2972, %v2996
      %v3002 = vmul.f32 %v2977, %v2996
      %v3003 = vmul.f32 %v2980, %v2996
      %v3004 = vmul.f32 %v2985, %v2996
      %v3005 = vmul.f32 %v2988, %v2996
      %v3006 = vld [vmem:[%s6] sm:$0x1]
      %v3008 = vlaneseq
      %v3009 = vshrl.u32 %v3008, 7
      %v3010 = vsub.s32 0, %v3009
      %v3011 = vrot.slane %v3006, %v3010
      %v3013 = vadd.f32 %v2998, %v3011
      %v3014 = vadd.f32 %v2999, %v3011
      %v3015 = vadd.f32 %v3000, %v3011
      %v3016 = vadd.f32 %v3001, %v3011
      %v3017 = vadd.f32 %v3002, %v3011
      %v3018 = vadd.f32 %v3003, %v3011
      %v3019 = vadd.f32 %v3004, %v3011
      %v3020 = vadd.f32 %v3005, %v3011
      %v3021 = vld [vmem:[%s380] sm:$0xff]
      %v3022 = vld [vmem:[%s380 + $0x8] sm:$0xff]
      %v3023 = vld [vmem:[%s380 + $0x10] sm:$0xff]
      %v3024 = vld [vmem:[%s380 + $0x18] sm:$0xff]
      %v3025 = vld [vmem:[%s380 + $0x20] sm:$0xff]
      %v3026 = vld [vmem:[%s380 + $0x28] sm:$0xff]
      %v3027 = vld [vmem:[%s380 + $0x30] sm:$0xff]
      %v3028 = vld [vmem:[%s380 + $0x38] sm:$0xff]
      %v3029 = vld [vmem:[%s380 + $0x40] sm:$0xff]
      %v3030 = vld [vmem:[%s380 + $0x48] sm:$0xff]
      %v3031 = vld [vmem:[%s380 + $0x50] sm:$0xff]
      %v3032 = vld [vmem:[%s380 + $0x58] sm:$0xff]
      %v3033 = vld [vmem:[%s380 + $0x60] sm:$0xff]
      %v3034 = vld [vmem:[%s380 + $0x68] sm:$0xff]
      %v3035 = vld [vmem:[%s380 + $0x70] sm:$0xff]
      %v3036 = vld [vmem:[%s380 + $0x78] sm:$0xff]
      %v3037 = vld [vmem:[%s380 + $0x80] sm:$0xff]
      %v3038 = vld [vmem:[%s380 + $0x88] sm:$0xff]
      %v3039 = vld [vmem:[%s380 + $0x90] sm:$0xff]
      %v3040 = vld [vmem:[%s380 + $0x98] sm:$0xff]
      %v3041 = vld [vmem:[%s380 + $0xa0] sm:$0xff]
      %v3042 = vld [vmem:[%s380 + $0xa8] sm:$0xff]
      %v3043 = vld [vmem:[%s380 + $0xb0] sm:$0xff]
      %v3044 = vld [vmem:[%s380 + $0xb8] sm:$0xff]
      %v3045 = vld [vmem:[%s380 + $0xc0] sm:$0xff]
      %v3046 = vld [vmem:[%s380 + $0xc8] sm:$0xff]
      %v3047 = vld [vmem:[%s380 + $0xd0] sm:$0xff]
      %v3048 = vld [vmem:[%s380 + $0xd8] sm:$0xff]
      %v3049 = vld [vmem:[%s380 + $0xe0] sm:$0xff]
      %v3050 = vld [vmem:[%s380 + $0xe8] sm:$0xff]
      %v3051 = vld [vmem:[%s380 + $0xf0] sm:$0xff]
      %v3052 = vld [vmem:[%s380 + $0xf8] sm:$0xff]
      %v3053 = vld [vmem:[%s7] sm:$0xff]
      %v3054 = vld [vmem:[%s7 + $0x8] sm:$0xff]
      %v3055 = vld [vmem:[%s7 + $0x10] sm:$0xff]
      %v3056 = vld [vmem:[%s7 + $0x18] sm:$0xff]
      %v3057 = vld [vmem:[%s7 + $0x20] sm:$0xff]
      %v3058 = vld [vmem:[%s7 + $0x28] sm:$0xff]
      %v3059 = vld [vmem:[%s7 + $0x30] sm:$0xff]
      %v3060 = vld [vmem:[%s7 + $0x38] sm:$0xff]
      %v3061 = vpack.c.bf16 %v3022, %v3021
      %v3062 = vpack.c.bf16 %v3024, %v3023
      %v3063 = vpack.c.bf16 %v3026, %v3025
      %v3064 = vpack.c.bf16 %v3028, %v3027
      %v3065 = vpack.c.bf16 %v3030, %v3029
      %v3066 = vpack.c.bf16 %v3032, %v3031
      %v3067 = vpack.c.bf16 %v3034, %v3033
      %v3068 = vpack.c.bf16 %v3036, %v3035
      %v3069 = vpack.c.bf16 %v3038, %v3037
      %v3070 = vpack.c.bf16 %v3040, %v3039
      %v3071 = vpack.c.bf16 %v3042, %v3041
      %v3072 = vpack.c.bf16 %v3044, %v3043
      %v3073 = vpack.c.bf16 %v3046, %v3045
      %v3074 = vpack.c.bf16 %v3048, %v3047
      %v3075 = vpack.c.bf16 %v3050, %v3049
      %v3076 = vpack.c.bf16 %v3052, %v3051
      %v3085 = vunpack.c.l.b16 %v3053
      %v3086 = vunpack.c.h.b16 %v3053
      %v3087 = vunpack.c.l.b16 %v3054
      %v3088 = vunpack.c.h.b16 %v3054
      %v3089 = vunpack.c.l.b16 %v3055
      %v3090 = vunpack.c.h.b16 %v3055
      %v3091 = vunpack.c.l.b16 %v3056
      %v3092 = vunpack.c.h.b16 %v3056
      %v3093 = vunpack.c.l.b16 %v3057
      %v3094 = vunpack.c.h.b16 %v3057
      %v3095 = vunpack.c.l.b16 %v3058
      %v3096 = vunpack.c.h.b16 %v3058
      %v3097 = vunpack.c.l.b16 %v3059
      %v3098 = vunpack.c.h.b16 %v3059
      %v3099 = vunpack.c.l.b16 %v3060
      %v3100 = vunpack.c.h.b16 %v3060
      %v3101 = vpack.c.b16 %v3087, %v3085
      %v3102 = vpack.c.b16 %v3088, %v3086
      %v3103 = vpack.c.b16 %v3091, %v3089
      %v3104 = vpack.c.b16 %v3092, %v3090
      %v3105 = vpack.c.b16 %v3095, %v3093
      %v3106 = vpack.c.b16 %v3096, %v3094
      %v3107 = vpack.c.b16 %v3099, %v3097
      %v3108 = vpack.c.b16 %v3100, %v3098
      %3117 = vmatprep.subr.bf16.mxu0 0
      %3118 = vmatpush1.bf16.msra.mxu0 %v3061
      %3119 = vmatprep.subr.bf16.mxu0 0
      %3120 = vmatpush1.bf16.msra.mxu0 %v3062
      %3121 = vmatprep.subr.bf16.mxu0 0
      %3122 = vmatpush1.bf16.msra.mxu0 %v3063
      %3123 = vmatprep.subr.bf16.mxu0 0
      %3124 = vmatpush1.bf16.msra.mxu0 %v3064
      %3125 = vmatprep.subr.bf16.mxu0 0
      %3126 = vmatpush1.bf16.msra.mxu0 %v3065
      %3127 = vmatprep.subr.bf16.mxu0 0
      %3128 = vmatpush1.bf16.msra.mxu0 %v3066
      %3129 = vmatprep.subr.bf16.mxu0 0
      %3130 = vmatpush1.bf16.msra.mxu0 %v3067
      %3131 = vmatprep.subr.bf16.mxu0 0
      %3132 = vmatpush1.bf16.msra.mxu0 %v3068
      %3133 = vmatprep.subr.bf16.mxu0 0
      %3134 = vmatpush1.bf16.msra.mxu0 %v3069
      %3135 = vmatprep.subr.bf16.mxu0 0
      %3136 = vmatpush1.bf16.msra.mxu0 %v3070
      %3137 = vmatprep.subr.bf16.mxu0 0
      %3138 = vmatpush1.bf16.msra.mxu0 %v3071
      %3139 = vmatprep.subr.bf16.mxu0 0
      %3140 = vmatpush1.bf16.msra.mxu0 %v3072
      %3141 = vmatprep.subr.bf16.mxu0 0
      %3142 = vmatpush1.bf16.msra.mxu0 %v3073
      %3143 = vmatprep.subr.bf16.mxu0 0
      %3144 = vmatpush1.bf16.msra.mxu0 %v3074
      %3145 = vmatprep.subr.bf16.mxu0 0
      %3146 = vmatpush1.bf16.msra.mxu0 %v3075
      %3147 = vmatprep.subr.bf16.mxu0 0
      %3148 = vmatpush1.bf16.msra.mxu0 %v3076
      %3149 = vmatprep.mubr.bf16.mxu0 %v3102
      %3150 = vmatmul.mubr.bf16.gmra.mrb[0].mxu0 %v3101
      %v3151 = vpop.f32.mrb[0].mxu0
      %v3152 = vadd.f32 0.0, %v3151
      %v3153 = vpop.f32.mrb[0].mxu0
      %v3154 = vpop.f32.mrb[0].mxu0
      %v3155 = vadd.f32 0.0, %v3154
      %v3156 = vpop.f32.mrb[0].mxu0
      %3157 = vmatprep.mubr.bf16.mxu0 %v3104
      %3158 = vmatmul.mubr.bf16.gmra.mrb[0].mxu0 %v3103
      %v3159 = vpop.f32.mrb[0].mxu0
      %v3160 = vadd.f32 0.0, %v3159
      %v3161 = vpop.f32.mrb[0].mxu0
      %v3162 = vpop.f32.mrb[0].mxu0
      %v3163 = vadd.f32 0.0, %v3162
      %v3164 = vpop.f32.mrb[0].mxu0
      %3165 = vmatprep.mubr.bf16.mxu0 %v3106
      %3166 = vmatmul.mubr.bf16.gmra.mrb[0].mxu0 %v3105
      %v3167 = vpop.f32.mrb[0].mxu0
      %v3168 = vadd.f32 0.0, %v3167
      %v3169 = vpop.f32.mrb[0].mxu0
      %v3170 = vpop.f32.mrb[0].mxu0
      %v3171 = vadd.f32 0.0, %v3170
      %v3172 = vpop.f32.mrb[0].mxu0
      %3173 = vmatprep.mubr.bf16.mxu0 %v3108
      %3174 = vmatmul.mubr.bf16.gmra.mrb[0].mxu0 %v3107
      %v3175 = vpop.f32.mrb[0].mxu0
      %v3176 = vadd.f32 0.0, %v3175
      %v3177 = vpop.f32.mrb[0].mxu0
      %v3178 = vpop.f32.mrb[0].mxu0
      %v3179 = vadd.f32 0.0, %v3178
      %v3180 = vpop.f32.mrb[0].mxu0
      %3181 = vdwg.mxu0
      %v3182 = vpack.c.bf16 %v3155, %v3152
      %v3183 = vpack.c.bf16 %v3163, %v3160
      %v3184 = vpack.c.bf16 %v3171, %v3168
      %v3185 = vpack.c.bf16 %v3179, %v3176
      %v3186 = vld [vmem:[%s8] sm:$0x3]
      %v3188 = vsel %vm386, %v3182, 0
      %v3191 = vsel %vm386, %v3183, 0
      %v3194 = vsel %vm386, %v3184, 0
      %v3197 = vsel %vm386, %v3185, 0
      %v3200 = vsel %vm2314, %v3186, 0
      %3202 = vmatprep.subr.bf16.mxu0 0
      %3203 = vmatpush1.bf16.msra.mxu0 %v3200
      %3204 = vmatprep.subr.bf16.mxu0 0
      %3205 = vmatpush1.bf16.msra.mxu0 0
      %3206 = vmatprep.subr.bf16.mxu0 0
      %3207 = vmatpush1.bf16.msra.mxu0 0
      %3208 = vmatprep.subr.bf16.mxu0 0
      %3209 = vmatpush1.bf16.msra.mxu0 0
      %3210 = vmatprep.subr.bf16.mxu0 0
      %3211 = vmatpush1.bf16.msra.mxu0 0
      %3212 = vmatprep.subr.bf16.mxu0 0
      %3213 = vmatpush1.bf16.msra.mxu0 0
      %3214 = vmatprep.subr.bf16.mxu0 0
      %3215 = vmatpush1.bf16.msra.mxu0 0
      %3216 = vmatprep.subr.bf16.mxu0 0
      %3217 = vmatpush1.bf16.msra.mxu0 0
      %3218 = vmatprep.subr.bf16.mxu0 0
      %3219 = vmatpush1.bf16.msra.mxu0 0
      %3220 = vmatprep.subr.bf16.mxu0 0
      %3221 = vmatpush1.bf16.msra.mxu0 0
      %3222 = vmatprep.subr.bf16.mxu0 0
      %3223 = vmatpush1.bf16.msra.mxu0 0
      %3224 = vmatprep.subr.bf16.mxu0 0
      %3225 = vmatpush1.bf16.msra.mxu0 0
      %3226 = vmatprep.subr.bf16.mxu0 0
      %3227 = vmatpush1.bf16.msra.mxu0 0
      %3228 = vmatprep.subr.bf16.mxu0 0
      %3229 = vmatpush1.bf16.msra.mxu0 0
      %3230 = vmatprep.subr.bf16.mxu0 0
      %3231 = vmatpush1.bf16.msra.mxu0 0
      %3232 = vmatprep.subr.bf16.mxu0 0
      %3233 = vmatpush1.bf16.msra.mxu0 0
      %3234 = vmatprep.mubr.bf16.mxu0 0
      %3235 = vmatmul.mubr.bf16.gmra.mrb[0].mxu0 %v3188
      %v3236 = vpop.f32.mrb[0].mxu0
      %v3237 = vadd.f32 0.0, %v3236
      %v3238 = vpop.f32.mrb[0].mxu0
      %v3239 = vpop.f32.mrb[0].mxu0
      %v3240 = vadd.f32 0.0, %v3239
      %v3241 = vpop.f32.mrb[0].mxu0
      %3242 = vmatprep.mubr.bf16.mxu0 0
      %3243 = vmatmul.mubr.bf16.gmra.mrb[0].mxu0 %v3191
      %v3244 = vpop.f32.mrb[0].mxu0
      %v3245 = vadd.f32 0.0, %v3244
      %v3246 = vpop.f32.mrb[0].mxu0
      %v3247 = vpop.f32.mrb[0].mxu0
      %v3248 = vadd.f32 0.0, %v3247
      %v3249 = vpop.f32.mrb[0].mxu0
      %3250 = vmatprep.mubr.bf16.mxu0 0
      %3251 = vmatmul.mubr.bf16.gmra.mrb[0].mxu0 %v3194
      %v3252 = vpop.f32.mrb[0].mxu0
      %v3253 = vadd.f32 0.0, %v3252
      %v3254 = vpop.f32.mrb[0].mxu0
      %v3255 = vpop.f32.mrb[0].mxu0
      %v3256 = vadd.f32 0.0, %v3255
      %v3257 = vpop.f32.mrb[0].mxu0
      %3258 = vmatprep.mubr.bf16.mxu0 0
      %3259 = vmatmul.mubr.bf16.gmra.mrb[0].mxu0 %v3197
      %v3260 = vpop.f32.mrb[0].mxu0
      %v3261 = vadd.f32 0.0, %v3260
      %v3262 = vpop.f32.mrb[0].mxu0
      %v3263 = vpop.f32.mrb[0].mxu0
      %v3264 = vadd.f32 0.0, %v3263
      %v3265 = vpop.f32.mrb[0].mxu0
      %3266 = vdwg.mxu0
      %v3267 = vld [vmem:[%s9] sm:$0x1]
      %v3269 = vlaneseq
      %v3270 = vshrl.u32 %v3269, 7
      %v3271 = vsub.s32 0, %v3270
      %v3272 = vrot.slane %v3267, %v3271
      %v3274 = vmul.f32 %v3237, %v3272
      %v3275 = vmul.f32 %v3240, %v3272
      %v3276 = vmul.f32 %v3245, %v3272
      %v3277 = vmul.f32 %v3248, %v3272
      %v3278 = vmul.f32 %v3253, %v3272
      %v3279 = vmul.f32 %v3256, %v3272
      %v3280 = vmul.f32 %v3261, %v3272
      %v3281 = vmul.f32 %v3264, %v3272
      %v3282 = vld [vmem:[%s10] sm:$0x1]
      %v3284 = vlaneseq
      %v3285 = vshrl.u32 %v3284, 7
      %v3286 = vsub.s32 0, %v3285
      %v3287 = vrot.slane %v3282, %v3286
      %v3289 = vadd.f32 %v3274, %v3287
      %v3290 = vadd.f32 %v3275, %v3287
      %v3291 = vadd.f32 %v3276, %v3287
      %v3292 = vadd.f32 %v3277, %v3287
      %v3293 = vadd.f32 %v3278, %v3287
      %v3294 = vadd.f32 %v3279, %v3287
      %v3295 = vadd.f32 %v3280, %v3287
      %v3296 = vadd.f32 %v3281, %v3287
      %v3297 = vadd.f32 %v3013, %v3289
      %v3298 = vadd.f32 %v3014, %v3290
      %v3299 = vadd.f32 %v3015, %v3291
      %v3300 = vadd.f32 %v3016, %v3292
      %v3301 = vadd.f32 %v3017, %v3293
      %v3302 = vadd.f32 %v3018, %v3294
      %v3303 = vadd.f32 %v3019, %v3295
      %v3304 = vadd.f32 %v3020, %v3296
      %v3305 = vmax.f32 %v3297, 0.0
      %v3306 = vmax.f32 %v3298, 0.0
      %v3307 = vmax.f32 %v3299, 0.0
      %v3308 = vmax.f32 %v3300, 0.0
      %v3309 = vmax.f32 %v3301, 0.0
      %v3310 = vmax.f32 %v3302, 0.0
      %v3311 = vmax.f32 %v3303, 0.0
      %v3312 = vmax.f32 %v3304, 0.0
      %3313 = vxpose.xlu0.b32.start [1/16] %v3305, 128
      %3314 = vxpose.xlu0.b32.cont [2/16] %v3306, 128
      %3315 = vxpose.xlu0.b32.cont [3/16] %v3307, 128
      %3316 = vxpose.xlu0.b32.cont [4/16] %v3308, 128
      %3317 = vxpose.xlu0.b32.cont [5/16] %v3309, 128
      %3318 = vxpose.xlu0.b32.cont [6/16] %v3310, 128
      %3319 = vxpose.xlu0.b32.cont [7/16] %v3311, 128
      %3320 = vxpose.xlu0.b32.cont [8/16] %v3312, 128
      %3321 = vxpose.xlu0.b32.cont [9/16] 0.0, 128
      %3322 = vxpose.xlu0.b32.cont [10/16] 0.0, 128
      %3323 = vxpose.xlu0.b32.cont [11/16] 0.0, 128
      %3324 = vxpose.xlu0.b32.cont [12/16] 0.0, 128
      %3325 = vxpose.xlu0.b32.cont [13/16] 0.0, 128
      %3326 = vxpose.xlu0.b32.cont [14/16] 0.0, 128
      %3327 = vxpose.xlu0.b32.cont [15/16] 0.0, 128
      %3328 = vxpose.xlu0.b32.end [16/16] 0.0, 128
      %v3329 = vpop.trf.xlu0
      %v3330 = vpop.trf.xlu0
      %v3331 = vpop.trf.xlu0
      %v3332 = vpop.trf.xlu0
      %v3333 = vpop.trf.xlu0
      %v3334 = vpop.trf.xlu0
      %v3335 = vpop.trf.xlu0
      %v3336 = vpop.trf.xlu0
      %v3337 = vpop.trf.xlu0
      %v3338 = vpop.trf.xlu0
      %v3339 = vpop.trf.xlu0
      %v3340 = vpop.trf.xlu0
      %v3341 = vpop.trf.xlu0
      %v3342 = vpop.trf.xlu0
      %v3343 = vpop.trf.xlu0
      %v3344 = vpop.trf.xlu0
      %vm3345 = vcmask 523264
      %3346 = vst.msk [vmem:[%s384] sm:$0xff] %vm3345, %v3329
      %p3347 = scmp.lt.s32.totalorder %s22, 1
      %s3348 = scalar_select %p3347, %s22, 1
      %s3349 = smul.addr %s3348, 8
      %s3350 = scalar_lea.vmem %s11, %s3349
      // Predicated region
      $region65: #{basic_block_forward.1} parent=63 // pred_check
        %p3351 = pneg %p276
      $region66: #{basic_block_forward.1} parent=63 // pred_check_branch
        %3353 = sbr.rel (%p3351) target = $region68
      $region67: #{basic_block_forward.1} parent=63 // pred_region
        _
      $region68: #{basic_block_forward.1} parent=63 // pred_fallthru
        _
    $region64: #{basic_block_forward.1} parent=5 // pred_fallthru
      _
    %p3354 = scmp.le.s32.totalorder 2, %s17
    // Predicated region
    $region69: #{basic_block_forward.1} parent=5 // pred_check
      %p3355 = pneg %p3354
    $region70: #{basic_block_forward.1} parent=5 // pred_check_branch
      %3357 = sbr.rel (%p3355) target = $region72
    $region71: #{basic_block_forward.1} parent=5 // pred_region
      %s3358 = ssub.s32 %s17, 2
      // Predicated region
      $region73: #{basic_block_forward.1} parent=71 // pred_check
        %p3359 = pneg %p282
      $region74: #{basic_block_forward.1} parent=71 // pred_check_branch
        %3361 = sbr.rel (%p3359) target = $region76
      $region75: #{basic_block_forward.1} parent=71 // pred_region
        %p3362 = scmp.lt.s32.totalorder %s23, 1
        %s3363 = scalar_select %p3362, %s23, 1
        %s3364 = smul.addr %s3363, 8
        %s3365 = scalar_lea.vmem %s11, %s3364
      $region76: #{basic_block_forward.1} parent=71 // pred_fallthru
        _
    $region72: #{basic_block_forward.1} parent=5 // pred_fallthru
      _
  $region6: #{basic_block_forward.1} parent=0 // loop_footer
    %s21 = sadd.s32 1, %s17
  $region7: #{basic_block_forward.1} parent=0 // loop_footer_branch
    %16 = sbr.rel target = $region3
  $region8: #{basic_block_forward.1} parent=0 // loop_exit
    _

</llo_original>
